<compile_context>
chip_gen: v7x
topology: tpu7x:2x2x1
jax: 0.10.0
libtpu: 0.0.40
codegen_flags: <defaults>
</compile_context>

<pallas_src>
import numpy as np
import jax
import jax.numpy as jnp
from jax.experimental import pallas as pl
from jax.experimental.pallas import tpu as pltpu

LANE = 128
SUBLANE = 8


def _round_up(a, b):
    return (a + b - 1) // b * b


def make_lowpass_filters(cutoffs, width=None):
    """Deterministically build the filter bank (matches torch __init__)."""
    if width is None:
        width = int(2 / min(cutoffs))
    K = 2 * width + 1
    n = np.arange(K, dtype=np.float64)
    # torch.hamming_window(K, periodic=False)
    window = 0.54 - 0.46 * np.cos(2.0 * np.pi * n / (K - 1))
    t = np.arange(-width, width + 1, dtype=np.float64)
    filts = np.stack([2.0 * c * np.sinc(2.0 * c * t) * window for c in cutoffs])
    return filts.astype(np.float32), width  # (F, K) numpy


def _band_weight(filters_np, chunk, halo):
    """W[f, r, c] = filt[f, r - c] if 0 <= r - c < K else 0; shape (F, chunk+halo, chunk).

    This is the Toeplitz FIR operator restricted to one chunk-wide output block.
    By shift invariance it is identical for every block, so this one small
    weight serves every output chunk of every time tile."""
    Fn, K = filters_np.shape
    band = chunk + halo
    r = np.arange(band)[:, None]
    c = np.arange(chunk)[None, :]
    d = r - c
    mask = (d >= 0) & (d < K)
    idx = np.clip(d, 0, K - 1)
    return np.where(mask[None], filters_np[:, idx], 0.0).astype(np.float32)


def low_pass_filters(x, filters_np, width, *, max_tile_n=256, max_tile_t=1024):
    """Forward: x of shape (*, T) -> (F, *, T). Matches torch F.conv1d(padding=width)."""
    *others, T = x.shape
    N = int(np.prod(others)) if others else 1
    Fn, K = filters_np.shape
    assert K == 2 * width + 1

    # ---- chunk / halo geometry (Toeplitz band blocks) -----------------------
    halo = _round_up(max(2 * width, 1), LANE)   # lane-aligned right halo, >= K - 1
    chunk = max(2 * LANE, halo)                 # per-dot output width (>= 256 for v6e/v7x MXU)
    band = chunk + halo                         # per-dot contraction depth

    # ---- tile geometry ------------------------------------------------------
    tt = min(_round_up(T, chunk), max(_round_up(max_tile_t, chunk), chunk))
    tile_n = min(_round_up(N, SUBLANE), _round_up(max_tile_n, SUBLANE))

    # Per-core VMEM ceiling: ~3/4 of physical (96 MiB v5e/v6e, 48 MiB v7x 64 MiB/TC).
    try:
        vmem_cap = int(pltpu.get_tpu_info().vmem_capacity_bytes)
    except Exception:
        vmem_cap = 64 << 20
    vmem_ceiling = (vmem_cap * 3) // 4

    bpe = 4

    def footprint(tn, t):
        per_buf = tn * t + tn * halo + Fn * tn * t        # xc + halo + out block
        resident = Fn * band * chunk                       # band weight bank
        # double-buffered pipeline blocks + weight buffers + dot temps / compiler scratch
        return 2 * per_buf * bpe + 2 * resident * bpe + (8 << 20)

    while footprint(tile_n, tt) > vmem_ceiling and tt > chunk:
        tt = max(chunk, _round_up(tt // 2, chunk))
    while footprint(tile_n, tt) > vmem_ceiling and tile_n > SUBLANE:
        tile_n = max(SUBLANE, _round_up(tile_n // 2, SUBLANE))

    n_tiles = pl.cdiv(N, tile_n)
    t_tiles = pl.cdiv(T, tt)
    # v7x has 2 TensorCores: with a single grid step one core idles, so split
    # the (parallel) time axis when possible.  Harmless on v5e/v6e.
    if n_tiles * t_tiles == 1 and tt >= 2 * chunk:
        tt = max(chunk, (tt // (2 * chunk)) * chunk)
        t_tiles = pl.cdiv(T, tt)

    T_pad = t_tiles * tt
    N_pad = n_tiles * tile_n
    n_chunks = tt // chunk
    halo_stride = tt // halo          # halo divides chunk divides tt

    # ---- host-side prep: left-shifted zero-padded input + band weights -----
    # xp[:, j] = x[:, j - width] for width <= j < width + T, else 0.  `halo`
    # extra zero columns past T_pad back the right-halo view of the last tile.
    L = T_pad + halo
    x2 = x.reshape(N, T).astype(jnp.float32)
    xp = jnp.zeros((N_pad, L), jnp.float32).at[:N, width:width + T].set(x2)

    w_band = jnp.asarray(_band_weight(filters_np, chunk, halo))   # (F, band, chunk)

    vmem_limit = int(min(max(footprint(tile_n, tt), 32 << 20), vmem_ceiling))

    def run(mxu_precision):
        def kernel(xc_ref, xh_ref, w_ref, o_ref):
            # xc: (tile_n, tt) current time tile; xh: (tile_n, halo) right halo;
            # w : (F, band, chunk) shared band weights; o: (F, tile_n, tt).
            def dot(a, b):
                return jnp.dot(a, b, preferred_element_type=jnp.float32,
                               precision=mxu_precision)

            for f in range(Fn):                      # static unroll: F is small
                for cb in range(n_chunks):           # static unroll: few chunks per tile
                    c0 = cb * chunk
                    if cb + 1 < n_chunks:
                        # interior chunk: one fused dot over the full band window
                        acc = dot(xc_ref[:, c0:c0 + band], w_ref[f])
                    else:
                        # last chunk: band window crosses into the halo view
                        acc = dot(xc_ref[:, c0:c0 + chunk], w_ref[f, :chunk, :])
                        acc = acc + dot(xh_ref[...], w_ref[f, chunk:, :])
                    o_ref[f, :, c0:c0 + chunk] = acc.astype(o_ref.dtype)

        return pl.pallas_call(
            kernel,
            out_shape=jax.ShapeDtypeStruct((Fn, N_pad, T_pad), jnp.float32),
            grid_spec=pltpu.PrefetchScalarGridSpec(
                num_scalar_prefetch=0,
                grid=(n_tiles, t_tiles),
                in_specs=[
                    # current time tile
                    pl.BlockSpec((tile_n, tt), lambda n, t: (n, t)),
                    # lane-aligned right-halo view of the same padded input
                    pl.BlockSpec((tile_n, halo),
                                 lambda n, t: (n, (t + 1) * halo_stride)),
                    # shared Toeplitz band weight: constant index -> fetched once,
                    # resident in VMEM for the whole grid (only ~F*band*chunk*4 B)
                    pl.BlockSpec((Fn, band, chunk), lambda n, t: (0, 0, 0)),
                ],
                out_specs=pl.BlockSpec((Fn, tile_n, tt), lambda n, t: (0, n, t)),
            ),
            compiler_params=pltpu.CompilerParams(
                dimension_semantics=("parallel", "parallel"),
                vmem_limit_bytes=vmem_limit,
            ),
        )(xp, xp, w_band)

    # Precision.HIGH (bf16_3x) halves the MXU passes vs HIGHEST and is well
    # within the 1e-4/1e-5 tolerance for a short FIR; fall back to HIGHEST if
    # this Mosaic lowering only supports DEFAULT/HIGHEST f32 dot precision.
    try:
        out = run(jax.lax.Precision.HIGH)
    except Exception:
        out = run(jax.lax.Precision.HIGHEST)

    if N_pad != N or T_pad != T:
        out = out[:, :N, :T]
    return out.reshape((Fn, *others, T))


def ref_forward_np(x_np, filters_np, width):
    """Independent float64 numpy reference (torch conv1d, padding=width, no flip)."""
    *others, T = x_np.shape
    Fn, K = filters_np.shape
    x2 = x_np.reshape(-1, T).astype(np.float64)
    xpad = np.pad(x2, ((0, 0), (width, width)))
    out = np.zeros((Fn, x2.shape[0], T), np.float64)
    for k in range(K):
        out += filters_np[:, k].astype(np.float64)[:, None, None] * xpad[None, :, k:k + T]
    return out.reshape((Fn, *others, T))


if __name__ == "__main__":
    cutoffs = [0.5, 0.25]
    filters_np, width = make_lowpass_filters(cutoffs)  # width = int(2/0.25) = 8, K = 17

    key = jax.random.PRNGKey(0)
    x = jax.random.normal(key, (2, 4, 64), dtype=jnp.float32)  # (*, T) = (2, 4, 64)

    out = low_pass_filters(x, filters_np, width)
    out = jax.block_until_ready(out)

    ref = ref_forward_np(np.asarray(x), filters_np, width)
    assert out.shape == (len(cutoffs), 2, 4, 64), out.shape
    np.testing.assert_allclose(np.asarray(out), ref, rtol=1e-4, atol=1e-5)

    print("KERNEL_OK")
</pallas_src>

<mosaic_0001>
module attributes {stable_mosaic.version = 11 : i64} {
  func.func @kernel(%arg0: i32, %arg1: i32, %arg2: memref<8x256xf32, #tpu.memory_space<vmem>>, %arg3: memref<8x128xf32, #tpu.memory_space<vmem>>, %arg4: memref<2x384x256xf32, #tpu.memory_space<vmem>>, %arg5: memref<2x8x256xf32, #tpu.memory_space<vmem>>) attributes {dimension_semantics = [#tpu.dimension_semantics<parallel>, #tpu.dimension_semantics<parallel>], iteration_bounds = array<i64: 1, 1>, scalar_prefetch = 0 : i64, scratch_operands = 0 : i64, tpu.core_type = #tpu.core_type<tc>, window_params = [{transform_indices = @transform_0, window_bounds = array<i64: 8, 256>}, {transform_indices = @transform_1, window_bounds = array<i64: 8, 128>}, {pipeline_mode = #tpu.pipeline_mode<synchronous>, transform_indices = @transform_2, window_bounds = array<i64: 2, 384, 256>}, {transform_indices = @transform_3, window_bounds = array<i64: 2, 8, 256>}]} {
    %c0 = arith.constant 0 : index
    %c0_0 = arith.constant 0 : index
    %0 = vector.load %arg2[%c0, %c0_0] : memref<8x256xf32, #tpu.memory_space<vmem>>, vector<8x256xf32>
    %c0_1 = arith.constant 0 : index
    %c0_2 = arith.constant 0 : index
    %c0_3 = arith.constant 0 : index
    %1 = vector.load %arg4[%c0_1, %c0_2, %c0_3] : memref<2x384x256xf32, #tpu.memory_space<vmem>>, vector<1x256x256xf32>
    %2 = vector.shape_cast %1 : vector<1x256x256xf32> to vector<256x256xf32>
    %cst = arith.constant dense<0.000000e+00> : vector<8x256xf32>
    %3 = tpu.matmul %0, %2, %cst {dimension_numbers = #tpu.dot_dimension_numbers<[1], [0], [0], [1], [0, 0, 1, 1], [], []>, precision = #tpu.contract_precision<fp32>} : vector<8x256xf32>, vector<256x256xf32>, vector<8x256xf32> -> vector<8x256xf32>
    %c0_4 = arith.constant 0 : index
    %c0_5 = arith.constant 0 : index
    %4 = vector.load %arg3[%c0_4, %c0_5] : memref<8x128xf32, #tpu.memory_space<vmem>>, vector<8x128xf32>
    %c0_6 = arith.constant 0 : index
    %c256 = arith.constant 256 : index
    %c0_7 = arith.constant 0 : index
    %5 = vector.load %arg4[%c0_6, %c256, %c0_7] : memref<2x384x256xf32, #tpu.memory_space<vmem>>, vector<1x128x256xf32>
    %6 = vector.shape_cast %5 : vector<1x128x256xf32> to vector<128x256xf32>
    %cst_8 = arith.constant dense<0.000000e+00> : vector<8x256xf32>
    %7 = tpu.matmul %4, %6, %cst_8 {dimension_numbers = #tpu.dot_dimension_numbers<[1], [0], [0], [1], [0, 0, 1, 1], [], []>, precision = #tpu.contract_precision<fp32>} : vector<8x128xf32>, vector<128x256xf32>, vector<8x256xf32> -> vector<8x256xf32>
    %8 = arith.addf %3, %7 : vector<8x256xf32>
    %c0_9 = arith.constant 0 : index
    %c0_10 = arith.constant 0 : index
    %c0_11 = arith.constant 0 : index
    %9 = vector.load %arg5[%c0_9, %c0_10, %c0_11] : memref<2x8x256xf32, #tpu.memory_space<vmem>>, vector<1x8x256xf32>
    %10 = vector.shape_cast %9 : vector<1x8x256xf32> to vector<8x256xf32>
    %11 = vector.shape_cast %8 : vector<8x256xf32> to vector<1x8x256xf32>
    tpu.vector_store %arg5[%c0_9, %c0_10, %c0_11], %11 {strides = array<i32>} : memref<2x8x256xf32, #tpu.memory_space<vmem>>, vector<1x8x256xf32>,
    %c0_12 = arith.constant 0 : index
    %c0_13 = arith.constant 0 : index
    %12 = vector.load %arg2[%c0_12, %c0_13] : memref<8x256xf32, #tpu.memory_space<vmem>>, vector<8x256xf32>
    %c1 = arith.constant 1 : index
    %c0_14 = arith.constant 0 : index
    %c0_15 = arith.constant 0 : index
    %13 = vector.load %arg4[%c1, %c0_14, %c0_15] : memref<2x384x256xf32, #tpu.memory_space<vmem>>, vector<1x256x256xf32>
    %14 = vector.shape_cast %13 : vector<1x256x256xf32> to vector<256x256xf32>
    %cst_16 = arith.constant dense<0.000000e+00> : vector<8x256xf32>
    %15 = tpu.matmul %12, %14, %cst_16 {dimension_numbers = #tpu.dot_dimension_numbers<[1], [0], [0], [1], [0, 0, 1, 1], [], []>, precision = #tpu.contract_precision<fp32>} : vector<8x256xf32>, vector<256x256xf32>, vector<8x256xf32> -> vector<8x256xf32>
    %c0_17 = arith.constant 0 : index
    %c0_18 = arith.constant 0 : index
    %16 = vector.load %arg3[%c0_17, %c0_18] : memref<8x128xf32, #tpu.memory_space<vmem>>, vector<8x128xf32>
    %c1_19 = arith.constant 1 : index
    %c256_20 = arith.constant 256 : index
    %c0_21 = arith.constant 0 : index
    %17 = vector.load %arg4[%c1_19, %c256_20, %c0_21] : memref<2x384x256xf32, #tpu.memory_space<vmem>>, vector<1x128x256xf32>
    %18 = vector.shape_cast %17 : vector<1x128x256xf32> to vector<128x256xf32>
    %cst_22 = arith.constant dense<0.000000e+00> : vector<8x256xf32>
    %19 = tpu.matmul %16, %18, %cst_22 {dimension_numbers = #tpu.dot_dimension_numbers<[1], [0], [0], [1], [0, 0, 1, 1], [], []>, precision = #tpu.contract_precision<fp32>} : vector<8x128xf32>, vector<128x256xf32>, vector<8x256xf32> -> vector<8x256xf32>
    %20 = arith.addf %15, %19 : vector<8x256xf32>
    %c1_23 = arith.constant 1 : index
    %c0_24 = arith.constant 0 : index
    %c0_25 = arith.constant 0 : index
    %21 = vector.load %arg5[%c1_23, %c0_24, %c0_25] : memref<2x8x256xf32, #tpu.memory_space<vmem>>, vector<1x8x256xf32>
    %22 = vector.shape_cast %21 : vector<1x8x256xf32> to vector<8x256xf32>
    %23 = vector.shape_cast %20 : vector<8x256xf32> to vector<1x8x256xf32>
    tpu.vector_store %arg5[%c1_23, %c0_24, %c0_25], %23 {strides = array<i32>} : memref<2x8x256xf32, #tpu.memory_space<vmem>>, vector<1x8x256xf32>,
    return
  }
  func.func @transform_0(%arg0: i32, %arg1: i32) -> (i32, i32) {
    %c0_i32 = arith.constant 0 : i32
    return %arg0, %arg1 : i32, i32
  }
  func.func @transform_1(%arg0: i32, %arg1: i32) -> (i32, i32) {
    %c1_i32 = arith.constant 1 : i32
    %0 = arith.addi %arg1, %c1_i32 : i32
    %c2_i32 = arith.constant 2 : i32
    %1 = arith.muli %0, %c2_i32 : i32
    %c0_i32 = arith.constant 0 : i32
    return %arg0, %1 : i32, i32
  }
  func.func @transform_2(%arg0: i32, %arg1: i32) -> (i32, i32, i32) {
    %c0_i32 = arith.constant 0 : i32
    %c0_i32_0 = arith.constant 0 : i32
    %c0_i32_1 = arith.constant 0 : i32
    %c0_i32_2 = arith.constant 0 : i32
    return %c0_i32, %c0_i32_0, %c0_i32_1 : i32, i32, i32
  }
  func.func @transform_3(%arg0: i32, %arg1: i32) -> (i32, i32, i32) {
    %c0_i32 = arith.constant 0 : i32
    %c0_i32_0 = arith.constant 0 : i32
    return %c0_i32, %arg0, %arg1 : i32, i32, i32
  }
}

</mosaic_0001>

<llo_original>
// kernel: tpu_custom_call.1
$region0: #{tpu_custom_call.1}
  #allocation0 [shape = 'u32[]', space=smem, size = 0x4, offset = 0x4, fixed_abs, tag = 'smem constant byte address 0x4 - core index']
  #allocation1 [shape = 'u32[144,128]{1,0:T(1,128)}', space=vmem, size = 0x12000, scoped, tag = 'internal scratch']
  %s0 = inlined_call_operand.hbm [shape: f32[8,384], index: 0, kind: input, shape index: {}]
  %s1 = inlined_call_operand.hbm [shape: f32[8,384], index: 1, kind: input, shape index: {}]
  %s2 = inlined_call_operand.hbm [shape: f32[2,384,256], index: 2, kind: input, shape index: {}]
  %s3 = inlined_call_operand.hbm [shape: f32[2,8,256], index: 3, kind: output, shape index: {}]
  %s4 = sld [smem:[#allocation0]]
  $region34: #{tpu_custom_call.1} parent=0
    _
  %s6 = ssub.s32 1, %s4
  %s7 = scalar_select 0, %s6, %s4
  $region1: #{tpu_custom_call.1} parent=0
    #allocation2 [shape = 'u8[8192]{0}', space=vmem, size = 0x2000, scoped, tag = 'input window, operand 0, single buffered']
    #allocation3 [shape = 's32[1]{0}', space=sflag, size = 0x4, scoped, tag = 'scoped memory for tpu_custom_call.1']
    #allocation4 [shape = 's32[1]{0}', space=sflag, size = 0x4, scoped, tag = 'scoped memory for tpu_custom_call.1']
    #allocation5 [shape = 'u8[4096]{0}', space=vmem, size = 0x1000, scoped, tag = 'input window, operand 1, single buffered']
    #allocation6 [shape = 's32[1]{0}', space=sflag, size = 0x4, scoped, tag = 'scoped memory for tpu_custom_call.1']
    #allocation7 [shape = 'u8[786432]{0}', space=vmem, size = 0xc0000, scoped, tag = 'input window, operand 2, single buffered']
    #allocation8 [shape = 'u8[16384]{0}', space=vmem, size = 0x4000, scoped, tag = 'output window, operand 0, single buffered']
    %8 = vsyncpa [#allocation3], 0
    %9 = vsyncpa [#allocation6], 0
    %10 = vsyncpa [#allocation4], 0
    // Predicated region
    $region2: #{tpu_custom_call.1} parent=1 // pred_check
      _
    $region3: #{tpu_custom_call.1} parent=1 // pred_check_branch
      %12 = sbr.rel (0) target = $region5
    $region4: #{tpu_custom_call.1} parent=1 // pred_region
      %s14 = ssub.s32 256, 256
      %15 = vsyncadd [#allocation3], %s14
      %s17 = sshll.u32 [#allocation2], 4
      %s18 = int_to_ptr.vmem [resolvable:$true] %s17
      %20 = dma.hbm_to_vmem [thread:$0]  %s0, 256, %s18, [#allocation3]
    $region5: #{tpu_custom_call.1} parent=1 // pred_fallthru
      _
    // Predicated region
    $region6: #{tpu_custom_call.1} parent=1 // pred_check
      _
    $region7: #{tpu_custom_call.1} parent=1 // pred_check_branch
      %22 = sbr.rel (0) target = $region9
    $region8: #{tpu_custom_call.1} parent=1 // pred_region
      %s23 = sadd.s32 0, 1
      %s24 = smul.u32 %s23, 2
      %s26 = ssub.s32 128, 128
      %27 = vsyncadd [#allocation6], %s26
      %s28 = smul.addr %s24, 128
      %s29 = scalar_lea.hbm %s1, %s28
      %s31 = sshll.u32 [#allocation5], 4
      %s32 = int_to_ptr.vmem [resolvable:$true] %s31
      %34 = dma.hbm_to_vmem [thread:$0]  %s29, 128, %s32, [#allocation6]
    $region9: #{tpu_custom_call.1} parent=1 // pred_fallthru
      _
    // Predicated region
    $region10: #{tpu_custom_call.1} parent=1 // pred_check
      _
    $region11: #{tpu_custom_call.1} parent=1 // pred_check_branch
      %36 = sbr.rel (0) target = $region13
    $region12: #{tpu_custom_call.1} parent=1 // pred_region
      %s38 = ssub.s32 24576, 24576
      %39 = vsyncadd [#allocation6], %s38
      %s40 = sshll.u32 [#allocation7], 4
      %s41 = int_to_ptr.vmem [resolvable:$true] %s40
      %46 = dma.hbm_to_vmem [thread:$0]  %s2, 24576, %s41, [#allocation6], 256, 256, 16
    $region13: #{tpu_custom_call.1} parent=1 // pred_fallthru
      _
    // Predicated region
    $region14: #{tpu_custom_call.1} parent=1 // pred_check
      _
    $region15: #{tpu_custom_call.1} parent=1 // pred_check_branch
      %48 = sbr.rel (0) target = $region17
    $region16: #{tpu_custom_call.1} parent=1 // pred_region
      %49 = dma.done [#allocation3], 256
    $region17: #{tpu_custom_call.1} parent=1 // pred_fallthru
      _
    // Predicated region
    $region18: #{tpu_custom_call.1} parent=1 // pred_check
      _
    $region19: #{tpu_custom_call.1} parent=1 // pred_check_branch
      %51 = sbr.rel (0) target = $region21
    $region20: #{tpu_custom_call.1} parent=1 // pred_region
      %52 = dma.done [#allocation6], 128
    $region21: #{tpu_custom_call.1} parent=1 // pred_fallthru
      _
    // Predicated region
    $region22: #{tpu_custom_call.1} parent=1 // pred_check
      _
    $region23: #{tpu_custom_call.1} parent=1 // pred_check_branch
      %54 = sbr.rel (0) target = $region25
    $region24: #{tpu_custom_call.1} parent=1 // pred_region
      %55 = dma.done [#allocation6], 24576
    $region25: #{tpu_custom_call.1} parent=1 // pred_fallthru
      _
    %s56 = sadd.s32 0, 1
    %s57 = smul.u32 %s56, 2
    %v58 = vld [vmem:[#allocation2] sm:$0xff]
    %v59 = vld [vmem:[#allocation2 + $0x8] sm:$0xff]
    %v60 = vld [vmem:[#allocation7] sm:$0xff]
    %v61 = vld [vmem:[#allocation7 + $0x8] sm:$0xff]
    %v62 = vld [vmem:[#allocation7 + $0x10] sm:$0xff]
    %v63 = vld [vmem:[#allocation7 + $0x18] sm:$0xff]
    %v64 = vld [vmem:[#allocation7 + $0x20] sm:$0xff]
    %v65 = vld [vmem:[#allocation7 + $0x28] sm:$0xff]
    %v66 = vld [vmem:[#allocation7 + $0x30] sm:$0xff]
    %v67 = vld [vmem:[#allocation7 + $0x38] sm:$0xff]
    %v68 = vld [vmem:[#allocation7 + $0x40] sm:$0xff]
    %v69 = vld [vmem:[#allocation7 + $0x48] sm:$0xff]
    %v70 = vld [vmem:[#allocation7 + $0x50] sm:$0xff]
    %v71 = vld [vmem:[#allocation7 + $0x58] sm:$0xff]
    %v72 = vld [vmem:[#allocation7 + $0x60] sm:$0xff]
    %v73 = vld [vmem:[#allocation7 + $0x68] sm:$0xff]
    %v74 = vld [vmem:[#allocation7 + $0x70] sm:$0xff]
    %v75 = vld [vmem:[#allocation7 + $0x78] sm:$0xff]
    %v76 = vld [vmem:[#allocation7 + $0x80] sm:$0xff]
    %v77 = vld [vmem:[#allocation7 + $0x88] sm:$0xff]
    %v78 = vld [vmem:[#allocation7 + $0x90] sm:$0xff]
    %v79 = vld [vmem:[#allocation7 + $0x98] sm:$0xff]
    %v80 = vld [vmem:[#allocation7 + $0xa0] sm:$0xff]
    %v81 = vld [vmem:[#allocation7 + $0xa8] sm:$0xff]
    %v82 = vld [vmem:[#allocation7 + $0xb0] sm:$0xff]
    %v83 = vld [vmem:[#allocation7 + $0xb8] sm:$0xff]
    %v84 = vld [vmem:[#allocation7 + $0xc0] sm:$0xff]
    %v85 = vld [vmem:[#allocation7 + $0xc8] sm:$0xff]
    %v86 = vld [vmem:[#allocation7 + $0xd0] sm:$0xff]
    %v87 = vld [vmem:[#allocation7 + $0xd8] sm:$0xff]
    %v88 = vld [vmem:[#allocation7 + $0xe0] sm:$0xff]
    %v89 = vld [vmem:[#allocation7 + $0xe8] sm:$0xff]
    %v90 = vld [vmem:[#allocation7 + $0xf0] sm:$0xff]
    %v91 = vld [vmem:[#allocation7 + $0xf8] sm:$0xff]
    %v92 = vld [vmem:[#allocation7 + $0x100] sm:$0xff]
    %v93 = vld [vmem:[#allocation7 + $0x108] sm:$0xff]
    %v94 = vld [vmem:[#allocation7 + $0x110] sm:$0xff]
    %v95 = vld [vmem:[#allocation7 + $0x118] sm:$0xff]
    %v96 = vld [vmem:[#allocation7 + $0x120] sm:$0xff]
    %v97 = vld [vmem:[#allocation7 + $0x128] sm:$0xff]
    %v98 = vld [vmem:[#allocation7 + $0x130] sm:$0xff]
    %v99 = vld [vmem:[#allocation7 + $0x138] sm:$0xff]
    %v100 = vld [vmem:[#allocation7 + $0x140] sm:$0xff]
    %v101 = vld [vmem:[#allocation7 + $0x148] sm:$0xff]
    %v102 = vld [vmem:[#allocation7 + $0x150] sm:$0xff]
    %v103 = vld [vmem:[#allocation7 + $0x158] sm:$0xff]
    %v104 = vld [vmem:[#allocation7 + $0x160] sm:$0xff]
    %v105 = vld [vmem:[#allocation7 + $0x168] sm:$0xff]
    %v106 = vld [vmem:[#allocation7 + $0x170] sm:$0xff]
    %v107 = vld [vmem:[#allocation7 + $0x178] sm:$0xff]
    %v108 = vld [vmem:[#allocation7 + $0x180] sm:$0xff]
    %v109 = vld [vmem:[#allocation7 + $0x188] sm:$0xff]
    %v110 = vld [vmem:[#allocation7 + $0x190] sm:$0xff]
    %v111 = vld [vmem:[#allocation7 + $0x198] sm:$0xff]
    %v112 = vld [vmem:[#allocation7 + $0x1a0] sm:$0xff]
    %v113 = vld [vmem:[#allocation7 + $0x1a8] sm:$0xff]
    %v114 = vld [vmem:[#allocation7 + $0x1b0] sm:$0xff]
    %v115 = vld [vmem:[#allocation7 + $0x1b8] sm:$0xff]
    %v116 = vld [vmem:[#allocation7 + $0x1c0] sm:$0xff]
    %v117 = vld [vmem:[#allocation7 + $0x1c8] sm:$0xff]
    %v118 = vld [vmem:[#allocation7 + $0x1d0] sm:$0xff]
    %v119 = vld [vmem:[#allocation7 + $0x1d8] sm:$0xff]
    %v120 = vld [vmem:[#allocation7 + $0x1e0] sm:$0xff]
    %v121 = vld [vmem:[#allocation7 + $0x1e8] sm:$0xff]
    %v122 = vld [vmem:[#allocation7 + $0x1f0] sm:$0xff]
    %v123 = vld [vmem:[#allocation7 + $0x1f8] sm:$0xff]
    %v124 = vld [vmem:[#allocation5] sm:$0xff]
    %v125 = vld [vmem:[#allocation7 + $0x200] sm:$0xff]
    %v126 = vld [vmem:[#allocation7 + $0x208] sm:$0xff]
    %v127 = vld [vmem:[#allocation7 + $0x210] sm:$0xff]
    %v128 = vld [vmem:[#allocation7 + $0x218] sm:$0xff]
    %v129 = vld [vmem:[#allocation7 + $0x220] sm:$0xff]
    %v130 = vld [vmem:[#allocation7 + $0x228] sm:$0xff]
    %v131 = vld [vmem:[#allocation7 + $0x230] sm:$0xff]
    %v132 = vld [vmem:[#allocation7 + $0x238] sm:$0xff]
    %v133 = vld [vmem:[#allocation7 + $0x240] sm:$0xff]
    %v134 = vld [vmem:[#allocation7 + $0x248] sm:$0xff]
    %v135 = vld [vmem:[#allocation7 + $0x250] sm:$0xff]
    %v136 = vld [vmem:[#allocation7 + $0x258] sm:$0xff]
    %v137 = vld [vmem:[#allocation7 + $0x260] sm:$0xff]
    %v138 = vld [vmem:[#allocation7 + $0x268] sm:$0xff]
    %v139 = vld [vmem:[#allocation7 + $0x270] sm:$0xff]
    %v140 = vld [vmem:[#allocation7 + $0x278] sm:$0xff]
    %v141 = vld [vmem:[#allocation7 + $0x280] sm:$0xff]
    %v142 = vld [vmem:[#allocation7 + $0x288] sm:$0xff]
    %v143 = vld [vmem:[#allocation7 + $0x290] sm:$0xff]
    %v144 = vld [vmem:[#allocation7 + $0x298] sm:$0xff]
    %v145 = vld [vmem:[#allocation7 + $0x2a0] sm:$0xff]
    %v146 = vld [vmem:[#allocation7 + $0x2a8] sm:$0xff]
    %v147 = vld [vmem:[#allocation7 + $0x2b0] sm:$0xff]
    %v148 = vld [vmem:[#allocation7 + $0x2b8] sm:$0xff]
    %v149 = vld [vmem:[#allocation7 + $0x2c0] sm:$0xff]
    %v150 = vld [vmem:[#allocation7 + $0x2c8] sm:$0xff]
    %v151 = vld [vmem:[#allocation7 + $0x2d0] sm:$0xff]
    %v152 = vld [vmem:[#allocation7 + $0x2d8] sm:$0xff]
    %v153 = vld [vmem:[#allocation7 + $0x2e0] sm:$0xff]
    %v154 = vld [vmem:[#allocation7 + $0x2e8] sm:$0xff]
    %v155 = vld [vmem:[#allocation7 + $0x2f0] sm:$0xff]
    %v156 = vld [vmem:[#allocation7 + $0x2f8] sm:$0xff]
    %v157 = vand.u32 %v126, 4294901760
    %158 = vmatprep.subr.mxu0 %v157
    %v159 = vand.u32 %v125, 4294901760
    %160 = vmatpush1.msra.mxu0 %v159
    %v161 = vand.u32 %v128, 4294901760
    %162 = vmatprep.subr.mxu0 %v161
    %v163 = vand.u32 %v127, 4294901760
    %164 = vmatpush1.msra.mxu0 %v163
    %v165 = vand.u32 %v130, 4294901760
    %166 = vmatprep.subr.mxu0 %v165
    %v167 = vand.u32 %v129, 4294901760
    %168 = vmatpush1.msra.mxu0 %v167
    %v169 = vand.u32 %v132, 4294901760
    %170 = vmatprep.subr.mxu0 %v169
    %v171 = vand.u32 %v131, 4294901760
    %172 = vmatpush1.msra.mxu0 %v171
    %v173 = vand.u32 %v134, 4294901760
    %174 = vmatprep.subr.mxu0 %v173
    %v175 = vand.u32 %v133, 4294901760
    %176 = vmatpush1.msra.mxu0 %v175
    %v177 = vand.u32 %v136, 4294901760
    %178 = vmatprep.subr.mxu0 %v177
    %v179 = vand.u32 %v135, 4294901760
    %180 = vmatpush1.msra.mxu0 %v179
    %v181 = vand.u32 %v138, 4294901760
    %182 = vmatprep.subr.mxu0 %v181
    %v183 = vand.u32 %v137, 4294901760
    %184 = vmatpush1.msra.mxu0 %v183
    %v185 = vand.u32 %v140, 4294901760
    %186 = vmatprep.subr.mxu0 %v185
    %v187 = vand.u32 %v139, 4294901760
    %188 = vmatpush1.msra.mxu0 %v187
    %v189 = vand.u32 %v142, 4294901760
    %190 = vmatprep.subr.mxu0 %v189
    %v191 = vand.u32 %v141, 4294901760
    %192 = vmatpush1.msra.mxu0 %v191
    %v193 = vand.u32 %v144, 4294901760
    %194 = vmatprep.subr.mxu0 %v193
    %v195 = vand.u32 %v143, 4294901760
    %196 = vmatpush1.msra.mxu0 %v195
    %v197 = vand.u32 %v146, 4294901760
    %198 = vmatprep.subr.mxu0 %v197
    %v199 = vand.u32 %v145, 4294901760
    %200 = vmatpush1.msra.mxu0 %v199
    %v201 = vand.u32 %v148, 4294901760
    %202 = vmatprep.subr.mxu0 %v201
    %v203 = vand.u32 %v147, 4294901760
    %204 = vmatpush1.msra.mxu0 %v203
    %v205 = vand.u32 %v150, 4294901760
    %206 = vmatprep.subr.mxu0 %v205
    %v207 = vand.u32 %v149, 4294901760
    %208 = vmatpush1.msra.mxu0 %v207
    %v209 = vand.u32 %v152, 4294901760
    %210 = vmatprep.subr.mxu0 %v209
    %v211 = vand.u32 %v151, 4294901760
    %212 = vmatpush1.msra.mxu0 %v211
    %v213 = vand.u32 %v154, 4294901760
    %214 = vmatprep.subr.mxu0 %v213
    %v215 = vand.u32 %v153, 4294901760
    %216 = vmatpush1.msra.mxu0 %v215
    %v217 = vand.u32 %v156, 4294901760
    %218 = vmatprep.subr.mxu0 %v217
    %v219 = vand.u32 %v155, 4294901760
    %220 = vmatpush1.msra.mxu0 %v219
    %221 = vmatprep.subr.mxu0 0.0
    %222 = vmatpush1.msra.mxu0 0.0
    %223 = vmatprep.subr.mxu0 0.0
    %224 = vmatpush1.msra.mxu0 0.0
    %225 = vmatprep.subr.mxu0 0.0
    %226 = vmatpush1.msra.mxu0 0.0
    %227 = vmatprep.subr.mxu0 0.0
    %228 = vmatpush1.msra.mxu0 0.0
    %229 = vmatprep.subr.mxu0 0.0
    %230 = vmatpush1.msra.mxu0 0.0
    %231 = vmatprep.subr.mxu0 0.0
    %232 = vmatpush1.msra.mxu0 0.0
    %233 = vmatprep.subr.mxu0 0.0
    %234 = vmatpush1.msra.mxu0 0.0
    %235 = vmatprep.subr.mxu0 0.0
    %236 = vmatpush1.msra.mxu0 0.0
    %237 = vmatprep.subr.mxu0 0.0
    %238 = vmatpush1.msra.mxu0 0.0
    %239 = vmatprep.subr.mxu0 0.0
    %240 = vmatpush1.msra.mxu0 0.0
    %241 = vmatprep.subr.mxu0 0.0
    %242 = vmatpush1.msra.mxu0 0.0
    %243 = vmatprep.subr.mxu0 0.0
    %244 = vmatpush1.msra.mxu0 0.0
    %245 = vmatprep.subr.mxu0 0.0
    %246 = vmatpush1.msra.mxu0 0.0
    %247 = vmatprep.subr.mxu0 0.0
    %248 = vmatpush1.msra.mxu0 0.0
    %249 = vmatprep.subr.mxu0 0.0
    %250 = vmatpush1.msra.mxu0 0.0
    %251 = vmatprep.subr.mxu0 0.0
    %252 = vmatpush1.msra.mxu0 0.0
    %253 = vmatprep.mubr.f32.mxu0 0.0
    %v254 = vand.u32 %v124, 4294901760
    %v255 = vsub.f32 %v124, %v254
    %v256 = vand.u32 %v255, 4294901760
    %v257 = vsub.f32 %v255, %v256
    %v258 = vand.u32 %v257, 4294901760
    %259 = vmatmul.mubr.f32.gmra.mrb[0].mxu0 %v258
    %v260 = vpop.f32.mrb[0].mxu0
    %v261 = vadd.f32 0.0, %v260
    %v262 = vpop.f32.mrb[0].mxu0
    %v263 = vadd.f32 0.0, %v262
    %264 = vdwg.mxu0
    %v265 = vand.u32 %v126, 4294901760
    %v266 = vsub.f32 %v126, %v265
    %v267 = vand.u32 %v266, 4294901760
    %v268 = vsub.f32 %v266, %v267
    %v269 = vand.u32 %v268, 4294901760
    %270 = vmatprep.subr.mxu0 %v269
    %v271 = vand.u32 %v125, 4294901760
    %v272 = vsub.f32 %v125, %v271
    %v273 = vand.u32 %v272, 4294901760
    %v274 = vsub.f32 %v272, %v273
    %v275 = vand.u32 %v274, 4294901760
    %276 = vmatpush1.msra.mxu0 %v275
    %v277 = vand.u32 %v128, 4294901760
    %v278 = vsub.f32 %v128, %v277
    %v279 = vand.u32 %v278, 4294901760
    %v280 = vsub.f32 %v278, %v279
    %v281 = vand.u32 %v280, 4294901760
    %282 = vmatprep.subr.mxu0 %v281
    %v283 = vand.u32 %v127, 4294901760
    %v284 = vsub.f32 %v127, %v283
    %v285 = vand.u32 %v284, 4294901760
    %v286 = vsub.f32 %v284, %v285
    %v287 = vand.u32 %v286, 4294901760
    %288 = vmatpush1.msra.mxu0 %v287
    %v289 = vand.u32 %v130, 4294901760
    %v290 = vsub.f32 %v130, %v289
    %v291 = vand.u32 %v290, 4294901760
    %v292 = vsub.f32 %v290, %v291
    %v293 = vand.u32 %v292, 4294901760
    %294 = vmatprep.subr.mxu0 %v293
    %v295 = vand.u32 %v129, 4294901760
    %v296 = vsub.f32 %v129, %v295
    %v297 = vand.u32 %v296, 4294901760
    %v298 = vsub.f32 %v296, %v297
    %v299 = vand.u32 %v298, 4294901760
    %300 = vmatpush1.msra.mxu0 %v299
    %v301 = vand.u32 %v132, 4294901760
    %v302 = vsub.f32 %v132, %v301
    %v303 = vand.u32 %v302, 4294901760
    %v304 = vsub.f32 %v302, %v303
    %v305 = vand.u32 %v304, 4294901760
    %306 = vmatprep.subr.mxu0 %v305
    %v307 = vand.u32 %v131, 4294901760
    %v308 = vsub.f32 %v131, %v307
    %v309 = vand.u32 %v308, 4294901760
    %v310 = vsub.f32 %v308, %v309
    %v311 = vand.u32 %v310, 4294901760
    %312 = vmatpush1.msra.mxu0 %v311
    %v313 = vand.u32 %v134, 4294901760
    %v314 = vsub.f32 %v134, %v313
    %v315 = vand.u32 %v314, 4294901760
    %v316 = vsub.f32 %v314, %v315
    %v317 = vand.u32 %v316, 4294901760
    %318 = vmatprep.subr.mxu0 %v317
    %v319 = vand.u32 %v133, 4294901760
    %v320 = vsub.f32 %v133, %v319
    %v321 = vand.u32 %v320, 4294901760
    %v322 = vsub.f32 %v320, %v321
    %v323 = vand.u32 %v322, 4294901760
    %324 = vmatpush1.msra.mxu0 %v323
    %v325 = vand.u32 %v136, 4294901760
    %v326 = vsub.f32 %v136, %v325
    %v327 = vand.u32 %v326, 4294901760
    %v328 = vsub.f32 %v326, %v327
    %v329 = vand.u32 %v328, 4294901760
    %330 = vmatprep.subr.mxu0 %v329
    %v331 = vand.u32 %v135, 4294901760
    %v332 = vsub.f32 %v135, %v331
    %v333 = vand.u32 %v332, 4294901760
    %v334 = vsub.f32 %v332, %v333
    %v335 = vand.u32 %v334, 4294901760
    %336 = vmatpush1.msra.mxu0 %v335
    %v337 = vand.u32 %v138, 4294901760
    %v338 = vsub.f32 %v138, %v337
    %v339 = vand.u32 %v338, 4294901760
    %v340 = vsub.f32 %v338, %v339
    %v341 = vand.u32 %v340, 4294901760
    %342 = vmatprep.subr.mxu0 %v341
    %v343 = vand.u32 %v137, 4294901760
    %v344 = vsub.f32 %v137, %v343
    %v345 = vand.u32 %v344, 4294901760
    %v346 = vsub.f32 %v344, %v345
    %v347 = vand.u32 %v346, 4294901760
    %348 = vmatpush1.msra.mxu0 %v347
    %v349 = vand.u32 %v140, 4294901760
    %v350 = vsub.f32 %v140, %v349
    %v351 = vand.u32 %v350, 4294901760
    %v352 = vsub.f32 %v350, %v351
    %v353 = vand.u32 %v352, 4294901760
    %354 = vmatprep.subr.mxu0 %v353
    %v355 = vand.u32 %v139, 4294901760
    %v356 = vsub.f32 %v139, %v355
    %v357 = vand.u32 %v356, 4294901760
    %v358 = vsub.f32 %v356, %v357
    %v359 = vand.u32 %v358, 4294901760
    %360 = vmatpush1.msra.mxu0 %v359
    %v361 = vand.u32 %v142, 4294901760
    %v362 = vsub.f32 %v142, %v361
    %v363 = vand.u32 %v362, 4294901760
    %v364 = vsub.f32 %v362, %v363
    %v365 = vand.u32 %v364, 4294901760
    %366 = vmatprep.subr.mxu0 %v365
    %v367 = vand.u32 %v141, 4294901760
    %v368 = vsub.f32 %v141, %v367
    %v369 = vand.u32 %v368, 4294901760
    %v370 = vsub.f32 %v368, %v369
    %v371 = vand.u32 %v370, 4294901760
    %372 = vmatpush1.msra.mxu0 %v371
    %v373 = vand.u32 %v144, 4294901760
    %v374 = vsub.f32 %v144, %v373
    %v375 = vand.u32 %v374, 4294901760
    %v376 = vsub.f32 %v374, %v375
    %v377 = vand.u32 %v376, 4294901760
    %378 = vmatprep.subr.mxu0 %v377
    %v379 = vand.u32 %v143, 4294901760
    %v380 = vsub.f32 %v143, %v379
    %v381 = vand.u32 %v380, 4294901760
    %v382 = vsub.f32 %v380, %v381
    %v383 = vand.u32 %v382, 4294901760
    %384 = vmatpush1.msra.mxu0 %v383
    %v385 = vand.u32 %v146, 4294901760
    %v386 = vsub.f32 %v146, %v385
    %v387 = vand.u32 %v386, 4294901760
    %v388 = vsub.f32 %v386, %v387
    %v389 = vand.u32 %v388, 4294901760
    %390 = vmatprep.subr.mxu0 %v389
    %v391 = vand.u32 %v145, 4294901760
    %v392 = vsub.f32 %v145, %v391
    %v393 = vand.u32 %v392, 4294901760
    %v394 = vsub.f32 %v392, %v393
    %v395 = vand.u32 %v394, 4294901760
    %396 = vmatpush1.msra.mxu0 %v395
    %v397 = vand.u32 %v148, 4294901760
    %v398 = vsub.f32 %v148, %v397
    %v399 = vand.u32 %v398, 4294901760
    %v400 = vsub.f32 %v398, %v399
    %v401 = vand.u32 %v400, 4294901760
    %402 = vmatprep.subr.mxu0 %v401
    %v403 = vand.u32 %v147, 4294901760
    %v404 = vsub.f32 %v147, %v403
    %v405 = vand.u32 %v404, 4294901760
    %v406 = vsub.f32 %v404, %v405
    %v407 = vand.u32 %v406, 4294901760
    %408 = vmatpush1.msra.mxu0 %v407
    %v409 = vand.u32 %v150, 4294901760
    %v410 = vsub.f32 %v150, %v409
    %v411 = vand.u32 %v410, 4294901760
    %v412 = vsub.f32 %v410, %v411
    %v413 = vand.u32 %v412, 4294901760
    %414 = vmatprep.subr.mxu0 %v413
    %v415 = vand.u32 %v149, 4294901760
    %v416 = vsub.f32 %v149, %v415
    %v417 = vand.u32 %v416, 4294901760
    %v418 = vsub.f32 %v416, %v417
    %v419 = vand.u32 %v418, 4294901760
    %420 = vmatpush1.msra.mxu0 %v419
    %v421 = vand.u32 %v152, 4294901760
    %v422 = vsub.f32 %v152, %v421
    %v423 = vand.u32 %v422, 4294901760
    %v424 = vsub.f32 %v422, %v423
    %v425 = vand.u32 %v424, 4294901760
    %426 = vmatprep.subr.mxu0 %v425
    %v427 = vand.u32 %v151, 4294901760
    %v428 = vsub.f32 %v151, %v427
    %v429 = vand.u32 %v428, 4294901760
    %v430 = vsub.f32 %v428, %v429
    %v431 = vand.u32 %v430, 4294901760
    %432 = vmatpush1.msra.mxu0 %v431
    %v433 = vand.u32 %v154, 4294901760
    %v434 = vsub.f32 %v154, %v433
    %v435 = vand.u32 %v434, 4294901760
    %v436 = vsub.f32 %v434, %v435
    %v437 = vand.u32 %v436, 4294901760
    %438 = vmatprep.subr.mxu0 %v437
    %v439 = vand.u32 %v153, 4294901760
    %v440 = vsub.f32 %v153, %v439
    %v441 = vand.u32 %v440, 4294901760
    %v442 = vsub.f32 %v440, %v441
    %v443 = vand.u32 %v442, 4294901760
    %444 = vmatpush1.msra.mxu0 %v443
    %v445 = vand.u32 %v156, 4294901760
    %v446 = vsub.f32 %v156, %v445
    %v447 = vand.u32 %v446, 4294901760
    %v448 = vsub.f32 %v446, %v447
    %v449 = vand.u32 %v448, 4294901760
    %450 = vmatprep.subr.mxu0 %v449
    %v451 = vand.u32 %v155, 4294901760
    %v452 = vsub.f32 %v155, %v451
    %v453 = vand.u32 %v452, 4294901760
    %v454 = vsub.f32 %v452, %v453
    %v455 = vand.u32 %v454, 4294901760
    %456 = vmatpush1.msra.mxu0 %v455
    %457 = vmatprep.subr.mxu0 0.0
    %458 = vmatpush1.msra.mxu0 0.0
    %459 = vmatprep.subr.mxu0 0.0
    %460 = vmatpush1.msra.mxu0 0.0
    %461 = vmatprep.subr.mxu0 0.0
    %462 = vmatpush1.msra.mxu0 0.0
    %463 = vmatprep.subr.mxu0 0.0
    %464 = vmatpush1.msra.mxu0 0.0
    %465 = vmatprep.subr.mxu0 0.0
    %466 = vmatpush1.msra.mxu0 0.0
    %467 = vmatprep.subr.mxu0 0.0
    %468 = vmatpush1.msra.mxu0 0.0
    %469 = vmatprep.subr.mxu0 0.0
    %470 = vmatpush1.msra.mxu0 0.0
    %471 = vmatprep.subr.mxu0 0.0
    %472 = vmatpush1.msra.mxu0 0.0
    %473 = vmatprep.subr.mxu0 0.0
    %474 = vmatpush1.msra.mxu0 0.0
    %475 = vmatprep.subr.mxu0 0.0
    %476 = vmatpush1.msra.mxu0 0.0
    %477 = vmatprep.subr.mxu0 0.0
    %478 = vmatpush1.msra.mxu0 0.0
    %479 = vmatprep.subr.mxu0 0.0
    %480 = vmatpush1.msra.mxu0 0.0
    %481 = vmatprep.subr.mxu0 0.0
    %482 = vmatpush1.msra.mxu0 0.0
    %483 = vmatprep.subr.mxu0 0.0
    %484 = vmatpush1.msra.mxu0 0.0
    %485 = vmatprep.subr.mxu0 0.0
    %486 = vmatpush1.msra.mxu0 0.0
    %487 = vmatprep.subr.mxu0 0.0
    %488 = vmatpush1.msra.mxu0 0.0
    %489 = vmatprep.mubr.f32.mxu0 0.0
    %v490 = vand.u32 %v124, 4294901760
    %491 = vmatmul.mubr.f32.gmra.mrb[0].mxu0 %v490
    %v492 = vpop.f32.mrb[0].mxu0
    %v493 = vadd.f32 %v261, %v492
    %v494 = vpop.f32.mrb[0].mxu0
    %v495 = vadd.f32 %v263, %v494
    %496 = vdwg.mxu0
    %v497 = vand.u32 %v126, 4294901760
    %v498 = vsub.f32 %v126, %v497
    %499 = vmatprep.subr.mxu0 %v498
    %v500 = vand.u32 %v125, 4294901760
    %v501 = vsub.f32 %v125, %v500
    %502 = vmatpush1.msra.mxu0 %v501
    %v503 = vand.u32 %v128, 4294901760
    %v504 = vsub.f32 %v128, %v503
    %505 = vmatprep.subr.mxu0 %v504
    %v506 = vand.u32 %v127, 4294901760
    %v507 = vsub.f32 %v127, %v506
    %508 = vmatpush1.msra.mxu0 %v507
    %v509 = vand.u32 %v130, 4294901760
    %v510 = vsub.f32 %v130, %v509
    %511 = vmatprep.subr.mxu0 %v510
    %v512 = vand.u32 %v129, 4294901760
    %v513 = vsub.f32 %v129, %v512
    %514 = vmatpush1.msra.mxu0 %v513
    %v515 = vand.u32 %v132, 4294901760
    %v516 = vsub.f32 %v132, %v515
    %517 = vmatprep.subr.mxu0 %v516
    %v518 = vand.u32 %v131, 4294901760
    %v519 = vsub.f32 %v131, %v518
    %520 = vmatpush1.msra.mxu0 %v519
    %v521 = vand.u32 %v134, 4294901760
    %v522 = vsub.f32 %v134, %v521
    %523 = vmatprep.subr.mxu0 %v522
    %v524 = vand.u32 %v133, 4294901760
    %v525 = vsub.f32 %v133, %v524
    %526 = vmatpush1.msra.mxu0 %v525
    %v527 = vand.u32 %v136, 4294901760
    %v528 = vsub.f32 %v136, %v527
    %529 = vmatprep.subr.mxu0 %v528
    %v530 = vand.u32 %v135, 4294901760
    %v531 = vsub.f32 %v135, %v530
    %532 = vmatpush1.msra.mxu0 %v531
    %v533 = vand.u32 %v138, 4294901760
    %v534 = vsub.f32 %v138, %v533
    %535 = vmatprep.subr.mxu0 %v534
    %v536 = vand.u32 %v137, 4294901760
    %v537 = vsub.f32 %v137, %v536
    %538 = vmatpush1.msra.mxu0 %v537
    %v539 = vand.u32 %v140, 4294901760
    %v540 = vsub.f32 %v140, %v539
    %541 = vmatprep.subr.mxu0 %v540
    %v542 = vand.u32 %v139, 4294901760
    %v543 = vsub.f32 %v139, %v542
    %544 = vmatpush1.msra.mxu0 %v543
    %v545 = vand.u32 %v142, 4294901760
    %v546 = vsub.f32 %v142, %v545
    %547 = vmatprep.subr.mxu0 %v546
    %v548 = vand.u32 %v141, 4294901760
    %v549 = vsub.f32 %v141, %v548
    %550 = vmatpush1.msra.mxu0 %v549
    %v551 = vand.u32 %v144, 4294901760
    %v552 = vsub.f32 %v144, %v551
    %553 = vmatprep.subr.mxu0 %v552
    %v554 = vand.u32 %v143, 4294901760
    %v555 = vsub.f32 %v143, %v554
    %556 = vmatpush1.msra.mxu0 %v555
    %v557 = vand.u32 %v146, 4294901760
    %v558 = vsub.f32 %v146, %v557
    %559 = vmatprep.subr.mxu0 %v558
    %v560 = vand.u32 %v145, 4294901760
    %v561 = vsub.f32 %v145, %v560
    %562 = vmatpush1.msra.mxu0 %v561
    %v563 = vand.u32 %v148, 4294901760
    %v564 = vsub.f32 %v148, %v563
    %565 = vmatprep.subr.mxu0 %v564
    %v566 = vand.u32 %v147, 4294901760
    %v567 = vsub.f32 %v147, %v566
    %568 = vmatpush1.msra.mxu0 %v567
    %v569 = vand.u32 %v150, 4294901760
    %v570 = vsub.f32 %v150, %v569
    %571 = vmatprep.subr.mxu0 %v570
    %v572 = vand.u32 %v149, 4294901760
    %v573 = vsub.f32 %v149, %v572
    %574 = vmatpush1.msra.mxu0 %v573
    %v575 = vand.u32 %v152, 4294901760
    %v576 = vsub.f32 %v152, %v575
    %577 = vmatprep.subr.mxu0 %v576
    %v578 = vand.u32 %v151, 4294901760
    %v579 = vsub.f32 %v151, %v578
    %580 = vmatpush1.msra.mxu0 %v579
    %v581 = vand.u32 %v154, 4294901760
    %v582 = vsub.f32 %v154, %v581
    %583 = vmatprep.subr.mxu0 %v582
    %v584 = vand.u32 %v153, 4294901760
    %v585 = vsub.f32 %v153, %v584
    %586 = vmatpush1.msra.mxu0 %v585
    %v587 = vand.u32 %v156, 4294901760
    %v588 = vsub.f32 %v156, %v587
    %589 = vmatprep.subr.mxu0 %v588
    %v590 = vand.u32 %v155, 4294901760
    %v591 = vsub.f32 %v155, %v590
    %592 = vmatpush1.msra.mxu0 %v591
    %593 = vmatprep.subr.mxu0 0.0
    %594 = vmatpush1.msra.mxu0 0.0
    %595 = vmatprep.subr.mxu0 0.0
    %596 = vmatpush1.msra.mxu0 0.0
    %597 = vmatprep.subr.mxu0 0.0
    %598 = vmatpush1.msra.mxu0 0.0
    %599 = vmatprep.subr.mxu0 0.0
    %600 = vmatpush1.msra.mxu0 0.0
    %601 = vmatprep.subr.mxu0 0.0
    %602 = vmatpush1.msra.mxu0 0.0
    %603 = vmatprep.subr.mxu0 0.0
    %604 = vmatpush1.msra.mxu0 0.0
    %605 = vmatprep.subr.mxu0 0.0
    %606 = vmatpush1.msra.mxu0 0.0
    %607 = vmatprep.subr.mxu0 0.0
    %608 = vmatpush1.msra.mxu0 0.0
    %609 = vmatprep.subr.mxu0 0.0
    %610 = vmatpush1.msra.mxu0 0.0
    %611 = vmatprep.subr.mxu0 0.0
    %612 = vmatpush1.msra.mxu0 0.0
    %613 = vmatprep.subr.mxu0 0.0
    %614 = vmatpush1.msra.mxu0 0.0
    %615 = vmatprep.subr.mxu0 0.0
    %616 = vmatpush1.msra.mxu0 0.0
    %617 = vmatprep.subr.mxu0 0.0
    %618 = vmatpush1.msra.mxu0 0.0
    %619 = vmatprep.subr.mxu0 0.0
    %620 = vmatpush1.msra.mxu0 0.0
    %621 = vmatprep.subr.mxu0 0.0
    %622 = vmatpush1.msra.mxu0 0.0
    %623 = vmatprep.subr.mxu0 0.0
    %624 = vmatpush1.msra.mxu0 0.0
    %625 = vmatprep.mubr.f32.mxu0 0.0
    %v626 = vand.u32 %v124, 4294901760
    %v627 = vsub.f32 %v124, %v626
    %628 = vmatmul.mubr.f32.gmra.mrb[0].mxu0 %v627
    %v629 = vpop.f32.mrb[0].mxu0
    %v630 = vadd.f32 %v493, %v629
    %v631 = vpop.f32.mrb[0].mxu0
    %v632 = vadd.f32 %v495, %v631
    %633 = vdwg.mxu0
    %v634 = vand.u32 %v126, 4294901760
    %635 = vmatprep.subr.mxu0 %v634
    %v636 = vand.u32 %v125, 4294901760
    %637 = vmatpush1.msra.mxu0 %v636
    %v638 = vand.u32 %v128, 4294901760
    %639 = vmatprep.subr.mxu0 %v638
    %v640 = vand.u32 %v127, 4294901760
    %641 = vmatpush1.msra.mxu0 %v640
    %v642 = vand.u32 %v130, 4294901760
    %643 = vmatprep.subr.mxu0 %v642
    %v644 = vand.u32 %v129, 4294901760
    %645 = vmatpush1.msra.mxu0 %v644
    %v646 = vand.u32 %v132, 4294901760
    %647 = vmatprep.subr.mxu0 %v646
    %v648 = vand.u32 %v131, 4294901760
    %649 = vmatpush1.msra.mxu0 %v648
    %v650 = vand.u32 %v134, 4294901760
    %651 = vmatprep.subr.mxu0 %v650
    %v652 = vand.u32 %v133, 4294901760
    %653 = vmatpush1.msra.mxu0 %v652
    %v654 = vand.u32 %v136, 4294901760
    %655 = vmatprep.subr.mxu0 %v654
    %v656 = vand.u32 %v135, 4294901760
    %657 = vmatpush1.msra.mxu0 %v656
    %v658 = vand.u32 %v138, 4294901760
    %659 = vmatprep.subr.mxu0 %v658
    %v660 = vand.u32 %v137, 4294901760
    %661 = vmatpush1.msra.mxu0 %v660
    %v662 = vand.u32 %v140, 4294901760
    %663 = vmatprep.subr.mxu0 %v662
    %v664 = vand.u32 %v139, 4294901760
    %665 = vmatpush1.msra.mxu0 %v664
    %v666 = vand.u32 %v142, 4294901760
    %667 = vmatprep.subr.mxu0 %v666
    %v668 = vand.u32 %v141, 4294901760
    %669 = vmatpush1.msra.mxu0 %v668
    %v670 = vand.u32 %v144, 4294901760
    %671 = vmatprep.subr.mxu0 %v670
    %v672 = vand.u32 %v143, 4294901760
    %673 = vmatpush1.msra.mxu0 %v672
    %v674 = vand.u32 %v146, 4294901760
    %675 = vmatprep.subr.mxu0 %v674
    %v676 = vand.u32 %v145, 4294901760
    %677 = vmatpush1.msra.mxu0 %v676
    %v678 = vand.u32 %v148, 4294901760
    %679 = vmatprep.subr.mxu0 %v678
    %v680 = vand.u32 %v147, 4294901760
    %681 = vmatpush1.msra.mxu0 %v680
    %v682 = vand.u32 %v150, 4294901760
    %683 = vmatprep.subr.mxu0 %v682
    %v684 = vand.u32 %v149, 4294901760
    %685 = vmatpush1.msra.mxu0 %v684
    %v686 = vand.u32 %v152, 4294901760
    %687 = vmatprep.subr.mxu0 %v686
    %v688 = vand.u32 %v151, 4294901760
    %689 = vmatpush1.msra.mxu0 %v688
    %v690 = vand.u32 %v154, 4294901760
    %691 = vmatprep.subr.mxu0 %v690
    %v692 = vand.u32 %v153, 4294901760
    %693 = vmatpush1.msra.mxu0 %v692
    %v694 = vand.u32 %v156, 4294901760
    %695 = vmatprep.subr.mxu0 %v694
    %v696 = vand.u32 %v155, 4294901760
    %697 = vmatpush1.msra.mxu0 %v696
    %698 = vmatprep.subr.mxu0 0.0
    %699 = vmatpush1.msra.mxu0 0.0
    %700 = vmatprep.subr.mxu0 0.0
    %701 = vmatpush1.msra.mxu0 0.0
    %702 = vmatprep.subr.mxu0 0.0
    %703 = vmatpush1.msra.mxu0 0.0
    %704 = vmatprep.subr.mxu0 0.0
    %705 = vmatpush1.msra.mxu0 0.0
    %706 = vmatprep.subr.mxu0 0.0
    %707 = vmatpush1.msra.mxu0 0.0
    %708 = vmatprep.subr.mxu0 0.0
    %709 = vmatpush1.msra.mxu0 0.0
    %710 = vmatprep.subr.mxu0 0.0
    %711 = vmatpush1.msra.mxu0 0.0
    %712 = vmatprep.subr.mxu0 0.0
    %713 = vmatpush1.msra.mxu0 0.0
    %714 = vmatprep.subr.mxu0 0.0
    %715 = vmatpush1.msra.mxu0 0.0
    %716 = vmatprep.subr.mxu0 0.0
    %717 = vmatpush1.msra.mxu0 0.0
    %718 = vmatprep.subr.mxu0 0.0
    %719 = vmatpush1.msra.mxu0 0.0
    %720 = vmatprep.subr.mxu0 0.0
    %721 = vmatpush1.msra.mxu0 0.0
    %722 = vmatprep.subr.mxu0 0.0
    %723 = vmatpush1.msra.mxu0 0.0
    %724 = vmatprep.subr.mxu0 0.0
    %725 = vmatpush1.msra.mxu0 0.0
    %726 = vmatprep.subr.mxu0 0.0
    %727 = vmatpush1.msra.mxu0 0.0
    %728 = vmatprep.subr.mxu0 0.0
    %729 = vmatpush1.msra.mxu0 0.0
    %730 = vmatprep.mubr.f32.mxu0 0.0
    %v731 = vand.u32 %v124, 4294901760
    %v732 = vsub.f32 %v124, %v731
    %v733 = vand.u32 %v732, 4294901760
    %734 = vmatmul.mubr.f32.gmra.mrb[0].mxu0 %v733
    %v735 = vpop.f32.mrb[0].mxu0
    %v736 = vadd.f32 %v630, %v735
    %v737 = vpop.f32.mrb[0].mxu0
    %v738 = vadd.f32 %v632, %v737
    %739 = vdwg.mxu0
    %v740 = vand.u32 %v126, 4294901760
    %v741 = vsub.f32 %v126, %v740
    %v742 = vand.u32 %v741, 4294901760
    %743 = vmatprep.subr.mxu0 %v742
    %v744 = vand.u32 %v125, 4294901760
    %v745 = vsub.f32 %v125, %v744
    %v746 = vand.u32 %v745, 4294901760
    %747 = vmatpush1.msra.mxu0 %v746
    %v748 = vand.u32 %v128, 4294901760
    %v749 = vsub.f32 %v128, %v748
    %v750 = vand.u32 %v749, 4294901760
    %751 = vmatprep.subr.mxu0 %v750
    %v752 = vand.u32 %v127, 4294901760
    %v753 = vsub.f32 %v127, %v752
    %v754 = vand.u32 %v753, 4294901760
    %755 = vmatpush1.msra.mxu0 %v754
    %v756 = vand.u32 %v130, 4294901760
    %v757 = vsub.f32 %v130, %v756
    %v758 = vand.u32 %v757, 4294901760
    %759 = vmatprep.subr.mxu0 %v758
    %v760 = vand.u32 %v129, 4294901760
    %v761 = vsub.f32 %v129, %v760
    %v762 = vand.u32 %v761, 4294901760
    %763 = vmatpush1.msra.mxu0 %v762
    %v764 = vand.u32 %v132, 4294901760
    %v765 = vsub.f32 %v132, %v764
    %v766 = vand.u32 %v765, 4294901760
    %767 = vmatprep.subr.mxu0 %v766
    %v768 = vand.u32 %v131, 4294901760
    %v769 = vsub.f32 %v131, %v768
    %v770 = vand.u32 %v769, 4294901760
    %771 = vmatpush1.msra.mxu0 %v770
    %v772 = vand.u32 %v134, 4294901760
    %v773 = vsub.f32 %v134, %v772
    %v774 = vand.u32 %v773, 4294901760
    %775 = vmatprep.subr.mxu0 %v774
    %v776 = vand.u32 %v133, 4294901760
    %v777 = vsub.f32 %v133, %v776
    %v778 = vand.u32 %v777, 4294901760
    %779 = vmatpush1.msra.mxu0 %v778
    %v780 = vand.u32 %v136, 4294901760
    %v781 = vsub.f32 %v136, %v780
    %v782 = vand.u32 %v781, 4294901760
    %783 = vmatprep.subr.mxu0 %v782
    %v784 = vand.u32 %v135, 4294901760
    %v785 = vsub.f32 %v135, %v784
    %v786 = vand.u32 %v785, 4294901760
    %787 = vmatpush1.msra.mxu0 %v786
    %v788 = vand.u32 %v138, 4294901760
    %v789 = vsub.f32 %v138, %v788
    %v790 = vand.u32 %v789, 4294901760
    %791 = vmatprep.subr.mxu0 %v790
    %v792 = vand.u32 %v137, 4294901760
    %v793 = vsub.f32 %v137, %v792
    %v794 = vand.u32 %v793, 4294901760
    %795 = vmatpush1.msra.mxu0 %v794
    %v796 = vand.u32 %v140, 4294901760
    %v797 = vsub.f32 %v140, %v796
    %v798 = vand.u32 %v797, 4294901760
    %799 = vmatprep.subr.mxu0 %v798
    %v800 = vand.u32 %v139, 4294901760
    %v801 = vsub.f32 %v139, %v800
    %v802 = vand.u32 %v801, 4294901760
    %803 = vmatpush1.msra.mxu0 %v802
    %v804 = vand.u32 %v142, 4294901760
    %v805 = vsub.f32 %v142, %v804
    %v806 = vand.u32 %v805, 4294901760
    %807 = vmatprep.subr.mxu0 %v806
    %v808 = vand.u32 %v141, 4294901760
    %v809 = vsub.f32 %v141, %v808
    %v810 = vand.u32 %v809, 4294901760
    %811 = vmatpush1.msra.mxu0 %v810
    %v812 = vand.u32 %v144, 4294901760
    %v813 = vsub.f32 %v144, %v812
    %v814 = vand.u32 %v813, 4294901760
    %815 = vmatprep.subr.mxu0 %v814
    %v816 = vand.u32 %v143, 4294901760
    %v817 = vsub.f32 %v143, %v816
    %v818 = vand.u32 %v817, 4294901760
    %819 = vmatpush1.msra.mxu0 %v818
    %v820 = vand.u32 %v146, 4294901760
    %v821 = vsub.f32 %v146, %v820
    %v822 = vand.u32 %v821, 4294901760
    %823 = vmatprep.subr.mxu0 %v822
    %v824 = vand.u32 %v145, 4294901760
    %v825 = vsub.f32 %v145, %v824
    %v826 = vand.u32 %v825, 4294901760
    %827 = vmatpush1.msra.mxu0 %v826
    %v828 = vand.u32 %v148, 4294901760
    %v829 = vsub.f32 %v148, %v828
    %v830 = vand.u32 %v829, 4294901760
    %831 = vmatprep.subr.mxu0 %v830
    %v832 = vand.u32 %v147, 4294901760
    %v833 = vsub.f32 %v147, %v832
    %v834 = vand.u32 %v833, 4294901760
    %835 = vmatpush1.msra.mxu0 %v834
    %v836 = vand.u32 %v150, 4294901760
    %v837 = vsub.f32 %v150, %v836
    %v838 = vand.u32 %v837, 4294901760
    %839 = vmatprep.subr.mxu0 %v838
    %v840 = vand.u32 %v149, 4294901760
    %v841 = vsub.f32 %v149, %v840
    %v842 = vand.u32 %v841, 4294901760
    %843 = vmatpush1.msra.mxu0 %v842
    %v844 = vand.u32 %v152, 4294901760
    %v845 = vsub.f32 %v152, %v844
    %v846 = vand.u32 %v845, 4294901760
    %847 = vmatprep.subr.mxu0 %v846
    %v848 = vand.u32 %v151, 4294901760
    %v849 = vsub.f32 %v151, %v848
    %v850 = vand.u32 %v849, 4294901760
    %851 = vmatpush1.msra.mxu0 %v850
    %v852 = vand.u32 %v154, 4294901760
    %v853 = vsub.f32 %v154, %v852
    %v854 = vand.u32 %v853, 4294901760
    %855 = vmatprep.subr.mxu0 %v854
    %v856 = vand.u32 %v153, 4294901760
    %v857 = vsub.f32 %v153, %v856
    %v858 = vand.u32 %v857, 4294901760
    %859 = vmatpush1.msra.mxu0 %v858
    %v860 = vand.u32 %v156, 4294901760
    %v861 = vsub.f32 %v156, %v860
    %v862 = vand.u32 %v861, 4294901760
    %863 = vmatprep.subr.mxu0 %v862
    %v864 = vand.u32 %v155, 4294901760
    %v865 = vsub.f32 %v155, %v864
    %v866 = vand.u32 %v865, 4294901760
    %867 = vmatpush1.msra.mxu0 %v866
    %868 = vmatprep.subr.mxu0 0.0
    %869 = vmatpush1.msra.mxu0 0.0
    %870 = vmatprep.subr.mxu0 0.0
    %871 = vmatpush1.msra.mxu0 0.0
    %872 = vmatprep.subr.mxu0 0.0
    %873 = vmatpush1.msra.mxu0 0.0
    %874 = vmatprep.subr.mxu0 0.0
    %875 = vmatpush1.msra.mxu0 0.0
    %876 = vmatprep.subr.mxu0 0.0
    %877 = vmatpush1.msra.mxu0 0.0
    %878 = vmatprep.subr.mxu0 0.0
    %879 = vmatpush1.msra.mxu0 0.0
    %880 = vmatprep.subr.mxu0 0.0
    %881 = vmatpush1.msra.mxu0 0.0
    %882 = vmatprep.subr.mxu0 0.0
    %883 = vmatpush1.msra.mxu0 0.0
    %884 = vmatprep.subr.mxu0 0.0
    %885 = vmatpush1.msra.mxu0 0.0
    %886 = vmatprep.subr.mxu0 0.0
    %887 = vmatpush1.msra.mxu0 0.0
    %888 = vmatprep.subr.mxu0 0.0
    %889 = vmatpush1.msra.mxu0 0.0
    %890 = vmatprep.subr.mxu0 0.0
    %891 = vmatpush1.msra.mxu0 0.0
    %892 = vmatprep.subr.mxu0 0.0
    %893 = vmatpush1.msra.mxu0 0.0
    %894 = vmatprep.subr.mxu0 0.0
    %895 = vmatpush1.msra.mxu0 0.0
    %896 = vmatprep.subr.mxu0 0.0
    %897 = vmatpush1.msra.mxu0 0.0
    %898 = vmatprep.subr.mxu0 0.0
    %899 = vmatpush1.msra.mxu0 0.0
    %900 = vmatprep.mubr.f32.mxu0 0.0
    %v901 = vand.u32 %v124, 4294901760
    %902 = vmatmul.mubr.f32.gmra.mrb[0].mxu0 %v901
    %v903 = vpop.f32.mrb[0].mxu0
    %v904 = vadd.f32 %v736, %v903
    %v905 = vpop.f32.mrb[0].mxu0
    %v906 = vadd.f32 %v738, %v905
    %907 = vdwg.mxu0
    %v908 = vand.u32 %v126, 4294901760
    %909 = vmatprep.subr.mxu0 %v908
    %v910 = vand.u32 %v125, 4294901760
    %911 = vmatpush1.msra.mxu0 %v910
    %v912 = vand.u32 %v128, 4294901760
    %913 = vmatprep.subr.mxu0 %v912
    %v914 = vand.u32 %v127, 4294901760
    %915 = vmatpush1.msra.mxu0 %v914
    %v916 = vand.u32 %v130, 4294901760
    %917 = vmatprep.subr.mxu0 %v916
    %v918 = vand.u32 %v129, 4294901760
    %919 = vmatpush1.msra.mxu0 %v918
    %v920 = vand.u32 %v132, 4294901760
    %921 = vmatprep.subr.mxu0 %v920
    %v922 = vand.u32 %v131, 4294901760
    %923 = vmatpush1.msra.mxu0 %v922
    %v924 = vand.u32 %v134, 4294901760
    %925 = vmatprep.subr.mxu0 %v924
    %v926 = vand.u32 %v133, 4294901760
    %927 = vmatpush1.msra.mxu0 %v926
    %v928 = vand.u32 %v136, 4294901760
    %929 = vmatprep.subr.mxu0 %v928
    %v930 = vand.u32 %v135, 4294901760
    %931 = vmatpush1.msra.mxu0 %v930
    %v932 = vand.u32 %v138, 4294901760
    %933 = vmatprep.subr.mxu0 %v932
    %v934 = vand.u32 %v137, 4294901760
    %935 = vmatpush1.msra.mxu0 %v934
    %v936 = vand.u32 %v140, 4294901760
    %937 = vmatprep.subr.mxu0 %v936
    %v938 = vand.u32 %v139, 4294901760
    %939 = vmatpush1.msra.mxu0 %v938
    %v940 = vand.u32 %v142, 4294901760
    %941 = vmatprep.subr.mxu0 %v940
    %v942 = vand.u32 %v141, 4294901760
    %943 = vmatpush1.msra.mxu0 %v942
    %v944 = vand.u32 %v144, 4294901760
    %945 = vmatprep.subr.mxu0 %v944
    %v946 = vand.u32 %v143, 4294901760
    %947 = vmatpush1.msra.mxu0 %v946
    %v948 = vand.u32 %v146, 4294901760
    %949 = vmatprep.subr.mxu0 %v948
    %v950 = vand.u32 %v145, 4294901760
    %951 = vmatpush1.msra.mxu0 %v950
    %v952 = vand.u32 %v148, 4294901760
    %953 = vmatprep.subr.mxu0 %v952
    %v954 = vand.u32 %v147, 4294901760
    %955 = vmatpush1.msra.mxu0 %v954
    %v956 = vand.u32 %v150, 4294901760
    %957 = vmatprep.subr.mxu0 %v956
    %v958 = vand.u32 %v149, 4294901760
    %959 = vmatpush1.msra.mxu0 %v958
    %v960 = vand.u32 %v152, 4294901760
    %961 = vmatprep.subr.mxu0 %v960
    %v962 = vand.u32 %v151, 4294901760
    %963 = vmatpush1.msra.mxu0 %v962
    %v964 = vand.u32 %v154, 4294901760
    %965 = vmatprep.subr.mxu0 %v964
    %v966 = vand.u32 %v153, 4294901760
    %967 = vmatpush1.msra.mxu0 %v966
    %v968 = vand.u32 %v156, 4294901760
    %969 = vmatprep.subr.mxu0 %v968
    %v970 = vand.u32 %v155, 4294901760
    %971 = vmatpush1.msra.mxu0 %v970
    %972 = vmatprep.subr.mxu0 0.0
    %973 = vmatpush1.msra.mxu0 0.0
    %974 = vmatprep.subr.mxu0 0.0
    %975 = vmatpush1.msra.mxu0 0.0
    %976 = vmatprep.subr.mxu0 0.0
    %977 = vmatpush1.msra.mxu0 0.0
    %978 = vmatprep.subr.mxu0 0.0
    %979 = vmatpush1.msra.mxu0 0.0
    %980 = vmatprep.subr.mxu0 0.0
    %981 = vmatpush1.msra.mxu0 0.0
    %982 = vmatprep.subr.mxu0 0.0
    %983 = vmatpush1.msra.mxu0 0.0
    %984 = vmatprep.subr.mxu0 0.0
    %985 = vmatpush1.msra.mxu0 0.0
    %986 = vmatprep.subr.mxu0 0.0
    %987 = vmatpush1.msra.mxu0 0.0
    %988 = vmatprep.subr.mxu0 0.0
    %989 = vmatpush1.msra.mxu0 0.0
    %990 = vmatprep.subr.mxu0 0.0
    %991 = vmatpush1.msra.mxu0 0.0
    %992 = vmatprep.subr.mxu0 0.0
    %993 = vmatpush1.msra.mxu0 0.0
    %994 = vmatprep.subr.mxu0 0.0
    %995 = vmatpush1.msra.mxu0 0.0
    %996 = vmatprep.subr.mxu0 0.0
    %997 = vmatpush1.msra.mxu0 0.0
    %998 = vmatprep.subr.mxu0 0.0
    %999 = vmatpush1.msra.mxu0 0.0
    %1000 = vmatprep.subr.mxu0 0.0
    %1001 = vmatpush1.msra.mxu0 0.0
    %1002 = vmatprep.subr.mxu0 0.0
    %1003 = vmatpush1.msra.mxu0 0.0
    %1004 = vmatprep.mubr.f32.mxu0 0.0
    %v1005 = vand.u32 %v124, 4294901760
    %1006 = vmatmul.mubr.f32.gmra.mrb[0].mxu0 %v1005
    %v1007 = vpop.f32.mrb[0].mxu0
    %v1008 = vadd.f32 %v904, %v1007
    %v1009 = vpop.f32.mrb[0].mxu0
    %v1010 = vadd.f32 %v906, %v1009
    %1011 = vdwg.mxu0
    %v1012 = vand.u32 %v61, 4294901760
    %1013 = vmatprep.subr.mxu0 %v1012
    %v1014 = vand.u32 %v60, 4294901760
    %1015 = vmatpush1.msra.mxu0 %v1014
    %v1016 = vand.u32 %v63, 4294901760
    %1017 = vmatprep.subr.mxu0 %v1016
    %v1018 = vand.u32 %v62, 4294901760
    %1019 = vmatpush1.msra.mxu0 %v1018
    %v1020 = vand.u32 %v65, 4294901760
    %1021 = vmatprep.subr.mxu0 %v1020
    %v1022 = vand.u32 %v64, 4294901760
    %1023 = vmatpush1.msra.mxu0 %v1022
    %v1024 = vand.u32 %v67, 4294901760
    %1025 = vmatprep.subr.mxu0 %v1024
    %v1026 = vand.u32 %v66, 4294901760
    %1027 = vmatpush1.msra.mxu0 %v1026
    %v1028 = vand.u32 %v69, 4294901760
    %1029 = vmatprep.subr.mxu0 %v1028
    %v1030 = vand.u32 %v68, 4294901760
    %1031 = vmatpush1.msra.mxu0 %v1030
    %v1032 = vand.u32 %v71, 4294901760
    %1033 = vmatprep.subr.mxu0 %v1032
    %v1034 = vand.u32 %v70, 4294901760
    %1035 = vmatpush1.msra.mxu0 %v1034
    %v1036 = vand.u32 %v73, 4294901760
    %1037 = vmatprep.subr.mxu0 %v1036
    %v1038 = vand.u32 %v72, 4294901760
    %1039 = vmatpush1.msra.mxu0 %v1038
    %v1040 = vand.u32 %v75, 4294901760
    %1041 = vmatprep.subr.mxu0 %v1040
    %v1042 = vand.u32 %v74, 4294901760
    %1043 = vmatpush1.msra.mxu0 %v1042
    %v1044 = vand.u32 %v77, 4294901760
    %1045 = vmatprep.subr.mxu0 %v1044
    %v1046 = vand.u32 %v76, 4294901760
    %1047 = vmatpush1.msra.mxu0 %v1046
    %v1048 = vand.u32 %v79, 4294901760
    %1049 = vmatprep.subr.mxu0 %v1048
    %v1050 = vand.u32 %v78, 4294901760
    %1051 = vmatpush1.msra.mxu0 %v1050
    %v1052 = vand.u32 %v81, 4294901760
    %1053 = vmatprep.subr.mxu0 %v1052
    %v1054 = vand.u32 %v80, 4294901760
    %1055 = vmatpush1.msra.mxu0 %v1054
    %v1056 = vand.u32 %v83, 4294901760
    %1057 = vmatprep.subr.mxu0 %v1056
    %v1058 = vand.u32 %v82, 4294901760
    %1059 = vmatpush1.msra.mxu0 %v1058
    %v1060 = vand.u32 %v85, 4294901760
    %1061 = vmatprep.subr.mxu0 %v1060
    %v1062 = vand.u32 %v84, 4294901760
    %1063 = vmatpush1.msra.mxu0 %v1062
    %v1064 = vand.u32 %v87, 4294901760
    %1065 = vmatprep.subr.mxu0 %v1064
    %v1066 = vand.u32 %v86, 4294901760
    %1067 = vmatpush1.msra.mxu0 %v1066
    %v1068 = vand.u32 %v89, 4294901760
    %1069 = vmatprep.subr.mxu0 %v1068
    %v1070 = vand.u32 %v88, 4294901760
    %1071 = vmatpush1.msra.mxu0 %v1070
    %v1072 = vand.u32 %v91, 4294901760
    %1073 = vmatprep.subr.mxu0 %v1072
    %v1074 = vand.u32 %v90, 4294901760
    %1075 = vmatpush1.msra.mxu0 %v1074
    %v1076 = vand.u32 %v93, 4294901760
    %1077 = vmatprep.subr.mxu0 %v1076
    %v1078 = vand.u32 %v92, 4294901760
    %1079 = vmatpush1.msra.mxu0 %v1078
    %v1080 = vand.u32 %v95, 4294901760
    %1081 = vmatprep.subr.mxu0 %v1080
    %v1082 = vand.u32 %v94, 4294901760
    %1083 = vmatpush1.msra.mxu0 %v1082
    %v1084 = vand.u32 %v97, 4294901760
    %1085 = vmatprep.subr.mxu0 %v1084
    %v1086 = vand.u32 %v96, 4294901760
    %1087 = vmatpush1.msra.mxu0 %v1086
    %v1088 = vand.u32 %v99, 4294901760
    %1089 = vmatprep.subr.mxu0 %v1088
    %v1090 = vand.u32 %v98, 4294901760
    %1091 = vmatpush1.msra.mxu0 %v1090
    %v1092 = vand.u32 %v101, 4294901760
    %1093 = vmatprep.subr.mxu0 %v1092
    %v1094 = vand.u32 %v100, 4294901760
    %1095 = vmatpush1.msra.mxu0 %v1094
    %v1096 = vand.u32 %v103, 4294901760
    %1097 = vmatprep.subr.mxu0 %v1096
    %v1098 = vand.u32 %v102, 4294901760
    %1099 = vmatpush1.msra.mxu0 %v1098
    %v1100 = vand.u32 %v105, 4294901760
    %1101 = vmatprep.subr.mxu0 %v1100
    %v1102 = vand.u32 %v104, 4294901760
    %1103 = vmatpush1.msra.mxu0 %v1102
    %v1104 = vand.u32 %v107, 4294901760
    %1105 = vmatprep.subr.mxu0 %v1104
    %v1106 = vand.u32 %v106, 4294901760
    %1107 = vmatpush1.msra.mxu0 %v1106
    %v1108 = vand.u32 %v109, 4294901760
    %1109 = vmatprep.subr.mxu0 %v1108
    %v1110 = vand.u32 %v108, 4294901760
    %1111 = vmatpush1.msra.mxu0 %v1110
    %v1112 = vand.u32 %v111, 4294901760
    %1113 = vmatprep.subr.mxu0 %v1112
    %v1114 = vand.u32 %v110, 4294901760
    %1115 = vmatpush1.msra.mxu0 %v1114
    %v1116 = vand.u32 %v113, 4294901760
    %1117 = vmatprep.subr.mxu0 %v1116
    %v1118 = vand.u32 %v112, 4294901760
    %1119 = vmatpush1.msra.mxu0 %v1118
    %v1120 = vand.u32 %v115, 4294901760
    %1121 = vmatprep.subr.mxu0 %v1120
    %v1122 = vand.u32 %v114, 4294901760
    %1123 = vmatpush1.msra.mxu0 %v1122
    %v1124 = vand.u32 %v117, 4294901760
    %1125 = vmatprep.subr.mxu0 %v1124
    %v1126 = vand.u32 %v116, 4294901760
    %1127 = vmatpush1.msra.mxu0 %v1126
    %v1128 = vand.u32 %v119, 4294901760
    %1129 = vmatprep.subr.mxu0 %v1128
    %v1130 = vand.u32 %v118, 4294901760
    %1131 = vmatpush1.msra.mxu0 %v1130
    %v1132 = vand.u32 %v121, 4294901760
    %1133 = vmatprep.subr.mxu0 %v1132
    %v1134 = vand.u32 %v120, 4294901760
    %1135 = vmatpush1.msra.mxu0 %v1134
    %v1136 = vand.u32 %v123, 4294901760
    %1137 = vmatprep.subr.mxu0 %v1136
    %v1138 = vand.u32 %v122, 4294901760
    %1139 = vmatpush1.msra.mxu0 %v1138
    %v1140 = vand.u32 %v59, 4294901760
    %v1141 = vsub.f32 %v59, %v1140
    %v1142 = vand.u32 %v1141, 4294901760
    %v1143 = vsub.f32 %v1141, %v1142
    %v1144 = vand.u32 %v1143, 4294901760
    %1145 = vmatprep.mubr.f32.mxu0 %v1144
    %v1146 = vand.u32 %v58, 4294901760
    %v1147 = vsub.f32 %v58, %v1146
    %v1148 = vand.u32 %v1147, 4294901760
    %v1149 = vsub.f32 %v1147, %v1148
    %v1150 = vand.u32 %v1149, 4294901760
    %1151 = vmatmul.mubr.f32.gmra.mrb[0].mxu0 %v1150
    %v1152 = vpop.f32.mrb[0].mxu0
    %v1153 = vadd.f32 %v1008, %v1152
    %v1154 = vpop.f32.mrb[0].mxu0
    %v1155 = vadd.f32 %v1010, %v1154
    %1156 = vdwg.mxu0
    %v1157 = vand.u32 %v61, 4294901760
    %v1158 = vsub.f32 %v61, %v1157
    %v1159 = vand.u32 %v1158, 4294901760
    %v1160 = vsub.f32 %v1158, %v1159
    %v1161 = vand.u32 %v1160, 4294901760
    %1162 = vmatprep.subr.mxu0 %v1161
    %v1163 = vand.u32 %v60, 4294901760
    %v1164 = vsub.f32 %v60, %v1163
    %v1165 = vand.u32 %v1164, 4294901760
    %v1166 = vsub.f32 %v1164, %v1165
    %v1167 = vand.u32 %v1166, 4294901760
    %1168 = vmatpush1.msra.mxu0 %v1167
    %v1169 = vand.u32 %v63, 4294901760
    %v1170 = vsub.f32 %v63, %v1169
    %v1171 = vand.u32 %v1170, 4294901760
    %v1172 = vsub.f32 %v1170, %v1171
    %v1173 = vand.u32 %v1172, 4294901760
    %1174 = vmatprep.subr.mxu0 %v1173
    %v1175 = vand.u32 %v62, 4294901760
    %v1176 = vsub.f32 %v62, %v1175
    %v1177 = vand.u32 %v1176, 4294901760
    %v1178 = vsub.f32 %v1176, %v1177
    %v1179 = vand.u32 %v1178, 4294901760
    %1180 = vmatpush1.msra.mxu0 %v1179
    %v1181 = vand.u32 %v65, 4294901760
    %v1182 = vsub.f32 %v65, %v1181
    %v1183 = vand.u32 %v1182, 4294901760
    %v1184 = vsub.f32 %v1182, %v1183
    %v1185 = vand.u32 %v1184, 4294901760
    %1186 = vmatprep.subr.mxu0 %v1185
    %v1187 = vand.u32 %v64, 4294901760
    %v1188 = vsub.f32 %v64, %v1187
    %v1189 = vand.u32 %v1188, 4294901760
    %v1190 = vsub.f32 %v1188, %v1189
    %v1191 = vand.u32 %v1190, 4294901760
    %1192 = vmatpush1.msra.mxu0 %v1191
    %v1193 = vand.u32 %v67, 4294901760
    %v1194 = vsub.f32 %v67, %v1193
    %v1195 = vand.u32 %v1194, 4294901760
    %v1196 = vsub.f32 %v1194, %v1195
    %v1197 = vand.u32 %v1196, 4294901760
    %1198 = vmatprep.subr.mxu0 %v1197
    %v1199 = vand.u32 %v66, 4294901760
    %v1200 = vsub.f32 %v66, %v1199
    %v1201 = vand.u32 %v1200, 4294901760
    %v1202 = vsub.f32 %v1200, %v1201
    %v1203 = vand.u32 %v1202, 4294901760
    %1204 = vmatpush1.msra.mxu0 %v1203
    %v1205 = vand.u32 %v69, 4294901760
    %v1206 = vsub.f32 %v69, %v1205
    %v1207 = vand.u32 %v1206, 4294901760
    %v1208 = vsub.f32 %v1206, %v1207
    %v1209 = vand.u32 %v1208, 4294901760
    %1210 = vmatprep.subr.mxu0 %v1209
    %v1211 = vand.u32 %v68, 4294901760
    %v1212 = vsub.f32 %v68, %v1211
    %v1213 = vand.u32 %v1212, 4294901760
    %v1214 = vsub.f32 %v1212, %v1213
    %v1215 = vand.u32 %v1214, 4294901760
    %1216 = vmatpush1.msra.mxu0 %v1215
    %v1217 = vand.u32 %v71, 4294901760
    %v1218 = vsub.f32 %v71, %v1217
    %v1219 = vand.u32 %v1218, 4294901760
    %v1220 = vsub.f32 %v1218, %v1219
    %v1221 = vand.u32 %v1220, 4294901760
    %1222 = vmatprep.subr.mxu0 %v1221
    %v1223 = vand.u32 %v70, 4294901760
    %v1224 = vsub.f32 %v70, %v1223
    %v1225 = vand.u32 %v1224, 4294901760
    %v1226 = vsub.f32 %v1224, %v1225
    %v1227 = vand.u32 %v1226, 4294901760
    %1228 = vmatpush1.msra.mxu0 %v1227
    %v1229 = vand.u32 %v73, 4294901760
    %v1230 = vsub.f32 %v73, %v1229
    %v1231 = vand.u32 %v1230, 4294901760
    %v1232 = vsub.f32 %v1230, %v1231
    %v1233 = vand.u32 %v1232, 4294901760
    %1234 = vmatprep.subr.mxu0 %v1233
    %v1235 = vand.u32 %v72, 4294901760
    %v1236 = vsub.f32 %v72, %v1235
    %v1237 = vand.u32 %v1236, 4294901760
    %v1238 = vsub.f32 %v1236, %v1237
    %v1239 = vand.u32 %v1238, 4294901760
    %1240 = vmatpush1.msra.mxu0 %v1239
    %v1241 = vand.u32 %v75, 4294901760
    %v1242 = vsub.f32 %v75, %v1241
    %v1243 = vand.u32 %v1242, 4294901760
    %v1244 = vsub.f32 %v1242, %v1243
    %v1245 = vand.u32 %v1244, 4294901760
    %1246 = vmatprep.subr.mxu0 %v1245
    %v1247 = vand.u32 %v74, 4294901760
    %v1248 = vsub.f32 %v74, %v1247
    %v1249 = vand.u32 %v1248, 4294901760
    %v1250 = vsub.f32 %v1248, %v1249
    %v1251 = vand.u32 %v1250, 4294901760
    %1252 = vmatpush1.msra.mxu0 %v1251
    %v1253 = vand.u32 %v77, 4294901760
    %v1254 = vsub.f32 %v77, %v1253
    %v1255 = vand.u32 %v1254, 4294901760
    %v1256 = vsub.f32 %v1254, %v1255
    %v1257 = vand.u32 %v1256, 4294901760
    %1258 = vmatprep.subr.mxu0 %v1257
    %v1259 = vand.u32 %v76, 4294901760
    %v1260 = vsub.f32 %v76, %v1259
    %v1261 = vand.u32 %v1260, 4294901760
    %v1262 = vsub.f32 %v1260, %v1261
    %v1263 = vand.u32 %v1262, 4294901760
    %1264 = vmatpush1.msra.mxu0 %v1263
    %v1265 = vand.u32 %v79, 4294901760
    %v1266 = vsub.f32 %v79, %v1265
    %v1267 = vand.u32 %v1266, 4294901760
    %v1268 = vsub.f32 %v1266, %v1267
    %v1269 = vand.u32 %v1268, 4294901760
    %1270 = vmatprep.subr.mxu0 %v1269
    %v1271 = vand.u32 %v78, 4294901760
    %v1272 = vsub.f32 %v78, %v1271
    %v1273 = vand.u32 %v1272, 4294901760
    %v1274 = vsub.f32 %v1272, %v1273
    %v1275 = vand.u32 %v1274, 4294901760
    %1276 = vmatpush1.msra.mxu0 %v1275
    %v1277 = vand.u32 %v81, 4294901760
    %v1278 = vsub.f32 %v81, %v1277
    %v1279 = vand.u32 %v1278, 4294901760
    %v1280 = vsub.f32 %v1278, %v1279
    %v1281 = vand.u32 %v1280, 4294901760
    %1282 = vmatprep.subr.mxu0 %v1281
    %v1283 = vand.u32 %v80, 4294901760
    %v1284 = vsub.f32 %v80, %v1283
    %v1285 = vand.u32 %v1284, 4294901760
    %v1286 = vsub.f32 %v1284, %v1285
    %v1287 = vand.u32 %v1286, 4294901760
    %1288 = vmatpush1.msra.mxu0 %v1287
    %v1289 = vand.u32 %v83, 4294901760
    %v1290 = vsub.f32 %v83, %v1289
    %v1291 = vand.u32 %v1290, 4294901760
    %v1292 = vsub.f32 %v1290, %v1291
    %v1293 = vand.u32 %v1292, 4294901760
    %1294 = vmatprep.subr.mxu0 %v1293
    %v1295 = vand.u32 %v82, 4294901760
    %v1296 = vsub.f32 %v82, %v1295
    %v1297 = vand.u32 %v1296, 4294901760
    %v1298 = vsub.f32 %v1296, %v1297
    %v1299 = vand.u32 %v1298, 4294901760
    %1300 = vmatpush1.msra.mxu0 %v1299
    %v1301 = vand.u32 %v85, 4294901760
    %v1302 = vsub.f32 %v85, %v1301
    %v1303 = vand.u32 %v1302, 4294901760
    %v1304 = vsub.f32 %v1302, %v1303
    %v1305 = vand.u32 %v1304, 4294901760
    %1306 = vmatprep.subr.mxu0 %v1305
    %v1307 = vand.u32 %v84, 4294901760
    %v1308 = vsub.f32 %v84, %v1307
    %v1309 = vand.u32 %v1308, 4294901760
    %v1310 = vsub.f32 %v1308, %v1309
    %v1311 = vand.u32 %v1310, 4294901760
    %1312 = vmatpush1.msra.mxu0 %v1311
    %v1313 = vand.u32 %v87, 4294901760
    %v1314 = vsub.f32 %v87, %v1313
    %v1315 = vand.u32 %v1314, 4294901760
    %v1316 = vsub.f32 %v1314, %v1315
    %v1317 = vand.u32 %v1316, 4294901760
    %1318 = vmatprep.subr.mxu0 %v1317
    %v1319 = vand.u32 %v86, 4294901760
    %v1320 = vsub.f32 %v86, %v1319
    %v1321 = vand.u32 %v1320, 4294901760
    %v1322 = vsub.f32 %v1320, %v1321
    %v1323 = vand.u32 %v1322, 4294901760
    %1324 = vmatpush1.msra.mxu0 %v1323
    %v1325 = vand.u32 %v89, 4294901760
    %v1326 = vsub.f32 %v89, %v1325
    %v1327 = vand.u32 %v1326, 4294901760
    %v1328 = vsub.f32 %v1326, %v1327
    %v1329 = vand.u32 %v1328, 4294901760
    %1330 = vmatprep.subr.mxu0 %v1329
    %v1331 = vand.u32 %v88, 4294901760
    %v1332 = vsub.f32 %v88, %v1331
    %v1333 = vand.u32 %v1332, 4294901760
    %v1334 = vsub.f32 %v1332, %v1333
    %v1335 = vand.u32 %v1334, 4294901760
    %1336 = vmatpush1.msra.mxu0 %v1335
    %v1337 = vand.u32 %v91, 4294901760
    %v1338 = vsub.f32 %v91, %v1337
    %v1339 = vand.u32 %v1338, 4294901760
    %v1340 = vsub.f32 %v1338, %v1339
    %v1341 = vand.u32 %v1340, 4294901760
    %1342 = vmatprep.subr.mxu0 %v1341
    %v1343 = vand.u32 %v90, 4294901760
    %v1344 = vsub.f32 %v90, %v1343
    %v1345 = vand.u32 %v1344, 4294901760
    %v1346 = vsub.f32 %v1344, %v1345
    %v1347 = vand.u32 %v1346, 4294901760
    %1348 = vmatpush1.msra.mxu0 %v1347
    %v1349 = vand.u32 %v93, 4294901760
    %v1350 = vsub.f32 %v93, %v1349
    %v1351 = vand.u32 %v1350, 4294901760
    %v1352 = vsub.f32 %v1350, %v1351
    %v1353 = vand.u32 %v1352, 4294901760
    %1354 = vmatprep.subr.mxu0 %v1353
    %v1355 = vand.u32 %v92, 4294901760
    %v1356 = vsub.f32 %v92, %v1355
    %v1357 = vand.u32 %v1356, 4294901760
    %v1358 = vsub.f32 %v1356, %v1357
    %v1359 = vand.u32 %v1358, 4294901760
    %1360 = vmatpush1.msra.mxu0 %v1359
    %v1361 = vand.u32 %v95, 4294901760
    %v1362 = vsub.f32 %v95, %v1361
    %v1363 = vand.u32 %v1362, 4294901760
    %v1364 = vsub.f32 %v1362, %v1363
    %v1365 = vand.u32 %v1364, 4294901760
    %1366 = vmatprep.subr.mxu0 %v1365
    %v1367 = vand.u32 %v94, 4294901760
    %v1368 = vsub.f32 %v94, %v1367
    %v1369 = vand.u32 %v1368, 4294901760
    %v1370 = vsub.f32 %v1368, %v1369
    %v1371 = vand.u32 %v1370, 4294901760
    %1372 = vmatpush1.msra.mxu0 %v1371
    %v1373 = vand.u32 %v97, 4294901760
    %v1374 = vsub.f32 %v97, %v1373
    %v1375 = vand.u32 %v1374, 4294901760
    %v1376 = vsub.f32 %v1374, %v1375
    %v1377 = vand.u32 %v1376, 4294901760
    %1378 = vmatprep.subr.mxu0 %v1377
    %v1379 = vand.u32 %v96, 4294901760
    %v1380 = vsub.f32 %v96, %v1379
    %v1381 = vand.u32 %v1380, 4294901760
    %v1382 = vsub.f32 %v1380, %v1381
    %v1383 = vand.u32 %v1382, 4294901760
    %1384 = vmatpush1.msra.mxu0 %v1383
    %v1385 = vand.u32 %v99, 4294901760
    %v1386 = vsub.f32 %v99, %v1385
    %v1387 = vand.u32 %v1386, 4294901760
    %v1388 = vsub.f32 %v1386, %v1387
    %v1389 = vand.u32 %v1388, 4294901760
    %1390 = vmatprep.subr.mxu0 %v1389
    %v1391 = vand.u32 %v98, 4294901760
    %v1392 = vsub.f32 %v98, %v1391
    %v1393 = vand.u32 %v1392, 4294901760
    %v1394 = vsub.f32 %v1392, %v1393
    %v1395 = vand.u32 %v1394, 4294901760
    %1396 = vmatpush1.msra.mxu0 %v1395
    %v1397 = vand.u32 %v101, 4294901760
    %v1398 = vsub.f32 %v101, %v1397
    %v1399 = vand.u32 %v1398, 4294901760
    %v1400 = vsub.f32 %v1398, %v1399
    %v1401 = vand.u32 %v1400, 4294901760
    %1402 = vmatprep.subr.mxu0 %v1401
    %v1403 = vand.u32 %v100, 4294901760
    %v1404 = vsub.f32 %v100, %v1403
    %v1405 = vand.u32 %v1404, 4294901760
    %v1406 = vsub.f32 %v1404, %v1405
    %v1407 = vand.u32 %v1406, 4294901760
    %1408 = vmatpush1.msra.mxu0 %v1407
    %v1409 = vand.u32 %v103, 4294901760
    %v1410 = vsub.f32 %v103, %v1409
    %v1411 = vand.u32 %v1410, 4294901760
    %v1412 = vsub.f32 %v1410, %v1411
    %v1413 = vand.u32 %v1412, 4294901760
    %1414 = vmatprep.subr.mxu0 %v1413
    %v1415 = vand.u32 %v102, 4294901760
    %v1416 = vsub.f32 %v102, %v1415
    %v1417 = vand.u32 %v1416, 4294901760
    %v1418 = vsub.f32 %v1416, %v1417
    %v1419 = vand.u32 %v1418, 4294901760
    %1420 = vmatpush1.msra.mxu0 %v1419
    %v1421 = vand.u32 %v105, 4294901760
    %v1422 = vsub.f32 %v105, %v1421
    %v1423 = vand.u32 %v1422, 4294901760
    %v1424 = vsub.f32 %v1422, %v1423
    %v1425 = vand.u32 %v1424, 4294901760
    %1426 = vmatprep.subr.mxu0 %v1425
    %v1427 = vand.u32 %v104, 4294901760
    %v1428 = vsub.f32 %v104, %v1427
    %v1429 = vand.u32 %v1428, 4294901760
    %v1430 = vsub.f32 %v1428, %v1429
    %v1431 = vand.u32 %v1430, 4294901760
    %1432 = vmatpush1.msra.mxu0 %v1431
    %v1433 = vand.u32 %v107, 4294901760
    %v1434 = vsub.f32 %v107, %v1433
    %v1435 = vand.u32 %v1434, 4294901760
    %v1436 = vsub.f32 %v1434, %v1435
    %v1437 = vand.u32 %v1436, 4294901760
    %1438 = vmatprep.subr.mxu0 %v1437
    %v1439 = vand.u32 %v106, 4294901760
    %v1440 = vsub.f32 %v106, %v1439
    %v1441 = vand.u32 %v1440, 4294901760
    %v1442 = vsub.f32 %v1440, %v1441
    %v1443 = vand.u32 %v1442, 4294901760
    %1444 = vmatpush1.msra.mxu0 %v1443
    %v1445 = vand.u32 %v109, 4294901760
    %v1446 = vsub.f32 %v109, %v1445
    %v1447 = vand.u32 %v1446, 4294901760
    %v1448 = vsub.f32 %v1446, %v1447
    %v1449 = vand.u32 %v1448, 4294901760
    %1450 = vmatprep.subr.mxu0 %v1449
    %v1451 = vand.u32 %v108, 4294901760
    %v1452 = vsub.f32 %v108, %v1451
    %v1453 = vand.u32 %v1452, 4294901760
    %v1454 = vsub.f32 %v1452, %v1453
    %v1455 = vand.u32 %v1454, 4294901760
    %1456 = vmatpush1.msra.mxu0 %v1455
    %v1457 = vand.u32 %v111, 4294901760
    %v1458 = vsub.f32 %v111, %v1457
    %v1459 = vand.u32 %v1458, 4294901760
    %v1460 = vsub.f32 %v1458, %v1459
    %v1461 = vand.u32 %v1460, 4294901760
    %1462 = vmatprep.subr.mxu0 %v1461
    %v1463 = vand.u32 %v110, 4294901760
    %v1464 = vsub.f32 %v110, %v1463
    %v1465 = vand.u32 %v1464, 4294901760
    %v1466 = vsub.f32 %v1464, %v1465
    %v1467 = vand.u32 %v1466, 4294901760
    %1468 = vmatpush1.msra.mxu0 %v1467
    %v1469 = vand.u32 %v113, 4294901760
    %v1470 = vsub.f32 %v113, %v1469
    %v1471 = vand.u32 %v1470, 4294901760
    %v1472 = vsub.f32 %v1470, %v1471
    %v1473 = vand.u32 %v1472, 4294901760
    %1474 = vmatprep.subr.mxu0 %v1473
    %v1475 = vand.u32 %v112, 4294901760
    %v1476 = vsub.f32 %v112, %v1475
    %v1477 = vand.u32 %v1476, 4294901760
    %v1478 = vsub.f32 %v1476, %v1477
    %v1479 = vand.u32 %v1478, 4294901760
    %1480 = vmatpush1.msra.mxu0 %v1479
    %v1481 = vand.u32 %v115, 4294901760
    %v1482 = vsub.f32 %v115, %v1481
    %v1483 = vand.u32 %v1482, 4294901760
    %v1484 = vsub.f32 %v1482, %v1483
    %v1485 = vand.u32 %v1484, 4294901760
    %1486 = vmatprep.subr.mxu0 %v1485
    %v1487 = vand.u32 %v114, 4294901760
    %v1488 = vsub.f32 %v114, %v1487
    %v1489 = vand.u32 %v1488, 4294901760
    %v1490 = vsub.f32 %v1488, %v1489
    %v1491 = vand.u32 %v1490, 4294901760
    %1492 = vmatpush1.msra.mxu0 %v1491
    %v1493 = vand.u32 %v117, 4294901760
    %v1494 = vsub.f32 %v117, %v1493
    %v1495 = vand.u32 %v1494, 4294901760
    %v1496 = vsub.f32 %v1494, %v1495
    %v1497 = vand.u32 %v1496, 4294901760
    %1498 = vmatprep.subr.mxu0 %v1497
    %v1499 = vand.u32 %v116, 4294901760
    %v1500 = vsub.f32 %v116, %v1499
    %v1501 = vand.u32 %v1500, 4294901760
    %v1502 = vsub.f32 %v1500, %v1501
    %v1503 = vand.u32 %v1502, 4294901760
    %1504 = vmatpush1.msra.mxu0 %v1503
    %v1505 = vand.u32 %v119, 4294901760
    %v1506 = vsub.f32 %v119, %v1505
    %v1507 = vand.u32 %v1506, 4294901760
    %v1508 = vsub.f32 %v1506, %v1507
    %v1509 = vand.u32 %v1508, 4294901760
    %1510 = vmatprep.subr.mxu0 %v1509
    %v1511 = vand.u32 %v118, 4294901760
    %v1512 = vsub.f32 %v118, %v1511
    %v1513 = vand.u32 %v1512, 4294901760
    %v1514 = vsub.f32 %v1512, %v1513
    %v1515 = vand.u32 %v1514, 4294901760
    %1516 = vmatpush1.msra.mxu0 %v1515
    %v1517 = vand.u32 %v121, 4294901760
    %v1518 = vsub.f32 %v121, %v1517
    %v1519 = vand.u32 %v1518, 4294901760
    %v1520 = vsub.f32 %v1518, %v1519
    %v1521 = vand.u32 %v1520, 4294901760
    %1522 = vmatprep.subr.mxu0 %v1521
    %v1523 = vand.u32 %v120, 4294901760
    %v1524 = vsub.f32 %v120, %v1523
    %v1525 = vand.u32 %v1524, 4294901760
    %v1526 = vsub.f32 %v1524, %v1525
    %v1527 = vand.u32 %v1526, 4294901760
    %1528 = vmatpush1.msra.mxu0 %v1527
    %v1529 = vand.u32 %v123, 4294901760
    %v1530 = vsub.f32 %v123, %v1529
    %v1531 = vand.u32 %v1530, 4294901760
    %v1532 = vsub.f32 %v1530, %v1531
    %v1533 = vand.u32 %v1532, 4294901760
    %1534 = vmatprep.subr.mxu0 %v1533
    %v1535 = vand.u32 %v122, 4294901760
    %v1536 = vsub.f32 %v122, %v1535
    %v1537 = vand.u32 %v1536, 4294901760
    %v1538 = vsub.f32 %v1536, %v1537
    %v1539 = vand.u32 %v1538, 4294901760
    %1540 = vmatpush1.msra.mxu0 %v1539
    %v1541 = vand.u32 %v59, 4294901760
    %1542 = vmatprep.mubr.f32.mxu0 %v1541
    %v1543 = vand.u32 %v58, 4294901760
    %1544 = vmatmul.mubr.f32.gmra.mrb[0].mxu0 %v1543
    %v1545 = vpop.f32.mrb[0].mxu0
    %v1546 = vadd.f32 %v1153, %v1545
    %v1547 = vpop.f32.mrb[0].mxu0
    %v1548 = vadd.f32 %v1155, %v1547
    %1549 = vdwg.mxu0
    %v1550 = vand.u32 %v61, 4294901760
    %v1551 = vsub.f32 %v61, %v1550
    %1552 = vmatprep.subr.mxu0 %v1551
    %v1553 = vand.u32 %v60, 4294901760
    %v1554 = vsub.f32 %v60, %v1553
    %1555 = vmatpush1.msra.mxu0 %v1554
    %v1556 = vand.u32 %v63, 4294901760
    %v1557 = vsub.f32 %v63, %v1556
    %1558 = vmatprep.subr.mxu0 %v1557
    %v1559 = vand.u32 %v62, 4294901760
    %v1560 = vsub.f32 %v62, %v1559
    %1561 = vmatpush1.msra.mxu0 %v1560
    %v1562 = vand.u32 %v65, 4294901760
    %v1563 = vsub.f32 %v65, %v1562
    %1564 = vmatprep.subr.mxu0 %v1563
    %v1565 = vand.u32 %v64, 4294901760
    %v1566 = vsub.f32 %v64, %v1565
    %1567 = vmatpush1.msra.mxu0 %v1566
    %v1568 = vand.u32 %v67, 4294901760
    %v1569 = vsub.f32 %v67, %v1568
    %1570 = vmatprep.subr.mxu0 %v1569
    %v1571 = vand.u32 %v66, 4294901760
    %v1572 = vsub.f32 %v66, %v1571
    %1573 = vmatpush1.msra.mxu0 %v1572
    %v1574 = vand.u32 %v69, 4294901760
    %v1575 = vsub.f32 %v69, %v1574
    %1576 = vmatprep.subr.mxu0 %v1575
    %v1577 = vand.u32 %v68, 4294901760
    %v1578 = vsub.f32 %v68, %v1577
    %1579 = vmatpush1.msra.mxu0 %v1578
    %v1580 = vand.u32 %v71, 4294901760
    %v1581 = vsub.f32 %v71, %v1580
    %1582 = vmatprep.subr.mxu0 %v1581
    %v1583 = vand.u32 %v70, 4294901760
    %v1584 = vsub.f32 %v70, %v1583
    %1585 = vmatpush1.msra.mxu0 %v1584
    %v1586 = vand.u32 %v73, 4294901760
    %v1587 = vsub.f32 %v73, %v1586
    %1588 = vmatprep.subr.mxu0 %v1587
    %v1589 = vand.u32 %v72, 4294901760
    %v1590 = vsub.f32 %v72, %v1589
    %1591 = vmatpush1.msra.mxu0 %v1590
    %v1592 = vand.u32 %v75, 4294901760
    %v1593 = vsub.f32 %v75, %v1592
    %1594 = vmatprep.subr.mxu0 %v1593
    %v1595 = vand.u32 %v74, 4294901760
    %v1596 = vsub.f32 %v74, %v1595
    %1597 = vmatpush1.msra.mxu0 %v1596
    %v1598 = vand.u32 %v77, 4294901760
    %v1599 = vsub.f32 %v77, %v1598
    %1600 = vmatprep.subr.mxu0 %v1599
    %v1601 = vand.u32 %v76, 4294901760
    %v1602 = vsub.f32 %v76, %v1601
    %1603 = vmatpush1.msra.mxu0 %v1602
    %v1604 = vand.u32 %v79, 4294901760
    %v1605 = vsub.f32 %v79, %v1604
    %1606 = vmatprep.subr.mxu0 %v1605
    %v1607 = vand.u32 %v78, 4294901760
    %v1608 = vsub.f32 %v78, %v1607
    %1609 = vmatpush1.msra.mxu0 %v1608
    %v1610 = vand.u32 %v81, 4294901760
    %v1611 = vsub.f32 %v81, %v1610
    %1612 = vmatprep.subr.mxu0 %v1611
    %v1613 = vand.u32 %v80, 4294901760
    %v1614 = vsub.f32 %v80, %v1613
    %1615 = vmatpush1.msra.mxu0 %v1614
    %v1616 = vand.u32 %v83, 4294901760
    %v1617 = vsub.f32 %v83, %v1616
    %1618 = vmatprep.subr.mxu0 %v1617
    %v1619 = vand.u32 %v82, 4294901760
    %v1620 = vsub.f32 %v82, %v1619
    %1621 = vmatpush1.msra.mxu0 %v1620
    %v1622 = vand.u32 %v85, 4294901760
    %v1623 = vsub.f32 %v85, %v1622
    %1624 = vmatprep.subr.mxu0 %v1623
    %v1625 = vand.u32 %v84, 4294901760
    %v1626 = vsub.f32 %v84, %v1625
    %1627 = vmatpush1.msra.mxu0 %v1626
    %v1628 = vand.u32 %v87, 4294901760
    %v1629 = vsub.f32 %v87, %v1628
    %1630 = vmatprep.subr.mxu0 %v1629
    %v1631 = vand.u32 %v86, 4294901760
    %v1632 = vsub.f32 %v86, %v1631
    %1633 = vmatpush1.msra.mxu0 %v1632
    %v1634 = vand.u32 %v89, 4294901760
    %v1635 = vsub.f32 %v89, %v1634
    %1636 = vmatprep.subr.mxu0 %v1635
    %v1637 = vand.u32 %v88, 4294901760
    %v1638 = vsub.f32 %v88, %v1637
    %1639 = vmatpush1.msra.mxu0 %v1638
    %v1640 = vand.u32 %v91, 4294901760
    %v1641 = vsub.f32 %v91, %v1640
    %1642 = vmatprep.subr.mxu0 %v1641
    %v1643 = vand.u32 %v90, 4294901760
    %v1644 = vsub.f32 %v90, %v1643
    %1645 = vmatpush1.msra.mxu0 %v1644
    %v1646 = vand.u32 %v93, 4294901760
    %v1647 = vsub.f32 %v93, %v1646
    %1648 = vmatprep.subr.mxu0 %v1647
    %v1649 = vand.u32 %v92, 4294901760
    %v1650 = vsub.f32 %v92, %v1649
    %1651 = vmatpush1.msra.mxu0 %v1650
    %v1652 = vand.u32 %v95, 4294901760
    %v1653 = vsub.f32 %v95, %v1652
    %1654 = vmatprep.subr.mxu0 %v1653
    %v1655 = vand.u32 %v94, 4294901760
    %v1656 = vsub.f32 %v94, %v1655
    %1657 = vmatpush1.msra.mxu0 %v1656
    %v1658 = vand.u32 %v97, 4294901760
    %v1659 = vsub.f32 %v97, %v1658
    %1660 = vmatprep.subr.mxu0 %v1659
    %v1661 = vand.u32 %v96, 4294901760
    %v1662 = vsub.f32 %v96, %v1661
    %1663 = vmatpush1.msra.mxu0 %v1662
    %v1664 = vand.u32 %v99, 4294901760
    %v1665 = vsub.f32 %v99, %v1664
    %1666 = vmatprep.subr.mxu0 %v1665
    %v1667 = vand.u32 %v98, 4294901760
    %v1668 = vsub.f32 %v98, %v1667
    %1669 = vmatpush1.msra.mxu0 %v1668
    %v1670 = vand.u32 %v101, 4294901760
    %v1671 = vsub.f32 %v101, %v1670
    %1672 = vmatprep.subr.mxu0 %v1671
    %v1673 = vand.u32 %v100, 4294901760
    %v1674 = vsub.f32 %v100, %v1673
    %1675 = vmatpush1.msra.mxu0 %v1674
    %v1676 = vand.u32 %v103, 4294901760
    %v1677 = vsub.f32 %v103, %v1676
    %1678 = vmatprep.subr.mxu0 %v1677
    %v1679 = vand.u32 %v102, 4294901760
    %v1680 = vsub.f32 %v102, %v1679
    %1681 = vmatpush1.msra.mxu0 %v1680
    %v1682 = vand.u32 %v105, 4294901760
    %v1683 = vsub.f32 %v105, %v1682
    %1684 = vmatprep.subr.mxu0 %v1683
    %v1685 = vand.u32 %v104, 4294901760
    %v1686 = vsub.f32 %v104, %v1685
    %1687 = vmatpush1.msra.mxu0 %v1686
    %v1688 = vand.u32 %v107, 4294901760
    %v1689 = vsub.f32 %v107, %v1688
    %1690 = vmatprep.subr.mxu0 %v1689
    %v1691 = vand.u32 %v106, 4294901760
    %v1692 = vsub.f32 %v106, %v1691
    %1693 = vmatpush1.msra.mxu0 %v1692
    %v1694 = vand.u32 %v109, 4294901760
    %v1695 = vsub.f32 %v109, %v1694
    %1696 = vmatprep.subr.mxu0 %v1695
    %v1697 = vand.u32 %v108, 4294901760
    %v1698 = vsub.f32 %v108, %v1697
    %1699 = vmatpush1.msra.mxu0 %v1698
    %v1700 = vand.u32 %v111, 4294901760
    %v1701 = vsub.f32 %v111, %v1700
    %1702 = vmatprep.subr.mxu0 %v1701
    %v1703 = vand.u32 %v110, 4294901760
    %v1704 = vsub.f32 %v110, %v1703
    %1705 = vmatpush1.msra.mxu0 %v1704
    %v1706 = vand.u32 %v113, 4294901760
    %v1707 = vsub.f32 %v113, %v1706
    %1708 = vmatprep.subr.mxu0 %v1707
    %v1709 = vand.u32 %v112, 4294901760
    %v1710 = vsub.f32 %v112, %v1709
    %1711 = vmatpush1.msra.mxu0 %v1710
    %v1712 = vand.u32 %v115, 4294901760
    %v1713 = vsub.f32 %v115, %v1712
    %1714 = vmatprep.subr.mxu0 %v1713
    %v1715 = vand.u32 %v114, 4294901760
    %v1716 = vsub.f32 %v114, %v1715
    %1717 = vmatpush1.msra.mxu0 %v1716
    %v1718 = vand.u32 %v117, 4294901760
    %v1719 = vsub.f32 %v117, %v1718
    %1720 = vmatprep.subr.mxu0 %v1719
    %v1721 = vand.u32 %v116, 4294901760
    %v1722 = vsub.f32 %v116, %v1721
    %1723 = vmatpush1.msra.mxu0 %v1722
    %v1724 = vand.u32 %v119, 4294901760
    %v1725 = vsub.f32 %v119, %v1724
    %1726 = vmatprep.subr.mxu0 %v1725
    %v1727 = vand.u32 %v118, 4294901760
    %v1728 = vsub.f32 %v118, %v1727
    %1729 = vmatpush1.msra.mxu0 %v1728
    %v1730 = vand.u32 %v121, 4294901760
    %v1731 = vsub.f32 %v121, %v1730
    %1732 = vmatprep.subr.mxu0 %v1731
    %v1733 = vand.u32 %v120, 4294901760
    %v1734 = vsub.f32 %v120, %v1733
    %1735 = vmatpush1.msra.mxu0 %v1734
    %v1736 = vand.u32 %v123, 4294901760
    %v1737 = vsub.f32 %v123, %v1736
    %1738 = vmatprep.subr.mxu0 %v1737
    %v1739 = vand.u32 %v122, 4294901760
    %v1740 = vsub.f32 %v122, %v1739
    %1741 = vmatpush1.msra.mxu0 %v1740
    %v1742 = vand.u32 %v59, 4294901760
    %v1743 = vsub.f32 %v59, %v1742
    %1744 = vmatprep.mubr.f32.mxu0 %v1743
    %v1745 = vand.u32 %v58, 4294901760
    %v1746 = vsub.f32 %v58, %v1745
    %1747 = vmatmul.mubr.f32.gmra.mrb[0].mxu0 %v1746
    %v1748 = vpop.f32.mrb[0].mxu0
    %v1749 = vadd.f32 %v1546, %v1748
    %v1750 = vpop.f32.mrb[0].mxu0
    %v1751 = vadd.f32 %v1548, %v1750
    %1752 = vdwg.mxu0
    %v1753 = vand.u32 %v61, 4294901760
    %1754 = vmatprep.subr.mxu0 %v1753
    %v1755 = vand.u32 %v60, 4294901760
    %1756 = vmatpush1.msra.mxu0 %v1755
    %v1757 = vand.u32 %v63, 4294901760
    %1758 = vmatprep.subr.mxu0 %v1757
    %v1759 = vand.u32 %v62, 4294901760
    %1760 = vmatpush1.msra.mxu0 %v1759
    %v1761 = vand.u32 %v65, 4294901760
    %1762 = vmatprep.subr.mxu0 %v1761
    %v1763 = vand.u32 %v64, 4294901760
    %1764 = vmatpush1.msra.mxu0 %v1763
    %v1765 = vand.u32 %v67, 4294901760
    %1766 = vmatprep.subr.mxu0 %v1765
    %v1767 = vand.u32 %v66, 4294901760
    %1768 = vmatpush1.msra.mxu0 %v1767
    %v1769 = vand.u32 %v69, 4294901760
    %1770 = vmatprep.subr.mxu0 %v1769
    %v1771 = vand.u32 %v68, 4294901760
    %1772 = vmatpush1.msra.mxu0 %v1771
    %v1773 = vand.u32 %v71, 4294901760
    %1774 = vmatprep.subr.mxu0 %v1773
    %v1775 = vand.u32 %v70, 4294901760
    %1776 = vmatpush1.msra.mxu0 %v1775
    %v1777 = vand.u32 %v73, 4294901760
    %1778 = vmatprep.subr.mxu0 %v1777
    %v1779 = vand.u32 %v72, 4294901760
    %1780 = vmatpush1.msra.mxu0 %v1779
    %v1781 = vand.u32 %v75, 4294901760
    %1782 = vmatprep.subr.mxu0 %v1781
    %v1783 = vand.u32 %v74, 4294901760
    %1784 = vmatpush1.msra.mxu0 %v1783
    %v1785 = vand.u32 %v77, 4294901760
    %1786 = vmatprep.subr.mxu0 %v1785
    %v1787 = vand.u32 %v76, 4294901760
    %1788 = vmatpush1.msra.mxu0 %v1787
    %v1789 = vand.u32 %v79, 4294901760
    %1790 = vmatprep.subr.mxu0 %v1789
    %v1791 = vand.u32 %v78, 4294901760
    %1792 = vmatpush1.msra.mxu0 %v1791
    %v1793 = vand.u32 %v81, 4294901760
    %1794 = vmatprep.subr.mxu0 %v1793
    %v1795 = vand.u32 %v80, 4294901760
    %1796 = vmatpush1.msra.mxu0 %v1795
    %v1797 = vand.u32 %v83, 4294901760
    %1798 = vmatprep.subr.mxu0 %v1797
    %v1799 = vand.u32 %v82, 4294901760
    %1800 = vmatpush1.msra.mxu0 %v1799
    %v1801 = vand.u32 %v85, 4294901760
    %1802 = vmatprep.subr.mxu0 %v1801
    %v1803 = vand.u32 %v84, 4294901760
    %1804 = vmatpush1.msra.mxu0 %v1803
    %v1805 = vand.u32 %v87, 4294901760
    %1806 = vmatprep.subr.mxu0 %v1805
    %v1807 = vand.u32 %v86, 4294901760
    %1808 = vmatpush1.msra.mxu0 %v1807
    %v1809 = vand.u32 %v89, 4294901760
    %1810 = vmatprep.subr.mxu0 %v1809
    %v1811 = vand.u32 %v88, 4294901760
    %1812 = vmatpush1.msra.mxu0 %v1811
    %v1813 = vand.u32 %v91, 4294901760
    %1814 = vmatprep.subr.mxu0 %v1813
    %v1815 = vand.u32 %v90, 4294901760
    %1816 = vmatpush1.msra.mxu0 %v1815
    %v1817 = vand.u32 %v93, 4294901760
    %1818 = vmatprep.subr.mxu0 %v1817
    %v1819 = vand.u32 %v92, 4294901760
    %1820 = vmatpush1.msra.mxu0 %v1819
    %v1821 = vand.u32 %v95, 4294901760
    %1822 = vmatprep.subr.mxu0 %v1821
    %v1823 = vand.u32 %v94, 4294901760
    %1824 = vmatpush1.msra.mxu0 %v1823
    %v1825 = vand.u32 %v97, 4294901760
    %1826 = vmatprep.subr.mxu0 %v1825
    %v1827 = vand.u32 %v96, 4294901760
    %1828 = vmatpush1.msra.mxu0 %v1827
    %v1829 = vand.u32 %v99, 4294901760
    %1830 = vmatprep.subr.mxu0 %v1829
    %v1831 = vand.u32 %v98, 4294901760
    %1832 = vmatpush1.msra.mxu0 %v1831
    %v1833 = vand.u32 %v101, 4294901760
    %1834 = vmatprep.subr.mxu0 %v1833
    %v1835 = vand.u32 %v100, 4294901760
    %1836 = vmatpush1.msra.mxu0 %v1835
    %v1837 = vand.u32 %v103, 4294901760
    %1838 = vmatprep.subr.mxu0 %v1837
    %v1839 = vand.u32 %v102, 4294901760
    %1840 = vmatpush1.msra.mxu0 %v1839
    %v1841 = vand.u32 %v105, 4294901760
    %1842 = vmatprep.subr.mxu0 %v1841
    %v1843 = vand.u32 %v104, 4294901760
    %1844 = vmatpush1.msra.mxu0 %v1843
    %v1845 = vand.u32 %v107, 4294901760
    %1846 = vmatprep.subr.mxu0 %v1845
    %v1847 = vand.u32 %v106, 4294901760
    %1848 = vmatpush1.msra.mxu0 %v1847
    %v1849 = vand.u32 %v109, 4294901760
    %1850 = vmatprep.subr.mxu0 %v1849
    %v1851 = vand.u32 %v108, 4294901760
    %1852 = vmatpush1.msra.mxu0 %v1851
    %v1853 = vand.u32 %v111, 4294901760
    %1854 = vmatprep.subr.mxu0 %v1853
    %v1855 = vand.u32 %v110, 4294901760
    %1856 = vmatpush1.msra.mxu0 %v1855
    %v1857 = vand.u32 %v113, 4294901760
    %1858 = vmatprep.subr.mxu0 %v1857
    %v1859 = vand.u32 %v112, 4294901760
    %1860 = vmatpush1.msra.mxu0 %v1859
    %v1861 = vand.u32 %v115, 4294901760
    %1862 = vmatprep.subr.mxu0 %v1861
    %v1863 = vand.u32 %v114, 4294901760
    %1864 = vmatpush1.msra.mxu0 %v1863
    %v1865 = vand.u32 %v117, 4294901760
    %1866 = vmatprep.subr.mxu0 %v1865
    %v1867 = vand.u32 %v116, 4294901760
    %1868 = vmatpush1.msra.mxu0 %v1867
    %v1869 = vand.u32 %v119, 4294901760
    %1870 = vmatprep.subr.mxu0 %v1869
    %v1871 = vand.u32 %v118, 4294901760
    %1872 = vmatpush1.msra.mxu0 %v1871
    %v1873 = vand.u32 %v121, 4294901760
    %1874 = vmatprep.subr.mxu0 %v1873
    %v1875 = vand.u32 %v120, 4294901760
    %1876 = vmatpush1.msra.mxu0 %v1875
    %v1877 = vand.u32 %v123, 4294901760
    %1878 = vmatprep.subr.mxu0 %v1877
    %v1879 = vand.u32 %v122, 4294901760
    %1880 = vmatpush1.msra.mxu0 %v1879
    %v1881 = vand.u32 %v59, 4294901760
    %v1882 = vsub.f32 %v59, %v1881
    %v1883 = vand.u32 %v1882, 4294901760
    %1884 = vmatprep.mubr.f32.mxu0 %v1883
    %v1885 = vand.u32 %v58, 4294901760
    %v1886 = vsub.f32 %v58, %v1885
    %v1887 = vand.u32 %v1886, 4294901760
    %1888 = vmatmul.mubr.f32.gmra.mrb[0].mxu0 %v1887
    %v1889 = vpop.f32.mrb[0].mxu0
    %v1890 = vadd.f32 %v1749, %v1889
    %v1891 = vpop.f32.mrb[0].mxu0
    %v1892 = vadd.f32 %v1751, %v1891
    %1893 = vdwg.mxu0
    %v1894 = vand.u32 %v61, 4294901760
    %v1895 = vsub.f32 %v61, %v1894
    %v1896 = vand.u32 %v1895, 4294901760
    %1897 = vmatprep.subr.mxu0 %v1896
    %v1898 = vand.u32 %v60, 4294901760
    %v1899 = vsub.f32 %v60, %v1898
    %v1900 = vand.u32 %v1899, 4294901760
    %1901 = vmatpush1.msra.mxu0 %v1900
    %v1902 = vand.u32 %v63, 4294901760
    %v1903 = vsub.f32 %v63, %v1902
    %v1904 = vand.u32 %v1903, 4294901760
    %1905 = vmatprep.subr.mxu0 %v1904
    %v1906 = vand.u32 %v62, 4294901760
    %v1907 = vsub.f32 %v62, %v1906
    %v1908 = vand.u32 %v1907, 4294901760
    %1909 = vmatpush1.msra.mxu0 %v1908
    %v1910 = vand.u32 %v65, 4294901760
    %v1911 = vsub.f32 %v65, %v1910
    %v1912 = vand.u32 %v1911, 4294901760
    %1913 = vmatprep.subr.mxu0 %v1912
    %v1914 = vand.u32 %v64, 4294901760
    %v1915 = vsub.f32 %v64, %v1914
    %v1916 = vand.u32 %v1915, 4294901760
    %1917 = vmatpush1.msra.mxu0 %v1916
    %v1918 = vand.u32 %v67, 4294901760
    %v1919 = vsub.f32 %v67, %v1918
    %v1920 = vand.u32 %v1919, 4294901760
    %1921 = vmatprep.subr.mxu0 %v1920
    %v1922 = vand.u32 %v66, 4294901760
    %v1923 = vsub.f32 %v66, %v1922
    %v1924 = vand.u32 %v1923, 4294901760
    %1925 = vmatpush1.msra.mxu0 %v1924
    %v1926 = vand.u32 %v69, 4294901760
    %v1927 = vsub.f32 %v69, %v1926
    %v1928 = vand.u32 %v1927, 4294901760
    %1929 = vmatprep.subr.mxu0 %v1928
    %v1930 = vand.u32 %v68, 4294901760
    %v1931 = vsub.f32 %v68, %v1930
    %v1932 = vand.u32 %v1931, 4294901760
    %1933 = vmatpush1.msra.mxu0 %v1932
    %v1934 = vand.u32 %v71, 4294901760
    %v1935 = vsub.f32 %v71, %v1934
    %v1936 = vand.u32 %v1935, 4294901760
    %1937 = vmatprep.subr.mxu0 %v1936
    %v1938 = vand.u32 %v70, 4294901760
    %v1939 = vsub.f32 %v70, %v1938
    %v1940 = vand.u32 %v1939, 4294901760
    %1941 = vmatpush1.msra.mxu0 %v1940
    %v1942 = vand.u32 %v73, 4294901760
    %v1943 = vsub.f32 %v73, %v1942
    %v1944 = vand.u32 %v1943, 4294901760
    %1945 = vmatprep.subr.mxu0 %v1944
    %v1946 = vand.u32 %v72, 4294901760
    %v1947 = vsub.f32 %v72, %v1946
    %v1948 = vand.u32 %v1947, 4294901760
    %1949 = vmatpush1.msra.mxu0 %v1948
    %v1950 = vand.u32 %v75, 4294901760
    %v1951 = vsub.f32 %v75, %v1950
    %v1952 = vand.u32 %v1951, 4294901760
    %1953 = vmatprep.subr.mxu0 %v1952
    %v1954 = vand.u32 %v74, 4294901760
    %v1955 = vsub.f32 %v74, %v1954
    %v1956 = vand.u32 %v1955, 4294901760
    %1957 = vmatpush1.msra.mxu0 %v1956
    %v1958 = vand.u32 %v77, 4294901760
    %v1959 = vsub.f32 %v77, %v1958
    %v1960 = vand.u32 %v1959, 4294901760
    %1961 = vmatprep.subr.mxu0 %v1960
    %v1962 = vand.u32 %v76, 4294901760
    %v1963 = vsub.f32 %v76, %v1962
    %v1964 = vand.u32 %v1963, 4294901760
    %1965 = vmatpush1.msra.mxu0 %v1964
    %v1966 = vand.u32 %v79, 4294901760
    %v1967 = vsub.f32 %v79, %v1966
    %v1968 = vand.u32 %v1967, 4294901760
    %1969 = vmatprep.subr.mxu0 %v1968
    %v1970 = vand.u32 %v78, 4294901760
    %v1971 = vsub.f32 %v78, %v1970
    %v1972 = vand.u32 %v1971, 4294901760
    %1973 = vmatpush1.msra.mxu0 %v1972
    %v1974 = vand.u32 %v81, 4294901760
    %v1975 = vsub.f32 %v81, %v1974
    %v1976 = vand.u32 %v1975, 4294901760
    %1977 = vmatprep.subr.mxu0 %v1976
    %v1978 = vand.u32 %v80, 4294901760
    %v1979 = vsub.f32 %v80, %v1978
    %v1980 = vand.u32 %v1979, 4294901760
    %1981 = vmatpush1.msra.mxu0 %v1980
    %v1982 = vand.u32 %v83, 4294901760
    %v1983 = vsub.f32 %v83, %v1982
    %v1984 = vand.u32 %v1983, 4294901760
    %1985 = vmatprep.subr.mxu0 %v1984
    %v1986 = vand.u32 %v82, 4294901760
    %v1987 = vsub.f32 %v82, %v1986
    %v1988 = vand.u32 %v1987, 4294901760
    %1989 = vmatpush1.msra.mxu0 %v1988
    %v1990 = vand.u32 %v85, 4294901760
    %v1991 = vsub.f32 %v85, %v1990
    %v1992 = vand.u32 %v1991, 4294901760
    %1993 = vmatprep.subr.mxu0 %v1992
    %v1994 = vand.u32 %v84, 4294901760
    %v1995 = vsub.f32 %v84, %v1994
    %v1996 = vand.u32 %v1995, 4294901760
    %1997 = vmatpush1.msra.mxu0 %v1996
    %v1998 = vand.u32 %v87, 4294901760
    %v1999 = vsub.f32 %v87, %v1998
    %v2000 = vand.u32 %v1999, 4294901760
    %2001 = vmatprep.subr.mxu0 %v2000
    %v2002 = vand.u32 %v86, 4294901760
    %v2003 = vsub.f32 %v86, %v2002
    %v2004 = vand.u32 %v2003, 4294901760
    %2005 = vmatpush1.msra.mxu0 %v2004
    %v2006 = vand.u32 %v89, 4294901760
    %v2007 = vsub.f32 %v89, %v2006
    %v2008 = vand.u32 %v2007, 4294901760
    %2009 = vmatprep.subr.mxu0 %v2008
    %v2010 = vand.u32 %v88, 4294901760
    %v2011 = vsub.f32 %v88, %v2010
    %v2012 = vand.u32 %v2011, 4294901760
    %2013 = vmatpush1.msra.mxu0 %v2012
    %v2014 = vand.u32 %v91, 4294901760
    %v2015 = vsub.f32 %v91, %v2014
    %v2016 = vand.u32 %v2015, 4294901760
    %2017 = vmatprep.subr.mxu0 %v2016
    %v2018 = vand.u32 %v90, 4294901760
    %v2019 = vsub.f32 %v90, %v2018
    %v2020 = vand.u32 %v2019, 4294901760
    %2021 = vmatpush1.msra.mxu0 %v2020
    %v2022 = vand.u32 %v93, 4294901760
    %v2023 = vsub.f32 %v93, %v2022
    %v2024 = vand.u32 %v2023, 4294901760
    %2025 = vmatprep.subr.mxu0 %v2024
    %v2026 = vand.u32 %v92, 4294901760
    %v2027 = vsub.f32 %v92, %v2026
    %v2028 = vand.u32 %v2027, 4294901760
    %2029 = vmatpush1.msra.mxu0 %v2028
    %v2030 = vand.u32 %v95, 4294901760
    %v2031 = vsub.f32 %v95, %v2030
    %v2032 = vand.u32 %v2031, 4294901760
    %2033 = vmatprep.subr.mxu0 %v2032
    %v2034 = vand.u32 %v94, 4294901760
    %v2035 = vsub.f32 %v94, %v2034
    %v2036 = vand.u32 %v2035, 4294901760
    %2037 = vmatpush1.msra.mxu0 %v2036
    %v2038 = vand.u32 %v97, 4294901760
    %v2039 = vsub.f32 %v97, %v2038
    %v2040 = vand.u32 %v2039, 4294901760
    %2041 = vmatprep.subr.mxu0 %v2040
    %v2042 = vand.u32 %v96, 4294901760
    %v2043 = vsub.f32 %v96, %v2042
    %v2044 = vand.u32 %v2043, 4294901760
    %2045 = vmatpush1.msra.mxu0 %v2044
    %v2046 = vand.u32 %v99, 4294901760
    %v2047 = vsub.f32 %v99, %v2046
    %v2048 = vand.u32 %v2047, 4294901760
    %2049 = vmatprep.subr.mxu0 %v2048
    %v2050 = vand.u32 %v98, 4294901760
    %v2051 = vsub.f32 %v98, %v2050
    %v2052 = vand.u32 %v2051, 4294901760
    %2053 = vmatpush1.msra.mxu0 %v2052
    %v2054 = vand.u32 %v101, 4294901760
    %v2055 = vsub.f32 %v101, %v2054
    %v2056 = vand.u32 %v2055, 4294901760
    %2057 = vmatprep.subr.mxu0 %v2056
    %v2058 = vand.u32 %v100, 4294901760
    %v2059 = vsub.f32 %v100, %v2058
    %v2060 = vand.u32 %v2059, 4294901760
    %2061 = vmatpush1.msra.mxu0 %v2060
    %v2062 = vand.u32 %v103, 4294901760
    %v2063 = vsub.f32 %v103, %v2062
    %v2064 = vand.u32 %v2063, 4294901760
    %2065 = vmatprep.subr.mxu0 %v2064
    %v2066 = vand.u32 %v102, 4294901760
    %v2067 = vsub.f32 %v102, %v2066
    %v2068 = vand.u32 %v2067, 4294901760
    %2069 = vmatpush1.msra.mxu0 %v2068
    %v2070 = vand.u32 %v105, 4294901760
    %v2071 = vsub.f32 %v105, %v2070
    %v2072 = vand.u32 %v2071, 4294901760
    %2073 = vmatprep.subr.mxu0 %v2072
    %v2074 = vand.u32 %v104, 4294901760
    %v2075 = vsub.f32 %v104, %v2074
    %v2076 = vand.u32 %v2075, 4294901760
    %2077 = vmatpush1.msra.mxu0 %v2076
    %v2078 = vand.u32 %v107, 4294901760
    %v2079 = vsub.f32 %v107, %v2078
    %v2080 = vand.u32 %v2079, 4294901760
    %2081 = vmatprep.subr.mxu0 %v2080
    %v2082 = vand.u32 %v106, 4294901760
    %v2083 = vsub.f32 %v106, %v2082
    %v2084 = vand.u32 %v2083, 4294901760
    %2085 = vmatpush1.msra.mxu0 %v2084
    %v2086 = vand.u32 %v109, 4294901760
    %v2087 = vsub.f32 %v109, %v2086
    %v2088 = vand.u32 %v2087, 4294901760
    %2089 = vmatprep.subr.mxu0 %v2088
    %v2090 = vand.u32 %v108, 4294901760
    %v2091 = vsub.f32 %v108, %v2090
    %v2092 = vand.u32 %v2091, 4294901760
    %2093 = vmatpush1.msra.mxu0 %v2092
    %v2094 = vand.u32 %v111, 4294901760
    %v2095 = vsub.f32 %v111, %v2094
    %v2096 = vand.u32 %v2095, 4294901760
    %2097 = vmatprep.subr.mxu0 %v2096
    %v2098 = vand.u32 %v110, 4294901760
    %v2099 = vsub.f32 %v110, %v2098
    %v2100 = vand.u32 %v2099, 4294901760
    %2101 = vmatpush1.msra.mxu0 %v2100
    %v2102 = vand.u32 %v113, 4294901760
    %v2103 = vsub.f32 %v113, %v2102
    %v2104 = vand.u32 %v2103, 4294901760
    %2105 = vmatprep.subr.mxu0 %v2104
    %v2106 = vand.u32 %v112, 4294901760
    %v2107 = vsub.f32 %v112, %v2106
    %v2108 = vand.u32 %v2107, 4294901760
    %2109 = vmatpush1.msra.mxu0 %v2108
    %v2110 = vand.u32 %v115, 4294901760
    %v2111 = vsub.f32 %v115, %v2110
    %v2112 = vand.u32 %v2111, 4294901760
    %2113 = vmatprep.subr.mxu0 %v2112
    %v2114 = vand.u32 %v114, 4294901760
    %v2115 = vsub.f32 %v114, %v2114
    %v2116 = vand.u32 %v2115, 4294901760
    %2117 = vmatpush1.msra.mxu0 %v2116
    %v2118 = vand.u32 %v117, 4294901760
    %v2119 = vsub.f32 %v117, %v2118
    %v2120 = vand.u32 %v2119, 4294901760
    %2121 = vmatprep.subr.mxu0 %v2120
    %v2122 = vand.u32 %v116, 4294901760
    %v2123 = vsub.f32 %v116, %v2122
    %v2124 = vand.u32 %v2123, 4294901760
    %2125 = vmatpush1.msra.mxu0 %v2124
    %v2126 = vand.u32 %v119, 4294901760
    %v2127 = vsub.f32 %v119, %v2126
    %v2128 = vand.u32 %v2127, 4294901760
    %2129 = vmatprep.subr.mxu0 %v2128
    %v2130 = vand.u32 %v118, 4294901760
    %v2131 = vsub.f32 %v118, %v2130
    %v2132 = vand.u32 %v2131, 4294901760
    %2133 = vmatpush1.msra.mxu0 %v2132
    %v2134 = vand.u32 %v121, 4294901760
    %v2135 = vsub.f32 %v121, %v2134
    %v2136 = vand.u32 %v2135, 4294901760
    %2137 = vmatprep.subr.mxu0 %v2136
    %v2138 = vand.u32 %v120, 4294901760
    %v2139 = vsub.f32 %v120, %v2138
    %v2140 = vand.u32 %v2139, 4294901760
    %2141 = vmatpush1.msra.mxu0 %v2140
    %v2142 = vand.u32 %v123, 4294901760
    %v2143 = vsub.f32 %v123, %v2142
    %v2144 = vand.u32 %v2143, 4294901760
    %2145 = vmatprep.subr.mxu0 %v2144
    %v2146 = vand.u32 %v122, 4294901760
    %v2147 = vsub.f32 %v122, %v2146
    %v2148 = vand.u32 %v2147, 4294901760
    %2149 = vmatpush1.msra.mxu0 %v2148
    %v2150 = vand.u32 %v59, 4294901760
    %2151 = vmatprep.mubr.f32.mxu0 %v2150
    %v2152 = vand.u32 %v58, 4294901760
    %2153 = vmatmul.mubr.f32.gmra.mrb[0].mxu0 %v2152
    %v2154 = vpop.f32.mrb[0].mxu0
    %v2155 = vadd.f32 %v1890, %v2154
    %v2156 = vpop.f32.mrb[0].mxu0
    %v2157 = vadd.f32 %v1892, %v2156
    %2158 = vdwg.mxu0
    %v2159 = vand.u32 %v61, 4294901760
    %2160 = vmatprep.subr.mxu0 %v2159
    %v2161 = vand.u32 %v60, 4294901760
    %2162 = vmatpush1.msra.mxu0 %v2161
    %v2163 = vand.u32 %v63, 4294901760
    %2164 = vmatprep.subr.mxu0 %v2163
    %v2165 = vand.u32 %v62, 4294901760
    %2166 = vmatpush1.msra.mxu0 %v2165
    %v2167 = vand.u32 %v65, 4294901760
    %2168 = vmatprep.subr.mxu0 %v2167
    %v2169 = vand.u32 %v64, 4294901760
    %2170 = vmatpush1.msra.mxu0 %v2169
    %v2171 = vand.u32 %v67, 4294901760
    %2172 = vmatprep.subr.mxu0 %v2171
    %v2173 = vand.u32 %v66, 4294901760
    %2174 = vmatpush1.msra.mxu0 %v2173
    %v2175 = vand.u32 %v69, 4294901760
    %2176 = vmatprep.subr.mxu0 %v2175
    %v2177 = vand.u32 %v68, 4294901760
    %2178 = vmatpush1.msra.mxu0 %v2177
    %v2179 = vand.u32 %v71, 4294901760
    %2180 = vmatprep.subr.mxu0 %v2179
    %v2181 = vand.u32 %v70, 4294901760
    %2182 = vmatpush1.msra.mxu0 %v2181
    %v2183 = vand.u32 %v73, 4294901760
    %2184 = vmatprep.subr.mxu0 %v2183
    %v2185 = vand.u32 %v72, 4294901760
    %2186 = vmatpush1.msra.mxu0 %v2185
    %v2187 = vand.u32 %v75, 4294901760
    %2188 = vmatprep.subr.mxu0 %v2187
    %v2189 = vand.u32 %v74, 4294901760
    %2190 = vmatpush1.msra.mxu0 %v2189
    %v2191 = vand.u32 %v77, 4294901760
    %2192 = vmatprep.subr.mxu0 %v2191
    %v2193 = vand.u32 %v76, 4294901760
    %2194 = vmatpush1.msra.mxu0 %v2193
    %v2195 = vand.u32 %v79, 4294901760
    %2196 = vmatprep.subr.mxu0 %v2195
    %v2197 = vand.u32 %v78, 4294901760
    %2198 = vmatpush1.msra.mxu0 %v2197
    %v2199 = vand.u32 %v81, 4294901760
    %2200 = vmatprep.subr.mxu0 %v2199
    %v2201 = vand.u32 %v80, 4294901760
    %2202 = vmatpush1.msra.mxu0 %v2201
    %v2203 = vand.u32 %v83, 4294901760
    %2204 = vmatprep.subr.mxu0 %v2203
    %v2205 = vand.u32 %v82, 4294901760
    %2206 = vmatpush1.msra.mxu0 %v2205
    %v2207 = vand.u32 %v85, 4294901760
    %2208 = vmatprep.subr.mxu0 %v2207
    %v2209 = vand.u32 %v84, 4294901760
    %2210 = vmatpush1.msra.mxu0 %v2209
    %v2211 = vand.u32 %v87, 4294901760
    %2212 = vmatprep.subr.mxu0 %v2211
    %v2213 = vand.u32 %v86, 4294901760
    %2214 = vmatpush1.msra.mxu0 %v2213
    %v2215 = vand.u32 %v89, 4294901760
    %2216 = vmatprep.subr.mxu0 %v2215
    %v2217 = vand.u32 %v88, 4294901760
    %2218 = vmatpush1.msra.mxu0 %v2217
    %v2219 = vand.u32 %v91, 4294901760
    %2220 = vmatprep.subr.mxu0 %v2219
    %v2221 = vand.u32 %v90, 4294901760
    %2222 = vmatpush1.msra.mxu0 %v2221
    %v2223 = vand.u32 %v93, 4294901760
    %2224 = vmatprep.subr.mxu0 %v2223
    %v2225 = vand.u32 %v92, 4294901760
    %2226 = vmatpush1.msra.mxu0 %v2225
    %v2227 = vand.u32 %v95, 4294901760
    %2228 = vmatprep.subr.mxu0 %v2227
    %v2229 = vand.u32 %v94, 4294901760
    %2230 = vmatpush1.msra.mxu0 %v2229
    %v2231 = vand.u32 %v97, 4294901760
    %2232 = vmatprep.subr.mxu0 %v2231
    %v2233 = vand.u32 %v96, 4294901760
    %2234 = vmatpush1.msra.mxu0 %v2233
    %v2235 = vand.u32 %v99, 4294901760
    %2236 = vmatprep.subr.mxu0 %v2235
    %v2237 = vand.u32 %v98, 4294901760
    %2238 = vmatpush1.msra.mxu0 %v2237
    %v2239 = vand.u32 %v101, 4294901760
    %2240 = vmatprep.subr.mxu0 %v2239
    %v2241 = vand.u32 %v100, 4294901760
    %2242 = vmatpush1.msra.mxu0 %v2241
    %v2243 = vand.u32 %v103, 4294901760
    %2244 = vmatprep.subr.mxu0 %v2243
    %v2245 = vand.u32 %v102, 4294901760
    %2246 = vmatpush1.msra.mxu0 %v2245
    %v2247 = vand.u32 %v105, 4294901760
    %2248 = vmatprep.subr.mxu0 %v2247
    %v2249 = vand.u32 %v104, 4294901760
    %2250 = vmatpush1.msra.mxu0 %v2249
    %v2251 = vand.u32 %v107, 4294901760
    %2252 = vmatprep.subr.mxu0 %v2251
    %v2253 = vand.u32 %v106, 4294901760
    %2254 = vmatpush1.msra.mxu0 %v2253
    %v2255 = vand.u32 %v109, 4294901760
    %2256 = vmatprep.subr.mxu0 %v2255
    %v2257 = vand.u32 %v108, 4294901760
    %2258 = vmatpush1.msra.mxu0 %v2257
    %v2259 = vand.u32 %v111, 4294901760
    %2260 = vmatprep.subr.mxu0 %v2259
    %v2261 = vand.u32 %v110, 4294901760
    %2262 = vmatpush1.msra.mxu0 %v2261
    %v2263 = vand.u32 %v113, 4294901760
    %2264 = vmatprep.subr.mxu0 %v2263
    %v2265 = vand.u32 %v112, 4294901760
    %2266 = vmatpush1.msra.mxu0 %v2265
    %v2267 = vand.u32 %v115, 4294901760
    %2268 = vmatprep.subr.mxu0 %v2267
    %v2269 = vand.u32 %v114, 4294901760
    %2270 = vmatpush1.msra.mxu0 %v2269
    %v2271 = vand.u32 %v117, 4294901760
    %2272 = vmatprep.subr.mxu0 %v2271
    %v2273 = vand.u32 %v116, 4294901760
    %2274 = vmatpush1.msra.mxu0 %v2273
    %v2275 = vand.u32 %v119, 4294901760
    %2276 = vmatprep.subr.mxu0 %v2275
    %v2277 = vand.u32 %v118, 4294901760
    %2278 = vmatpush1.msra.mxu0 %v2277
    %v2279 = vand.u32 %v121, 4294901760
    %2280 = vmatprep.subr.mxu0 %v2279
    %v2281 = vand.u32 %v120, 4294901760
    %2282 = vmatpush1.msra.mxu0 %v2281
    %v2283 = vand.u32 %v123, 4294901760
    %2284 = vmatprep.subr.mxu0 %v2283
    %v2285 = vand.u32 %v122, 4294901760
    %2286 = vmatpush1.msra.mxu0 %v2285
    %v2287 = vand.u32 %v59, 4294901760
    %2288 = vmatprep.mubr.f32.mxu0 %v2287
    %v2289 = vand.u32 %v58, 4294901760
    %2290 = vmatmul.mubr.f32.gmra.mrb[0].mxu0 %v2289
    %v2291 = vpop.f32.mrb[0].mxu0
    %v2292 = vadd.f32 %v2155, %v2291
    %v2293 = vpop.f32.mrb[0].mxu0
    %v2294 = vadd.f32 %v2157, %v2293
    %2295 = vdwg.mxu0
    %2296 = vst [vmem:[#allocation8] sm:$0xff] %v2292
    %2297 = vst [vmem:[#allocation8 + $0x8] sm:$0xff] %v2294
    %v2298 = vld [vmem:[#allocation2] sm:$0xff]
    %v2299 = vld [vmem:[#allocation2 + $0x8] sm:$0xff]
    %s2300 = scalar_lea.vmem [#allocation7], 768
    %v2301 = vld [vmem:[%s2300] sm:$0xff]
    %v2302 = vld [vmem:[%s2300 + $0x8] sm:$0xff]
    %v2303 = vld [vmem:[%s2300 + $0x10] sm:$0xff]
    %v2304 = vld [vmem:[%s2300 + $0x18] sm:$0xff]
    %v2305 = vld [vmem:[%s2300 + $0x20] sm:$0xff]
    %v2306 = vld [vmem:[%s2300 + $0x28] sm:$0xff]
    %v2307 = vld [vmem:[%s2300 + $0x30] sm:$0xff]
    %v2308 = vld [vmem:[%s2300 + $0x38] sm:$0xff]
    %v2309 = vld [vmem:[%s2300 + $0x40] sm:$0xff]
    %v2310 = vld [vmem:[%s2300 + $0x48] sm:$0xff]
    %v2311 = vld [vmem:[%s2300 + $0x50] sm:$0xff]
    %v2312 = vld [vmem:[%s2300 + $0x58] sm:$0xff]
    %v2313 = vld [vmem:[%s2300 + $0x60] sm:$0xff]
    %v2314 = vld [vmem:[%s2300 + $0x68] sm:$0xff]
    %v2315 = vld [vmem:[%s2300 + $0x70] sm:$0xff]
    %v2316 = vld [vmem:[%s2300 + $0x78] sm:$0xff]
    %v2317 = vld [vmem:[%s2300 + $0x80] sm:$0xff]
    %v2318 = vld [vmem:[%s2300 + $0x88] sm:$0xff]
    %v2319 = vld [vmem:[%s2300 + $0x90] sm:$0xff]
    %v2320 = vld [vmem:[%s2300 + $0x98] sm:$0xff]
    %v2321 = vld [vmem:[%s2300 + $0xa0] sm:$0xff]
    %v2322 = vld [vmem:[%s2300 + $0xa8] sm:$0xff]
    %v2323 = vld [vmem:[%s2300 + $0xb0] sm:$0xff]
    %v2324 = vld [vmem:[%s2300 + $0xb8] sm:$0xff]
    %v2325 = vld [vmem:[%s2300 + $0xc0] sm:$0xff]
    %v2326 = vld [vmem:[%s2300 + $0xc8] sm:$0xff]
    %v2327 = vld [vmem:[%s2300 + $0xd0] sm:$0xff]
    %v2328 = vld [vmem:[%s2300 + $0xd8] sm:$0xff]
    %v2329 = vld [vmem:[%s2300 + $0xe0] sm:$0xff]
    %v2330 = vld [vmem:[%s2300 + $0xe8] sm:$0xff]
    %v2331 = vld [vmem:[%s2300 + $0xf0] sm:$0xff]
    %v2332 = vld [vmem:[%s2300 + $0xf8] sm:$0xff]
    %v2333 = vld [vmem:[%s2300 + $0x100] sm:$0xff]
    %v2334 = vld [vmem:[%s2300 + $0x108] sm:$0xff]
    %v2335 = vld [vmem:[%s2300 + $0x110] sm:$0xff]
    %v2336 = vld [vmem:[%s2300 + $0x118] sm:$0xff]
    %v2337 = vld [vmem:[%s2300 + $0x120] sm:$0xff]
    %v2338 = vld [vmem:[%s2300 + $0x128] sm:$0xff]
    %v2339 = vld [vmem:[%s2300 + $0x130] sm:$0xff]
    %v2340 = vld [vmem:[%s2300 + $0x138] sm:$0xff]
    %v2341 = vld [vmem:[%s2300 + $0x140] sm:$0xff]
    %v2342 = vld [vmem:[%s2300 + $0x148] sm:$0xff]
    %v2343 = vld [vmem:[%s2300 + $0x150] sm:$0xff]
    %v2344 = vld [vmem:[%s2300 + $0x158] sm:$0xff]
    %v2345 = vld [vmem:[%s2300 + $0x160] sm:$0xff]
    %v2346 = vld [vmem:[%s2300 + $0x168] sm:$0xff]
    %v2347 = vld [vmem:[%s2300 + $0x170] sm:$0xff]
    %v2348 = vld [vmem:[%s2300 + $0x178] sm:$0xff]
    %v2349 = vld [vmem:[%s2300 + $0x180] sm:$0xff]
    %v2350 = vld [vmem:[%s2300 + $0x188] sm:$0xff]
    %v2351 = vld [vmem:[%s2300 + $0x190] sm:$0xff]
    %v2352 = vld [vmem:[%s2300 + $0x198] sm:$0xff]
    %v2353 = vld [vmem:[%s2300 + $0x1a0] sm:$0xff]
    %v2354 = vld [vmem:[%s2300 + $0x1a8] sm:$0xff]
    %v2355 = vld [vmem:[%s2300 + $0x1b0] sm:$0xff]
    %v2356 = vld [vmem:[%s2300 + $0x1b8] sm:$0xff]
    %v2357 = vld [vmem:[%s2300 + $0x1c0] sm:$0xff]
    %v2358 = vld [vmem:[%s2300 + $0x1c8] sm:$0xff]
    %v2359 = vld [vmem:[%s2300 + $0x1d0] sm:$0xff]
    %v2360 = vld [vmem:[%s2300 + $0x1d8] sm:$0xff]
    %v2361 = vld [vmem:[%s2300 + $0x1e0] sm:$0xff]
    %v2362 = vld [vmem:[%s2300 + $0x1e8] sm:$0xff]
    %v2363 = vld [vmem:[%s2300 + $0x1f0] sm:$0xff]
    %v2364 = vld [vmem:[%s2300 + $0x1f8] sm:$0xff]
    %v2365 = vld [vmem:[#allocation5] sm:$0xff]
    %v2366 = vld [vmem:[%s2300 + $0x200] sm:$0xff]
    %v2367 = vld [vmem:[%s2300 + $0x208] sm:$0xff]
    %v2368 = vld [vmem:[%s2300 + $0x210] sm:$0xff]
    %v2369 = vld [vmem:[%s2300 + $0x218] sm:$0xff]
    %v2370 = vld [vmem:[%s2300 + $0x220] sm:$0xff]
    %v2371 = vld [vmem:[%s2300 + $0x228] sm:$0xff]
    %v2372 = vld [vmem:[%s2300 + $0x230] sm:$0xff]
    %v2373 = vld [vmem:[%s2300 + $0x238] sm:$0xff]
    %v2374 = vld [vmem:[%s2300 + $0x240] sm:$0xff]
    %v2375 = vld [vmem:[%s2300 + $0x248] sm:$0xff]
    %v2376 = vld [vmem:[%s2300 + $0x250] sm:$0xff]
    %v2377 = vld [vmem:[%s2300 + $0x258] sm:$0xff]
    %v2378 = vld [vmem:[%s2300 + $0x260] sm:$0xff]
    %v2379 = vld [vmem:[%s2300 + $0x268] sm:$0xff]
    %v2380 = vld [vmem:[%s2300 + $0x270] sm:$0xff]
    %v2381 = vld [vmem:[%s2300 + $0x278] sm:$0xff]
    %v2382 = vld [vmem:[%s2300 + $0x280] sm:$0xff]
    %v2383 = vld [vmem:[%s2300 + $0x288] sm:$0xff]
    %v2384 = vld [vmem:[%s2300 + $0x290] sm:$0xff]
    %v2385 = vld [vmem:[%s2300 + $0x298] sm:$0xff]
    %v2386 = vld [vmem:[%s2300 + $0x2a0] sm:$0xff]
    %v2387 = vld [vmem:[%s2300 + $0x2a8] sm:$0xff]
    %v2388 = vld [vmem:[%s2300 + $0x2b0] sm:$0xff]
    %v2389 = vld [vmem:[%s2300 + $0x2b8] sm:$0xff]
    %v2390 = vld [vmem:[%s2300 + $0x2c0] sm:$0xff]
    %v2391 = vld [vmem:[%s2300 + $0x2c8] sm:$0xff]
    %v2392 = vld [vmem:[%s2300 + $0x2d0] sm:$0xff]
    %v2393 = vld [vmem:[%s2300 + $0x2d8] sm:$0xff]
    %v2394 = vld [vmem:[%s2300 + $0x2e0] sm:$0xff]
    %v2395 = vld [vmem:[%s2300 + $0x2e8] sm:$0xff]
    %v2396 = vld [vmem:[%s2300 + $0x2f0] sm:$0xff]
    %v2397 = vld [vmem:[%s2300 + $0x2f8] sm:$0xff]
    %v2398 = vand.u32 %v2367, 4294901760
    %2399 = vmatprep.subr.mxu0 %v2398
    %v2400 = vand.u32 %v2366, 4294901760
    %2401 = vmatpush1.msra.mxu0 %v2400
    %v2402 = vand.u32 %v2369, 4294901760
    %2403 = vmatprep.subr.mxu0 %v2402
    %v2404 = vand.u32 %v2368, 4294901760
    %2405 = vmatpush1.msra.mxu0 %v2404
    %v2406 = vand.u32 %v2371, 4294901760
    %2407 = vmatprep.subr.mxu0 %v2406
    %v2408 = vand.u32 %v2370, 4294901760
    %2409 = vmatpush1.msra.mxu0 %v2408
    %v2410 = vand.u32 %v2373, 4294901760
    %2411 = vmatprep.subr.mxu0 %v2410
    %v2412 = vand.u32 %v2372, 4294901760
    %2413 = vmatpush1.msra.mxu0 %v2412
    %v2414 = vand.u32 %v2375, 4294901760
    %2415 = vmatprep.subr.mxu0 %v2414
    %v2416 = vand.u32 %v2374, 4294901760
    %2417 = vmatpush1.msra.mxu0 %v2416
    %v2418 = vand.u32 %v2377, 4294901760
    %2419 = vmatprep.subr.mxu0 %v2418
    %v2420 = vand.u32 %v2376, 4294901760
    %2421 = vmatpush1.msra.mxu0 %v2420
    %v2422 = vand.u32 %v2379, 4294901760
    %2423 = vmatprep.subr.mxu0 %v2422
    %v2424 = vand.u32 %v2378, 4294901760
    %2425 = vmatpush1.msra.mxu0 %v2424
    %v2426 = vand.u32 %v2381, 4294901760
    %2427 = vmatprep.subr.mxu0 %v2426
    %v2428 = vand.u32 %v2380, 4294901760
    %2429 = vmatpush1.msra.mxu0 %v2428
    %v2430 = vand.u32 %v2383, 4294901760
    %2431 = vmatprep.subr.mxu0 %v2430
    %v2432 = vand.u32 %v2382, 4294901760
    %2433 = vmatpush1.msra.mxu0 %v2432
    %v2434 = vand.u32 %v2385, 4294901760
    %2435 = vmatprep.subr.mxu0 %v2434
    %v2436 = vand.u32 %v2384, 4294901760
    %2437 = vmatpush1.msra.mxu0 %v2436
    %v2438 = vand.u32 %v2387, 4294901760
    %2439 = vmatprep.subr.mxu0 %v2438
    %v2440 = vand.u32 %v2386, 4294901760
    %2441 = vmatpush1.msra.mxu0 %v2440
    %v2442 = vand.u32 %v2389, 4294901760
    %2443 = vmatprep.subr.mxu0 %v2442
    %v2444 = vand.u32 %v2388, 4294901760
    %2445 = vmatpush1.msra.mxu0 %v2444
    %v2446 = vand.u32 %v2391, 4294901760
    %2447 = vmatprep.subr.mxu0 %v2446
    %v2448 = vand.u32 %v2390, 4294901760
    %2449 = vmatpush1.msra.mxu0 %v2448
    %v2450 = vand.u32 %v2393, 4294901760
    %2451 = vmatprep.subr.mxu0 %v2450
    %v2452 = vand.u32 %v2392, 4294901760
    %2453 = vmatpush1.msra.mxu0 %v2452
    %v2454 = vand.u32 %v2395, 4294901760
    %2455 = vmatprep.subr.mxu0 %v2454
    %v2456 = vand.u32 %v2394, 4294901760
    %2457 = vmatpush1.msra.mxu0 %v2456
    %v2458 = vand.u32 %v2397, 4294901760
    %2459 = vmatprep.subr.mxu0 %v2458
    %v2460 = vand.u32 %v2396, 4294901760
    %2461 = vmatpush1.msra.mxu0 %v2460
    %2462 = vmatprep.subr.mxu0 0.0
    %2463 = vmatpush1.msra.mxu0 0.0
    %2464 = vmatprep.subr.mxu0 0.0
    %2465 = vmatpush1.msra.mxu0 0.0
    %2466 = vmatprep.subr.mxu0 0.0
    %2467 = vmatpush1.msra.mxu0 0.0
    %2468 = vmatprep.subr.mxu0 0.0
    %2469 = vmatpush1.msra.mxu0 0.0
    %2470 = vmatprep.subr.mxu0 0.0
    %2471 = vmatpush1.msra.mxu0 0.0
    %2472 = vmatprep.subr.mxu0 0.0
    %2473 = vmatpush1.msra.mxu0 0.0
    %2474 = vmatprep.subr.mxu0 0.0
    %2475 = vmatpush1.msra.mxu0 0.0
    %2476 = vmatprep.subr.mxu0 0.0
    %2477 = vmatpush1.msra.mxu0 0.0
    %2478 = vmatprep.subr.mxu0 0.0
    %2479 = vmatpush1.msra.mxu0 0.0
    %2480 = vmatprep.subr.mxu0 0.0
    %2481 = vmatpush1.msra.mxu0 0.0
    %2482 = vmatprep.subr.mxu0 0.0
    %2483 = vmatpush1.msra.mxu0 0.0
    %2484 = vmatprep.subr.mxu0 0.0
    %2485 = vmatpush1.msra.mxu0 0.0
    %2486 = vmatprep.subr.mxu0 0.0
    %2487 = vmatpush1.msra.mxu0 0.0
    %2488 = vmatprep.subr.mxu0 0.0
    %2489 = vmatpush1.msra.mxu0 0.0
    %2490 = vmatprep.subr.mxu0 0.0
    %2491 = vmatpush1.msra.mxu0 0.0
    %2492 = vmatprep.subr.mxu0 0.0
    %2493 = vmatpush1.msra.mxu0 0.0
    %2494 = vmatprep.mubr.f32.mxu0 0.0
    %v2495 = vand.u32 %v2365, 4294901760
    %v2496 = vsub.f32 %v2365, %v2495
    %v2497 = vand.u32 %v2496, 4294901760
    %v2498 = vsub.f32 %v2496, %v2497
    %v2499 = vand.u32 %v2498, 4294901760
    %2500 = vmatmul.mubr.f32.gmra.mrb[0].mxu0 %v2499
    %v2501 = vpop.f32.mrb[0].mxu0
    %v2502 = vadd.f32 0.0, %v2501
    %v2503 = vpop.f32.mrb[0].mxu0
    %v2504 = vadd.f32 0.0, %v2503
    %2505 = vdwg.mxu0
    %v2506 = vand.u32 %v2367, 4294901760
    %v2507 = vsub.f32 %v2367, %v2506
    %v2508 = vand.u32 %v2507, 4294901760
    %v2509 = vsub.f32 %v2507, %v2508
    %v2510 = vand.u32 %v2509, 4294901760
    %2511 = vmatprep.subr.mxu0 %v2510
    %v2512 = vand.u32 %v2366, 4294901760
    %v2513 = vsub.f32 %v2366, %v2512
    %v2514 = vand.u32 %v2513, 4294901760
    %v2515 = vsub.f32 %v2513, %v2514
    %v2516 = vand.u32 %v2515, 4294901760
    %2517 = vmatpush1.msra.mxu0 %v2516
    %v2518 = vand.u32 %v2369, 4294901760
    %v2519 = vsub.f32 %v2369, %v2518
    %v2520 = vand.u32 %v2519, 4294901760
    %v2521 = vsub.f32 %v2519, %v2520
    %v2522 = vand.u32 %v2521, 4294901760
    %2523 = vmatprep.subr.mxu0 %v2522
    %v2524 = vand.u32 %v2368, 4294901760
    %v2525 = vsub.f32 %v2368, %v2524
    %v2526 = vand.u32 %v2525, 4294901760
    %v2527 = vsub.f32 %v2525, %v2526
    %v2528 = vand.u32 %v2527, 4294901760
    %2529 = vmatpush1.msra.mxu0 %v2528
    %v2530 = vand.u32 %v2371, 4294901760
    %v2531 = vsub.f32 %v2371, %v2530
    %v2532 = vand.u32 %v2531, 4294901760
    %v2533 = vsub.f32 %v2531, %v2532
    %v2534 = vand.u32 %v2533, 4294901760
    %2535 = vmatprep.subr.mxu0 %v2534
    %v2536 = vand.u32 %v2370, 4294901760
    %v2537 = vsub.f32 %v2370, %v2536
    %v2538 = vand.u32 %v2537, 4294901760
    %v2539 = vsub.f32 %v2537, %v2538
    %v2540 = vand.u32 %v2539, 4294901760
    %2541 = vmatpush1.msra.mxu0 %v2540
    %v2542 = vand.u32 %v2373, 4294901760
    %v2543 = vsub.f32 %v2373, %v2542
    %v2544 = vand.u32 %v2543, 4294901760
    %v2545 = vsub.f32 %v2543, %v2544
    %v2546 = vand.u32 %v2545, 4294901760
    %2547 = vmatprep.subr.mxu0 %v2546
    %v2548 = vand.u32 %v2372, 4294901760
    %v2549 = vsub.f32 %v2372, %v2548
    %v2550 = vand.u32 %v2549, 4294901760
    %v2551 = vsub.f32 %v2549, %v2550
    %v2552 = vand.u32 %v2551, 4294901760
    %2553 = vmatpush1.msra.mxu0 %v2552
    %v2554 = vand.u32 %v2375, 4294901760
    %v2555 = vsub.f32 %v2375, %v2554
    %v2556 = vand.u32 %v2555, 4294901760
    %v2557 = vsub.f32 %v2555, %v2556
    %v2558 = vand.u32 %v2557, 4294901760
    %2559 = vmatprep.subr.mxu0 %v2558
    %v2560 = vand.u32 %v2374, 4294901760
    %v2561 = vsub.f32 %v2374, %v2560
    %v2562 = vand.u32 %v2561, 4294901760
    %v2563 = vsub.f32 %v2561, %v2562
    %v2564 = vand.u32 %v2563, 4294901760
    %2565 = vmatpush1.msra.mxu0 %v2564
    %v2566 = vand.u32 %v2377, 4294901760
    %v2567 = vsub.f32 %v2377, %v2566
    %v2568 = vand.u32 %v2567, 4294901760
    %v2569 = vsub.f32 %v2567, %v2568
    %v2570 = vand.u32 %v2569, 4294901760
    %2571 = vmatprep.subr.mxu0 %v2570
    %v2572 = vand.u32 %v2376, 4294901760
    %v2573 = vsub.f32 %v2376, %v2572
    %v2574 = vand.u32 %v2573, 4294901760
    %v2575 = vsub.f32 %v2573, %v2574
    %v2576 = vand.u32 %v2575, 4294901760
    %2577 = vmatpush1.msra.mxu0 %v2576
    %v2578 = vand.u32 %v2379, 4294901760
    %v2579 = vsub.f32 %v2379, %v2578
    %v2580 = vand.u32 %v2579, 4294901760
    %v2581 = vsub.f32 %v2579, %v2580
    %v2582 = vand.u32 %v2581, 4294901760
    %2583 = vmatprep.subr.mxu0 %v2582
    %v2584 = vand.u32 %v2378, 4294901760
    %v2585 = vsub.f32 %v2378, %v2584
    %v2586 = vand.u32 %v2585, 4294901760
    %v2587 = vsub.f32 %v2585, %v2586
    %v2588 = vand.u32 %v2587, 4294901760
    %2589 = vmatpush1.msra.mxu0 %v2588
    %v2590 = vand.u32 %v2381, 4294901760
    %v2591 = vsub.f32 %v2381, %v2590
    %v2592 = vand.u32 %v2591, 4294901760
    %v2593 = vsub.f32 %v2591, %v2592
    %v2594 = vand.u32 %v2593, 4294901760
    %2595 = vmatprep.subr.mxu0 %v2594
    %v2596 = vand.u32 %v2380, 4294901760
    %v2597 = vsub.f32 %v2380, %v2596
    %v2598 = vand.u32 %v2597, 4294901760
    %v2599 = vsub.f32 %v2597, %v2598
    %v2600 = vand.u32 %v2599, 4294901760
    %2601 = vmatpush1.msra.mxu0 %v2600
    %v2602 = vand.u32 %v2383, 4294901760
    %v2603 = vsub.f32 %v2383, %v2602
    %v2604 = vand.u32 %v2603, 4294901760
    %v2605 = vsub.f32 %v2603, %v2604
    %v2606 = vand.u32 %v2605, 4294901760
    %2607 = vmatprep.subr.mxu0 %v2606
    %v2608 = vand.u32 %v2382, 4294901760
    %v2609 = vsub.f32 %v2382, %v2608
    %v2610 = vand.u32 %v2609, 4294901760
    %v2611 = vsub.f32 %v2609, %v2610
    %v2612 = vand.u32 %v2611, 4294901760
    %2613 = vmatpush1.msra.mxu0 %v2612
    %v2614 = vand.u32 %v2385, 4294901760
    %v2615 = vsub.f32 %v2385, %v2614
    %v2616 = vand.u32 %v2615, 4294901760
    %v2617 = vsub.f32 %v2615, %v2616
    %v2618 = vand.u32 %v2617, 4294901760
    %2619 = vmatprep.subr.mxu0 %v2618
    %v2620 = vand.u32 %v2384, 4294901760
    %v2621 = vsub.f32 %v2384, %v2620
    %v2622 = vand.u32 %v2621, 4294901760
    %v2623 = vsub.f32 %v2621, %v2622
    %v2624 = vand.u32 %v2623, 4294901760
    %2625 = vmatpush1.msra.mxu0 %v2624
    %v2626 = vand.u32 %v2387, 4294901760
    %v2627 = vsub.f32 %v2387, %v2626
    %v2628 = vand.u32 %v2627, 4294901760
    %v2629 = vsub.f32 %v2627, %v2628
    %v2630 = vand.u32 %v2629, 4294901760
    %2631 = vmatprep.subr.mxu0 %v2630
    %v2632 = vand.u32 %v2386, 4294901760
    %v2633 = vsub.f32 %v2386, %v2632
    %v2634 = vand.u32 %v2633, 4294901760
    %v2635 = vsub.f32 %v2633, %v2634
    %v2636 = vand.u32 %v2635, 4294901760
    %2637 = vmatpush1.msra.mxu0 %v2636
    %v2638 = vand.u32 %v2389, 4294901760
    %v2639 = vsub.f32 %v2389, %v2638
    %v2640 = vand.u32 %v2639, 4294901760
    %v2641 = vsub.f32 %v2639, %v2640
    %v2642 = vand.u32 %v2641, 4294901760
    %2643 = vmatprep.subr.mxu0 %v2642
    %v2644 = vand.u32 %v2388, 4294901760
    %v2645 = vsub.f32 %v2388, %v2644
    %v2646 = vand.u32 %v2645, 4294901760
    %v2647 = vsub.f32 %v2645, %v2646
    %v2648 = vand.u32 %v2647, 4294901760
    %2649 = vmatpush1.msra.mxu0 %v2648
    %v2650 = vand.u32 %v2391, 4294901760
    %v2651 = vsub.f32 %v2391, %v2650
    %v2652 = vand.u32 %v2651, 4294901760
    %v2653 = vsub.f32 %v2651, %v2652
    %v2654 = vand.u32 %v2653, 4294901760
    %2655 = vmatprep.subr.mxu0 %v2654
    %v2656 = vand.u32 %v2390, 4294901760
    %v2657 = vsub.f32 %v2390, %v2656
    %v2658 = vand.u32 %v2657, 4294901760
    %v2659 = vsub.f32 %v2657, %v2658
    %v2660 = vand.u32 %v2659, 4294901760
    %2661 = vmatpush1.msra.mxu0 %v2660
    %v2662 = vand.u32 %v2393, 4294901760
    %v2663 = vsub.f32 %v2393, %v2662
    %v2664 = vand.u32 %v2663, 4294901760
    %v2665 = vsub.f32 %v2663, %v2664
    %v2666 = vand.u32 %v2665, 4294901760
    %2667 = vmatprep.subr.mxu0 %v2666
    %v2668 = vand.u32 %v2392, 4294901760
    %v2669 = vsub.f32 %v2392, %v2668
    %v2670 = vand.u32 %v2669, 4294901760
    %v2671 = vsub.f32 %v2669, %v2670
    %v2672 = vand.u32 %v2671, 4294901760
    %2673 = vmatpush1.msra.mxu0 %v2672
    %v2674 = vand.u32 %v2395, 4294901760
    %v2675 = vsub.f32 %v2395, %v2674
    %v2676 = vand.u32 %v2675, 4294901760
    %v2677 = vsub.f32 %v2675, %v2676
    %v2678 = vand.u32 %v2677, 4294901760
    %2679 = vmatprep.subr.mxu0 %v2678
    %v2680 = vand.u32 %v2394, 4294901760
    %v2681 = vsub.f32 %v2394, %v2680
    %v2682 = vand.u32 %v2681, 4294901760
    %v2683 = vsub.f32 %v2681, %v2682
    %v2684 = vand.u32 %v2683, 4294901760
    %2685 = vmatpush1.msra.mxu0 %v2684
    %v2686 = vand.u32 %v2397, 4294901760
    %v2687 = vsub.f32 %v2397, %v2686
    %v2688 = vand.u32 %v2687, 4294901760
    %v2689 = vsub.f32 %v2687, %v2688
    %v2690 = vand.u32 %v2689, 4294901760
    %2691 = vmatprep.subr.mxu0 %v2690
    %v2692 = vand.u32 %v2396, 4294901760
    %v2693 = vsub.f32 %v2396, %v2692
    %v2694 = vand.u32 %v2693, 4294901760
    %v2695 = vsub.f32 %v2693, %v2694
    %v2696 = vand.u32 %v2695, 4294901760
    %2697 = vmatpush1.msra.mxu0 %v2696
    %2698 = vmatprep.subr.mxu0 0.0
    %2699 = vmatpush1.msra.mxu0 0.0
    %2700 = vmatprep.subr.mxu0 0.0
    %2701 = vmatpush1.msra.mxu0 0.0
    %2702 = vmatprep.subr.mxu0 0.0
    %2703 = vmatpush1.msra.mxu0 0.0
    %2704 = vmatprep.subr.mxu0 0.0
    %2705 = vmatpush1.msra.mxu0 0.0
    %2706 = vmatprep.subr.mxu0 0.0
    %2707 = vmatpush1.msra.mxu0 0.0
    %2708 = vmatprep.subr.mxu0 0.0
    %2709 = vmatpush1.msra.mxu0 0.0
    %2710 = vmatprep.subr.mxu0 0.0
    %2711 = vmatpush1.msra.mxu0 0.0
    %2712 = vmatprep.subr.mxu0 0.0
    %2713 = vmatpush1.msra.mxu0 0.0
    %2714 = vmatprep.subr.mxu0 0.0
    %2715 = vmatpush1.msra.mxu0 0.0
    %2716 = vmatprep.subr.mxu0 0.0
    %2717 = vmatpush1.msra.mxu0 0.0
    %2718 = vmatprep.subr.mxu0 0.0
    %2719 = vmatpush1.msra.mxu0 0.0
    %2720 = vmatprep.subr.mxu0 0.0
    %2721 = vmatpush1.msra.mxu0 0.0
    %2722 = vmatprep.subr.mxu0 0.0
    %2723 = vmatpush1.msra.mxu0 0.0
    %2724 = vmatprep.subr.mxu0 0.0
    %2725 = vmatpush1.msra.mxu0 0.0
    %2726 = vmatprep.subr.mxu0 0.0
    %2727 = vmatpush1.msra.mxu0 0.0
    %2728 = vmatprep.subr.mxu0 0.0
    %2729 = vmatpush1.msra.mxu0 0.0
    %2730 = vmatprep.mubr.f32.mxu0 0.0
    %v2731 = vand.u32 %v2365, 4294901760
    %2732 = vmatmul.mubr.f32.gmra.mrb[0].mxu0 %v2731
    %v2733 = vpop.f32.mrb[0].mxu0
    %v2734 = vadd.f32 %v2502, %v2733
    %v2735 = vpop.f32.mrb[0].mxu0
    %v2736 = vadd.f32 %v2504, %v2735
    %2737 = vdwg.mxu0
    %v2738 = vand.u32 %v2367, 4294901760
    %v2739 = vsub.f32 %v2367, %v2738
    %2740 = vmatprep.subr.mxu0 %v2739
    %v2741 = vand.u32 %v2366, 4294901760
    %v2742 = vsub.f32 %v2366, %v2741
    %2743 = vmatpush1.msra.mxu0 %v2742
    %v2744 = vand.u32 %v2369, 4294901760
    %v2745 = vsub.f32 %v2369, %v2744
    %2746 = vmatprep.subr.mxu0 %v2745
    %v2747 = vand.u32 %v2368, 4294901760
    %v2748 = vsub.f32 %v2368, %v2747
    %2749 = vmatpush1.msra.mxu0 %v2748
    %v2750 = vand.u32 %v2371, 4294901760
    %v2751 = vsub.f32 %v2371, %v2750
    %2752 = vmatprep.subr.mxu0 %v2751
    %v2753 = vand.u32 %v2370, 4294901760
    %v2754 = vsub.f32 %v2370, %v2753
    %2755 = vmatpush1.msra.mxu0 %v2754
    %v2756 = vand.u32 %v2373, 4294901760
    %v2757 = vsub.f32 %v2373, %v2756
    %2758 = vmatprep.subr.mxu0 %v2757
    %v2759 = vand.u32 %v2372, 4294901760
    %v2760 = vsub.f32 %v2372, %v2759
    %2761 = vmatpush1.msra.mxu0 %v2760
    %v2762 = vand.u32 %v2375, 4294901760
    %v2763 = vsub.f32 %v2375, %v2762
    %2764 = vmatprep.subr.mxu0 %v2763
    %v2765 = vand.u32 %v2374, 4294901760
    %v2766 = vsub.f32 %v2374, %v2765
    %2767 = vmatpush1.msra.mxu0 %v2766
    %v2768 = vand.u32 %v2377, 4294901760
    %v2769 = vsub.f32 %v2377, %v2768
    %2770 = vmatprep.subr.mxu0 %v2769
    %v2771 = vand.u32 %v2376, 4294901760
    %v2772 = vsub.f32 %v2376, %v2771
    %2773 = vmatpush1.msra.mxu0 %v2772
    %v2774 = vand.u32 %v2379, 4294901760
    %v2775 = vsub.f32 %v2379, %v2774
    %2776 = vmatprep.subr.mxu0 %v2775
    %v2777 = vand.u32 %v2378, 4294901760
    %v2778 = vsub.f32 %v2378, %v2777
    %2779 = vmatpush1.msra.mxu0 %v2778
    %v2780 = vand.u32 %v2381, 4294901760
    %v2781 = vsub.f32 %v2381, %v2780
    %2782 = vmatprep.subr.mxu0 %v2781
    %v2783 = vand.u32 %v2380, 4294901760
    %v2784 = vsub.f32 %v2380, %v2783
    %2785 = vmatpush1.msra.mxu0 %v2784
    %v2786 = vand.u32 %v2383, 4294901760
    %v2787 = vsub.f32 %v2383, %v2786
    %2788 = vmatprep.subr.mxu0 %v2787
    %v2789 = vand.u32 %v2382, 4294901760
    %v2790 = vsub.f32 %v2382, %v2789
    %2791 = vmatpush1.msra.mxu0 %v2790
    %v2792 = vand.u32 %v2385, 4294901760
    %v2793 = vsub.f32 %v2385, %v2792
    %2794 = vmatprep.subr.mxu0 %v2793
    %v2795 = vand.u32 %v2384, 4294901760
    %v2796 = vsub.f32 %v2384, %v2795
    %2797 = vmatpush1.msra.mxu0 %v2796
    %v2798 = vand.u32 %v2387, 4294901760
    %v2799 = vsub.f32 %v2387, %v2798
    %2800 = vmatprep.subr.mxu0 %v2799
    %v2801 = vand.u32 %v2386, 4294901760
    %v2802 = vsub.f32 %v2386, %v2801
    %2803 = vmatpush1.msra.mxu0 %v2802
    %v2804 = vand.u32 %v2389, 4294901760
    %v2805 = vsub.f32 %v2389, %v2804
    %2806 = vmatprep.subr.mxu0 %v2805
    %v2807 = vand.u32 %v2388, 4294901760
    %v2808 = vsub.f32 %v2388, %v2807
    %2809 = vmatpush1.msra.mxu0 %v2808
    %v2810 = vand.u32 %v2391, 4294901760
    %v2811 = vsub.f32 %v2391, %v2810
    %2812 = vmatprep.subr.mxu0 %v2811
    %v2813 = vand.u32 %v2390, 4294901760
    %v2814 = vsub.f32 %v2390, %v2813
    %2815 = vmatpush1.msra.mxu0 %v2814
    %v2816 = vand.u32 %v2393, 4294901760
    %v2817 = vsub.f32 %v2393, %v2816
    %2818 = vmatprep.subr.mxu0 %v2817
    %v2819 = vand.u32 %v2392, 4294901760
    %v2820 = vsub.f32 %v2392, %v2819
    %2821 = vmatpush1.msra.mxu0 %v2820
    %v2822 = vand.u32 %v2395, 4294901760
    %v2823 = vsub.f32 %v2395, %v2822
    %2824 = vmatprep.subr.mxu0 %v2823
    %v2825 = vand.u32 %v2394, 4294901760
    %v2826 = vsub.f32 %v2394, %v2825
    %2827 = vmatpush1.msra.mxu0 %v2826
    %v2828 = vand.u32 %v2397, 4294901760
    %v2829 = vsub.f32 %v2397, %v2828
    %2830 = vmatprep.subr.mxu0 %v2829
    %v2831 = vand.u32 %v2396, 4294901760
    %v2832 = vsub.f32 %v2396, %v2831
    %2833 = vmatpush1.msra.mxu0 %v2832
    %2834 = vmatprep.subr.mxu0 0.0
    %2835 = vmatpush1.msra.mxu0 0.0
    %2836 = vmatprep.subr.mxu0 0.0
    %2837 = vmatpush1.msra.mxu0 0.0
    %2838 = vmatprep.subr.mxu0 0.0
    %2839 = vmatpush1.msra.mxu0 0.0
    %2840 = vmatprep.subr.mxu0 0.0
    %2841 = vmatpush1.msra.mxu0 0.0
    %2842 = vmatprep.subr.mxu0 0.0
    %2843 = vmatpush1.msra.mxu0 0.0
    %2844 = vmatprep.subr.mxu0 0.0
    %2845 = vmatpush1.msra.mxu0 0.0
    %2846 = vmatprep.subr.mxu0 0.0
    %2847 = vmatpush1.msra.mxu0 0.0
    %2848 = vmatprep.subr.mxu0 0.0
    %2849 = vmatpush1.msra.mxu0 0.0
    %2850 = vmatprep.subr.mxu0 0.0
    %2851 = vmatpush1.msra.mxu0 0.0
    %2852 = vmatprep.subr.mxu0 0.0
    %2853 = vmatpush1.msra.mxu0 0.0
    %2854 = vmatprep.subr.mxu0 0.0
    %2855 = vmatpush1.msra.mxu0 0.0
    %2856 = vmatprep.subr.mxu0 0.0
    %2857 = vmatpush1.msra.mxu0 0.0
    %2858 = vmatprep.subr.mxu0 0.0
    %2859 = vmatpush1.msra.mxu0 0.0
    %2860 = vmatprep.subr.mxu0 0.0
    %2861 = vmatpush1.msra.mxu0 0.0
    %2862 = vmatprep.subr.mxu0 0.0
    %2863 = vmatpush1.msra.mxu0 0.0
    %2864 = vmatprep.subr.mxu0 0.0
    %2865 = vmatpush1.msra.mxu0 0.0
    %2866 = vmatprep.mubr.f32.mxu0 0.0
    %v2867 = vand.u32 %v2365, 4294901760
    %v2868 = vsub.f32 %v2365, %v2867
    %2869 = vmatmul.mubr.f32.gmra.mrb[0].mxu0 %v2868
    %v2870 = vpop.f32.mrb[0].mxu0
    %v2871 = vadd.f32 %v2734, %v2870
    %v2872 = vpop.f32.mrb[0].mxu0
    %v2873 = vadd.f32 %v2736, %v2872
    %2874 = vdwg.mxu0
    %v2875 = vand.u32 %v2367, 4294901760
    %2876 = vmatprep.subr.mxu0 %v2875
    %v2877 = vand.u32 %v2366, 4294901760
    %2878 = vmatpush1.msra.mxu0 %v2877
    %v2879 = vand.u32 %v2369, 4294901760
    %2880 = vmatprep.subr.mxu0 %v2879
    %v2881 = vand.u32 %v2368, 4294901760
    %2882 = vmatpush1.msra.mxu0 %v2881
    %v2883 = vand.u32 %v2371, 4294901760
    %2884 = vmatprep.subr.mxu0 %v2883
    %v2885 = vand.u32 %v2370, 4294901760
    %2886 = vmatpush1.msra.mxu0 %v2885
    %v2887 = vand.u32 %v2373, 4294901760
    %2888 = vmatprep.subr.mxu0 %v2887
    %v2889 = vand.u32 %v2372, 4294901760
    %2890 = vmatpush1.msra.mxu0 %v2889
    %v2891 = vand.u32 %v2375, 4294901760
    %2892 = vmatprep.subr.mxu0 %v2891
    %v2893 = vand.u32 %v2374, 4294901760
    %2894 = vmatpush1.msra.mxu0 %v2893
    %v2895 = vand.u32 %v2377, 4294901760
    %2896 = vmatprep.subr.mxu0 %v2895
    %v2897 = vand.u32 %v2376, 4294901760
    %2898 = vmatpush1.msra.mxu0 %v2897
    %v2899 = vand.u32 %v2379, 4294901760
    %2900 = vmatprep.subr.mxu0 %v2899
    %v2901 = vand.u32 %v2378, 4294901760
    %2902 = vmatpush1.msra.mxu0 %v2901
    %v2903 = vand.u32 %v2381, 4294901760
    %2904 = vmatprep.subr.mxu0 %v2903
    %v2905 = vand.u32 %v2380, 4294901760
    %2906 = vmatpush1.msra.mxu0 %v2905
    %v2907 = vand.u32 %v2383, 4294901760
    %2908 = vmatprep.subr.mxu0 %v2907
    %v2909 = vand.u32 %v2382, 4294901760
    %2910 = vmatpush1.msra.mxu0 %v2909
    %v2911 = vand.u32 %v2385, 4294901760
    %2912 = vmatprep.subr.mxu0 %v2911
    %v2913 = vand.u32 %v2384, 4294901760
    %2914 = vmatpush1.msra.mxu0 %v2913
    %v2915 = vand.u32 %v2387, 4294901760
    %2916 = vmatprep.subr.mxu0 %v2915
    %v2917 = vand.u32 %v2386, 4294901760
    %2918 = vmatpush1.msra.mxu0 %v2917
    %v2919 = vand.u32 %v2389, 4294901760
    %2920 = vmatprep.subr.mxu0 %v2919
    %v2921 = vand.u32 %v2388, 4294901760
    %2922 = vmatpush1.msra.mxu0 %v2921
    %v2923 = vand.u32 %v2391, 4294901760
    %2924 = vmatprep.subr.mxu0 %v2923
    %v2925 = vand.u32 %v2390, 4294901760
    %2926 = vmatpush1.msra.mxu0 %v2925
    %v2927 = vand.u32 %v2393, 4294901760
    %2928 = vmatprep.subr.mxu0 %v2927
    %v2929 = vand.u32 %v2392, 4294901760
    %2930 = vmatpush1.msra.mxu0 %v2929
    %v2931 = vand.u32 %v2395, 4294901760
    %2932 = vmatprep.subr.mxu0 %v2931
    %v2933 = vand.u32 %v2394, 4294901760
    %2934 = vmatpush1.msra.mxu0 %v2933
    %v2935 = vand.u32 %v2397, 4294901760
    %2936 = vmatprep.subr.mxu0 %v2935
    %v2937 = vand.u32 %v2396, 4294901760
    %2938 = vmatpush1.msra.mxu0 %v2937
    %2939 = vmatprep.subr.mxu0 0.0
    %2940 = vmatpush1.msra.mxu0 0.0
    %2941 = vmatprep.subr.mxu0 0.0
    %2942 = vmatpush1.msra.mxu0 0.0
    %2943 = vmatprep.subr.mxu0 0.0
    %2944 = vmatpush1.msra.mxu0 0.0
    %2945 = vmatprep.subr.mxu0 0.0
    %2946 = vmatpush1.msra.mxu0 0.0
    %2947 = vmatprep.subr.mxu0 0.0
    %2948 = vmatpush1.msra.mxu0 0.0
    %2949 = vmatprep.subr.mxu0 0.0
    %2950 = vmatpush1.msra.mxu0 0.0
    %2951 = vmatprep.subr.mxu0 0.0
    %2952 = vmatpush1.msra.mxu0 0.0
    %2953 = vmatprep.subr.mxu0 0.0
    %2954 = vmatpush1.msra.mxu0 0.0
    %2955 = vmatprep.subr.mxu0 0.0
    %2956 = vmatpush1.msra.mxu0 0.0
    %2957 = vmatprep.subr.mxu0 0.0
    %2958 = vmatpush1.msra.mxu0 0.0
    %2959 = vmatprep.subr.mxu0 0.0
    %2960 = vmatpush1.msra.mxu0 0.0
    %2961 = vmatprep.subr.mxu0 0.0
    %2962 = vmatpush1.msra.mxu0 0.0
    %2963 = vmatprep.subr.mxu0 0.0
    %2964 = vmatpush1.msra.mxu0 0.0
    %2965 = vmatprep.subr.mxu0 0.0
    %2966 = vmatpush1.msra.mxu0 0.0
    %2967 = vmatprep.subr.mxu0 0.0
    %2968 = vmatpush1.msra.mxu0 0.0
    %2969 = vmatprep.subr.mxu0 0.0
    %2970 = vmatpush1.msra.mxu0 0.0
    %2971 = vmatprep.mubr.f32.mxu0 0.0
    %v2972 = vand.u32 %v2365, 4294901760
    %v2973 = vsub.f32 %v2365, %v2972
    %v2974 = vand.u32 %v2973, 4294901760
    %2975 = vmatmul.mubr.f32.gmra.mrb[0].mxu0 %v2974
    %v2976 = vpop.f32.mrb[0].mxu0
    %v2977 = vadd.f32 %v2871, %v2976
    %v2978 = vpop.f32.mrb[0].mxu0
    %v2979 = vadd.f32 %v2873, %v2978
    %2980 = vdwg.mxu0
    %v2981 = vand.u32 %v2367, 4294901760
    %v2982 = vsub.f32 %v2367, %v2981
    %v2983 = vand.u32 %v2982, 4294901760
    %2984 = vmatprep.subr.mxu0 %v2983
    %v2985 = vand.u32 %v2366, 4294901760
    %v2986 = vsub.f32 %v2366, %v2985
    %v2987 = vand.u32 %v2986, 4294901760
    %2988 = vmatpush1.msra.mxu0 %v2987
    %v2989 = vand.u32 %v2369, 4294901760
    %v2990 = vsub.f32 %v2369, %v2989
    %v2991 = vand.u32 %v2990, 4294901760
    %2992 = vmatprep.subr.mxu0 %v2991
    %v2993 = vand.u32 %v2368, 4294901760
    %v2994 = vsub.f32 %v2368, %v2993
    %v2995 = vand.u32 %v2994, 4294901760
    %2996 = vmatpush1.msra.mxu0 %v2995
    %v2997 = vand.u32 %v2371, 4294901760
    %v2998 = vsub.f32 %v2371, %v2997
    %v2999 = vand.u32 %v2998, 4294901760
    %3000 = vmatprep.subr.mxu0 %v2999
    %v3001 = vand.u32 %v2370, 4294901760
    %v3002 = vsub.f32 %v2370, %v3001
    %v3003 = vand.u32 %v3002, 4294901760
    %3004 = vmatpush1.msra.mxu0 %v3003
    %v3005 = vand.u32 %v2373, 4294901760
    %v3006 = vsub.f32 %v2373, %v3005
    %v3007 = vand.u32 %v3006, 4294901760
    %3008 = vmatprep.subr.mxu0 %v3007
    %v3009 = vand.u32 %v2372, 4294901760
    %v3010 = vsub.f32 %v2372, %v3009
    %v3011 = vand.u32 %v3010, 4294901760
    %3012 = vmatpush1.msra.mxu0 %v3011
    %v3013 = vand.u32 %v2375, 4294901760
    %v3014 = vsub.f32 %v2375, %v3013
    %v3015 = vand.u32 %v3014, 4294901760
    %3016 = vmatprep.subr.mxu0 %v3015
    %v3017 = vand.u32 %v2374, 4294901760
    %v3018 = vsub.f32 %v2374, %v3017
    %v3019 = vand.u32 %v3018, 4294901760
    %3020 = vmatpush1.msra.mxu0 %v3019
    %v3021 = vand.u32 %v2377, 4294901760
    %v3022 = vsub.f32 %v2377, %v3021
    %v3023 = vand.u32 %v3022, 4294901760
    %3024 = vmatprep.subr.mxu0 %v3023
    %v3025 = vand.u32 %v2376, 4294901760
    %v3026 = vsub.f32 %v2376, %v3025
    %v3027 = vand.u32 %v3026, 4294901760
    %3028 = vmatpush1.msra.mxu0 %v3027
    %v3029 = vand.u32 %v2379, 4294901760
    %v3030 = vsub.f32 %v2379, %v3029
    %v3031 = vand.u32 %v3030, 4294901760
    %3032 = vmatprep.subr.mxu0 %v3031
    %v3033 = vand.u32 %v2378, 4294901760
    %v3034 = vsub.f32 %v2378, %v3033
    %v3035 = vand.u32 %v3034, 4294901760
    %3036 = vmatpush1.msra.mxu0 %v3035
    %v3037 = vand.u32 %v2381, 4294901760
    %v3038 = vsub.f32 %v2381, %v3037
    %v3039 = vand.u32 %v3038, 4294901760
    %3040 = vmatprep.subr.mxu0 %v3039
    %v3041 = vand.u32 %v2380, 4294901760
    %v3042 = vsub.f32 %v2380, %v3041
    %v3043 = vand.u32 %v3042, 4294901760
    %3044 = vmatpush1.msra.mxu0 %v3043
    %v3045 = vand.u32 %v2383, 4294901760
    %v3046 = vsub.f32 %v2383, %v3045
    %v3047 = vand.u32 %v3046, 4294901760
    %3048 = vmatprep.subr.mxu0 %v3047
    %v3049 = vand.u32 %v2382, 4294901760
    %v3050 = vsub.f32 %v2382, %v3049
    %v3051 = vand.u32 %v3050, 4294901760
    %3052 = vmatpush1.msra.mxu0 %v3051
    %v3053 = vand.u32 %v2385, 4294901760
    %v3054 = vsub.f32 %v2385, %v3053
    %v3055 = vand.u32 %v3054, 4294901760
    %3056 = vmatprep.subr.mxu0 %v3055
    %v3057 = vand.u32 %v2384, 4294901760
    %v3058 = vsub.f32 %v2384, %v3057
    %v3059 = vand.u32 %v3058, 4294901760
    %3060 = vmatpush1.msra.mxu0 %v3059
    %v3061 = vand.u32 %v2387, 4294901760
    %v3062 = vsub.f32 %v2387, %v3061
    %v3063 = vand.u32 %v3062, 4294901760
    %3064 = vmatprep.subr.mxu0 %v3063
    %v3065 = vand.u32 %v2386, 4294901760
    %v3066 = vsub.f32 %v2386, %v3065
    %v3067 = vand.u32 %v3066, 4294901760
    %3068 = vmatpush1.msra.mxu0 %v3067
    %v3069 = vand.u32 %v2389, 4294901760
    %v3070 = vsub.f32 %v2389, %v3069
    %v3071 = vand.u32 %v3070, 4294901760
    %3072 = vmatprep.subr.mxu0 %v3071
    %v3073 = vand.u32 %v2388, 4294901760
    %v3074 = vsub.f32 %v2388, %v3073
    %v3075 = vand.u32 %v3074, 4294901760
    %3076 = vmatpush1.msra.mxu0 %v3075
    %v3077 = vand.u32 %v2391, 4294901760
    %v3078 = vsub.f32 %v2391, %v3077
    %v3079 = vand.u32 %v3078, 4294901760
    %3080 = vmatprep.subr.mxu0 %v3079
    %v3081 = vand.u32 %v2390, 4294901760
    %v3082 = vsub.f32 %v2390, %v3081
    %v3083 = vand.u32 %v3082, 4294901760
    %3084 = vmatpush1.msra.mxu0 %v3083
    %v3085 = vand.u32 %v2393, 4294901760
    %v3086 = vsub.f32 %v2393, %v3085
    %v3087 = vand.u32 %v3086, 4294901760
    %3088 = vmatprep.subr.mxu0 %v3087
    %v3089 = vand.u32 %v2392, 4294901760
    %v3090 = vsub.f32 %v2392, %v3089
    %v3091 = vand.u32 %v3090, 4294901760
    %3092 = vmatpush1.msra.mxu0 %v3091
    %v3093 = vand.u32 %v2395, 4294901760
    %v3094 = vsub.f32 %v2395, %v3093
    %v3095 = vand.u32 %v3094, 4294901760
    %3096 = vmatprep.subr.mxu0 %v3095
    %v3097 = vand.u32 %v2394, 4294901760
    %v3098 = vsub.f32 %v2394, %v3097
    %v3099 = vand.u32 %v3098, 4294901760
    %3100 = vmatpush1.msra.mxu0 %v3099
    %v3101 = vand.u32 %v2397, 4294901760
    %v3102 = vsub.f32 %v2397, %v3101
    %v3103 = vand.u32 %v3102, 4294901760
    %3104 = vmatprep.subr.mxu0 %v3103
    %v3105 = vand.u32 %v2396, 4294901760
    %v3106 = vsub.f32 %v2396, %v3105
    %v3107 = vand.u32 %v3106, 4294901760
    %3108 = vmatpush1.msra.mxu0 %v3107
    %3109 = vmatprep.subr.mxu0 0.0
    %3110 = vmatpush1.msra.mxu0 0.0
    %3111 = vmatprep.subr.mxu0 0.0
    %3112 = vmatpush1.msra.mxu0 0.0
    %3113 = vmatprep.subr.mxu0 0.0
    %3114 = vmatpush1.msra.mxu0 0.0
    %3115 = vmatprep.subr.mxu0 0.0
    %3116 = vmatpush1.msra.mxu0 0.0
    %3117 = vmatprep.subr.mxu0 0.0
    %3118 = vmatpush1.msra.mxu0 0.0
    %3119 = vmatprep.subr.mxu0 0.0
    %3120 = vmatpush1.msra.mxu0 0.0
    %3121 = vmatprep.subr.mxu0 0.0
    %3122 = vmatpush1.msra.mxu0 0.0
    %3123 = vmatprep.subr.mxu0 0.0
    %3124 = vmatpush1.msra.mxu0 0.0
    %3125 = vmatprep.subr.mxu0 0.0
    %3126 = vmatpush1.msra.mxu0 0.0
    %3127 = vmatprep.subr.mxu0 0.0
    %3128 = vmatpush1.msra.mxu0 0.0
    %3129 = vmatprep.subr.mxu0 0.0
    %3130 = vmatpush1.msra.mxu0 0.0
    %3131 = vmatprep.subr.mxu0 0.0
    %3132 = vmatpush1.msra.mxu0 0.0
    %3133 = vmatprep.subr.mxu0 0.0
    %3134 = vmatpush1.msra.mxu0 0.0
    %3135 = vmatprep.subr.mxu0 0.0
    %3136 = vmatpush1.msra.mxu0 0.0
    %3137 = vmatprep.subr.mxu0 0.0
    %3138 = vmatpush1.msra.mxu0 0.0
    %3139 = vmatprep.subr.mxu0 0.0
    %3140 = vmatpush1.msra.mxu0 0.0
    %3141 = vmatprep.mubr.f32.mxu0 0.0
    %v3142 = vand.u32 %v2365, 4294901760
    %3143 = vmatmul.mubr.f32.gmra.mrb[0].mxu0 %v3142
    %v3144 = vpop.f32.mrb[0].mxu0
    %v3145 = vadd.f32 %v2977, %v3144
    %v3146 = vpop.f32.mrb[0].mxu0
    %v3147 = vadd.f32 %v2979, %v3146
    %3148 = vdwg.mxu0
    %v3149 = vand.u32 %v2367, 4294901760
    %3150 = vmatprep.subr.mxu0 %v3149
    %v3151 = vand.u32 %v2366, 4294901760
    %3152 = vmatpush1.msra.mxu0 %v3151
    %v3153 = vand.u32 %v2369, 4294901760
    %3154 = vmatprep.subr.mxu0 %v3153
    %v3155 = vand.u32 %v2368, 4294901760
    %3156 = vmatpush1.msra.mxu0 %v3155
    %v3157 = vand.u32 %v2371, 4294901760
    %3158 = vmatprep.subr.mxu0 %v3157
    %v3159 = vand.u32 %v2370, 4294901760
    %3160 = vmatpush1.msra.mxu0 %v3159
    %v3161 = vand.u32 %v2373, 4294901760
    %3162 = vmatprep.subr.mxu0 %v3161
    %v3163 = vand.u32 %v2372, 4294901760
    %3164 = vmatpush1.msra.mxu0 %v3163
    %v3165 = vand.u32 %v2375, 4294901760
    %3166 = vmatprep.subr.mxu0 %v3165
    %v3167 = vand.u32 %v2374, 4294901760
    %3168 = vmatpush1.msra.mxu0 %v3167
    %v3169 = vand.u32 %v2377, 4294901760
    %3170 = vmatprep.subr.mxu0 %v3169
    %v3171 = vand.u32 %v2376, 4294901760
    %3172 = vmatpush1.msra.mxu0 %v3171
    %v3173 = vand.u32 %v2379, 4294901760
    %3174 = vmatprep.subr.mxu0 %v3173
    %v3175 = vand.u32 %v2378, 4294901760
    %3176 = vmatpush1.msra.mxu0 %v3175
    %v3177 = vand.u32 %v2381, 4294901760
    %3178 = vmatprep.subr.mxu0 %v3177
    %v3179 = vand.u32 %v2380, 4294901760
    %3180 = vmatpush1.msra.mxu0 %v3179
    %v3181 = vand.u32 %v2383, 4294901760
    %3182 = vmatprep.subr.mxu0 %v3181
    %v3183 = vand.u32 %v2382, 4294901760
    %3184 = vmatpush1.msra.mxu0 %v3183
    %v3185 = vand.u32 %v2385, 4294901760
    %3186 = vmatprep.subr.mxu0 %v3185
    %v3187 = vand.u32 %v2384, 4294901760
    %3188 = vmatpush1.msra.mxu0 %v3187
    %v3189 = vand.u32 %v2387, 4294901760
    %3190 = vmatprep.subr.mxu0 %v3189
    %v3191 = vand.u32 %v2386, 4294901760
    %3192 = vmatpush1.msra.mxu0 %v3191
    %v3193 = vand.u32 %v2389, 4294901760
    %3194 = vmatprep.subr.mxu0 %v3193
    %v3195 = vand.u32 %v2388, 4294901760
    %3196 = vmatpush1.msra.mxu0 %v3195
    %v3197 = vand.u32 %v2391, 4294901760
    %3198 = vmatprep.subr.mxu0 %v3197
    %v3199 = vand.u32 %v2390, 4294901760
    %3200 = vmatpush1.msra.mxu0 %v3199
    %v3201 = vand.u32 %v2393, 4294901760
    %3202 = vmatprep.subr.mxu0 %v3201
    %v3203 = vand.u32 %v2392, 4294901760
    %3204 = vmatpush1.msra.mxu0 %v3203
    %v3205 = vand.u32 %v2395, 4294901760
    %3206 = vmatprep.subr.mxu0 %v3205
    %v3207 = vand.u32 %v2394, 4294901760
    %3208 = vmatpush1.msra.mxu0 %v3207
    %v3209 = vand.u32 %v2397, 4294901760
    %3210 = vmatprep.subr.mxu0 %v3209
    %v3211 = vand.u32 %v2396, 4294901760
    %3212 = vmatpush1.msra.mxu0 %v3211
    %3213 = vmatprep.subr.mxu0 0.0
    %3214 = vmatpush1.msra.mxu0 0.0
    %3215 = vmatprep.subr.mxu0 0.0
    %3216 = vmatpush1.msra.mxu0 0.0
    %3217 = vmatprep.subr.mxu0 0.0
    %3218 = vmatpush1.msra.mxu0 0.0
    %3219 = vmatprep.subr.mxu0 0.0
    %3220 = vmatpush1.msra.mxu0 0.0
    %3221 = vmatprep.subr.mxu0 0.0
    %3222 = vmatpush1.msra.mxu0 0.0
    %3223 = vmatprep.subr.mxu0 0.0
    %3224 = vmatpush1.msra.mxu0 0.0
    %3225 = vmatprep.subr.mxu0 0.0
    %3226 = vmatpush1.msra.mxu0 0.0
    %3227 = vmatprep.subr.mxu0 0.0
    %3228 = vmatpush1.msra.mxu0 0.0
    %3229 = vmatprep.subr.mxu0 0.0
    %3230 = vmatpush1.msra.mxu0 0.0
    %3231 = vmatprep.subr.mxu0 0.0
    %3232 = vmatpush1.msra.mxu0 0.0
    %3233 = vmatprep.subr.mxu0 0.0
    %3234 = vmatpush1.msra.mxu0 0.0
    %3235 = vmatprep.subr.mxu0 0.0
    %3236 = vmatpush1.msra.mxu0 0.0
    %3237 = vmatprep.subr.mxu0 0.0
    %3238 = vmatpush1.msra.mxu0 0.0
    %3239 = vmatprep.subr.mxu0 0.0
    %3240 = vmatpush1.msra.mxu0 0.0
    %3241 = vmatprep.subr.mxu0 0.0
    %3242 = vmatpush1.msra.mxu0 0.0
    %3243 = vmatprep.subr.mxu0 0.0
    %3244 = vmatpush1.msra.mxu0 0.0
    %3245 = vmatprep.mubr.f32.mxu0 0.0
    %v3246 = vand.u32 %v2365, 4294901760
    %3247 = vmatmul.mubr.f32.gmra.mrb[0].mxu0 %v3246
    %v3248 = vpop.f32.mrb[0].mxu0
    %v3249 = vadd.f32 %v3145, %v3248
    %v3250 = vpop.f32.mrb[0].mxu0
    %v3251 = vadd.f32 %v3147, %v3250
    %3252 = vdwg.mxu0
    %v3253 = vand.u32 %v2302, 4294901760
    %3254 = vmatprep.subr.mxu0 %v3253
    %v3255 = vand.u32 %v2301, 4294901760
    %3256 = vmatpush1.msra.mxu0 %v3255
    %v3257 = vand.u32 %v2304, 4294901760
    %3258 = vmatprep.subr.mxu0 %v3257
    %v3259 = vand.u32 %v2303, 4294901760
    %3260 = vmatpush1.msra.mxu0 %v3259
    %v3261 = vand.u32 %v2306, 4294901760
    %3262 = vmatprep.subr.mxu0 %v3261
    %v3263 = vand.u32 %v2305, 4294901760
    %3264 = vmatpush1.msra.mxu0 %v3263
    %v3265 = vand.u32 %v2308, 4294901760
    %3266 = vmatprep.subr.mxu0 %v3265
    %v3267 = vand.u32 %v2307, 4294901760
    %3268 = vmatpush1.msra.mxu0 %v3267
    %v3269 = vand.u32 %v2310, 4294901760
    %3270 = vmatprep.subr.mxu0 %v3269
    %v3271 = vand.u32 %v2309, 4294901760
    %3272 = vmatpush1.msra.mxu0 %v3271
    %v3273 = vand.u32 %v2312, 4294901760
    %3274 = vmatprep.subr.mxu0 %v3273
    %v3275 = vand.u32 %v2311, 4294901760
    %3276 = vmatpush1.msra.mxu0 %v3275
    %v3277 = vand.u32 %v2314, 4294901760
    %3278 = vmatprep.subr.mxu0 %v3277
    %v3279 = vand.u32 %v2313, 4294901760
    %3280 = vmatpush1.msra.mxu0 %v3279
    %v3281 = vand.u32 %v2316, 4294901760
    %3282 = vmatprep.subr.mxu0 %v3281
    %v3283 = vand.u32 %v2315, 4294901760
    %3284 = vmatpush1.msra.mxu0 %v3283
    %v3285 = vand.u32 %v2318, 4294901760
    %3286 = vmatprep.subr.mxu0 %v3285
    %v3287 = vand.u32 %v2317, 4294901760
    %3288 = vmatpush1.msra.mxu0 %v3287
    %v3289 = vand.u32 %v2320, 4294901760
    %3290 = vmatprep.subr.mxu0 %v3289
    %v3291 = vand.u32 %v2319, 4294901760
    %3292 = vmatpush1.msra.mxu0 %v3291
    %v3293 = vand.u32 %v2322, 4294901760
    %3294 = vmatprep.subr.mxu0 %v3293
    %v3295 = vand.u32 %v2321, 4294901760
    %3296 = vmatpush1.msra.mxu0 %v3295
    %v3297 = vand.u32 %v2324, 4294901760
    %3298 = vmatprep.subr.mxu0 %v3297
    %v3299 = vand.u32 %v2323, 4294901760
    %3300 = vmatpush1.msra.mxu0 %v3299
    %v3301 = vand.u32 %v2326, 4294901760
    %3302 = vmatprep.subr.mxu0 %v3301
    %v3303 = vand.u32 %v2325, 4294901760
    %3304 = vmatpush1.msra.mxu0 %v3303
    %v3305 = vand.u32 %v2328, 4294901760
    %3306 = vmatprep.subr.mxu0 %v3305
    %v3307 = vand.u32 %v2327, 4294901760
    %3308 = vmatpush1.msra.mxu0 %v3307
    %v3309 = vand.u32 %v2330, 4294901760
    %3310 = vmatprep.subr.mxu0 %v3309
    %v3311 = vand.u32 %v2329, 4294901760
    %3312 = vmatpush1.msra.mxu0 %v3311
    %v3313 = vand.u32 %v2332, 4294901760
    %3314 = vmatprep.subr.mxu0 %v3313
    %v3315 = vand.u32 %v2331, 4294901760
    %3316 = vmatpush1.msra.mxu0 %v3315
    %v3317 = vand.u32 %v2334, 4294901760
    %3318 = vmatprep.subr.mxu0 %v3317
    %v3319 = vand.u32 %v2333, 4294901760
    %3320 = vmatpush1.msra.mxu0 %v3319
    %v3321 = vand.u32 %v2336, 4294901760
    %3322 = vmatprep.subr.mxu0 %v3321
    %v3323 = vand.u32 %v2335, 4294901760
    %3324 = vmatpush1.msra.mxu0 %v3323
    %v3325 = vand.u32 %v2338, 4294901760
    %3326 = vmatprep.subr.mxu0 %v3325
    %v3327 = vand.u32 %v2337, 4294901760
    %3328 = vmatpush1.msra.mxu0 %v3327
    %v3329 = vand.u32 %v2340, 4294901760
    %3330 = vmatprep.subr.mxu0 %v3329
    %v3331 = vand.u32 %v2339, 4294901760
    %3332 = vmatpush1.msra.mxu0 %v3331
    %v3333 = vand.u32 %v2342, 4294901760
    %3334 = vmatprep.subr.mxu0 %v3333
    %v3335 = vand.u32 %v2341, 4294901760
    %3336 = vmatpush1.msra.mxu0 %v3335
    %v3337 = vand.u32 %v2344, 4294901760
    %3338 = vmatprep.subr.mxu0 %v3337
    %v3339 = vand.u32 %v2343, 4294901760
    %3340 = vmatpush1.msra.mxu0 %v3339
    %v3341 = vand.u32 %v2346, 4294901760
    %3342 = vmatprep.subr.mxu0 %v3341
    %v3343 = vand.u32 %v2345, 4294901760
    %3344 = vmatpush1.msra.mxu0 %v3343
    %v3345 = vand.u32 %v2348, 4294901760
    %3346 = vmatprep.subr.mxu0 %v3345
    %v3347 = vand.u32 %v2347, 4294901760
    %3348 = vmatpush1.msra.mxu0 %v3347
    %v3349 = vand.u32 %v2350, 4294901760
    %3350 = vmatprep.subr.mxu0 %v3349
    %v3351 = vand.u32 %v2349, 4294901760
    %3352 = vmatpush1.msra.mxu0 %v3351
    %v3353 = vand.u32 %v2352, 4294901760
    %3354 = vmatprep.subr.mxu0 %v3353
    %v3355 = vand.u32 %v2351, 4294901760
    %3356 = vmatpush1.msra.mxu0 %v3355
    %v3357 = vand.u32 %v2354, 4294901760
    %3358 = vmatprep.subr.mxu0 %v3357
    %v3359 = vand.u32 %v2353, 4294901760
    %3360 = vmatpush1.msra.mxu0 %v3359
    %v3361 = vand.u32 %v2356, 4294901760
    %3362 = vmatprep.subr.mxu0 %v3361
    %v3363 = vand.u32 %v2355, 4294901760
    %3364 = vmatpush1.msra.mxu0 %v3363
    %v3365 = vand.u32 %v2358, 4294901760
    %3366 = vmatprep.subr.mxu0 %v3365
    %v3367 = vand.u32 %v2357, 4294901760
    %3368 = vmatpush1.msra.mxu0 %v3367
    %v3369 = vand.u32 %v2360, 4294901760
    %3370 = vmatprep.subr.mxu0 %v3369
    %v3371 = vand.u32 %v2359, 4294901760
    %3372 = vmatpush1.msra.mxu0 %v3371
    %v3373 = vand.u32 %v2362, 4294901760
    %3374 = vmatprep.subr.mxu0 %v3373
    %v3375 = vand.u32 %v2361, 4294901760
    %3376 = vmatpush1.msra.mxu0 %v3375
    %v3377 = vand.u32 %v2364, 4294901760
    %3378 = vmatprep.subr.mxu0 %v3377
    %v3379 = vand.u32 %v2363, 4294901760
    %3380 = vmatpush1.msra.mxu0 %v3379
    %v3381 = vand.u32 %v2299, 4294901760
    %v3382 = vsub.f32 %v2299, %v3381
    %v3383 = vand.u32 %v3382, 4294901760
    %v3384 = vsub.f32 %v3382, %v3383
    %v3385 = vand.u32 %v3384, 4294901760
    %3386 = vmatprep.mubr.f32.mxu0 %v3385
    %v3387 = vand.u32 %v2298, 4294901760
    %v3388 = vsub.f32 %v2298, %v3387
    %v3389 = vand.u32 %v3388, 4294901760
    %v3390 = vsub.f32 %v3388, %v3389
    %v3391 = vand.u32 %v3390, 4294901760
    %3392 = vmatmul.mubr.f32.gmra.mrb[0].mxu0 %v3391
    %v3393 = vpop.f32.mrb[0].mxu0
    %v3394 = vadd.f32 %v3249, %v3393
    %v3395 = vpop.f32.mrb[0].mxu0
    %v3396 = vadd.f32 %v3251, %v3395
    %3397 = vdwg.mxu0
    %v3398 = vand.u32 %v2302, 4294901760
    %v3399 = vsub.f32 %v2302, %v3398
    %v3400 = vand.u32 %v3399, 4294901760
    %v3401 = vsub.f32 %v3399, %v3400
    %v3402 = vand.u32 %v3401, 4294901760
    %3403 = vmatprep.subr.mxu0 %v3402
    %v3404 = vand.u32 %v2301, 4294901760
    %v3405 = vsub.f32 %v2301, %v3404
    %v3406 = vand.u32 %v3405, 4294901760
    %v3407 = vsub.f32 %v3405, %v3406
    %v3408 = vand.u32 %v3407, 4294901760
    %3409 = vmatpush1.msra.mxu0 %v3408
    %v3410 = vand.u32 %v2304, 4294901760
    %v3411 = vsub.f32 %v2304, %v3410
    %v3412 = vand.u32 %v3411, 4294901760
    %v3413 = vsub.f32 %v3411, %v3412
    %v3414 = vand.u32 %v3413, 4294901760
    %3415 = vmatprep.subr.mxu0 %v3414
    %v3416 = vand.u32 %v2303, 4294901760
    %v3417 = vsub.f32 %v2303, %v3416
    %v3418 = vand.u32 %v3417, 4294901760
    %v3419 = vsub.f32 %v3417, %v3418
    %v3420 = vand.u32 %v3419, 4294901760
    %3421 = vmatpush1.msra.mxu0 %v3420
    %v3422 = vand.u32 %v2306, 4294901760
    %v3423 = vsub.f32 %v2306, %v3422
    %v3424 = vand.u32 %v3423, 4294901760
    %v3425 = vsub.f32 %v3423, %v3424
    %v3426 = vand.u32 %v3425, 4294901760
    %3427 = vmatprep.subr.mxu0 %v3426
    %v3428 = vand.u32 %v2305, 4294901760
    %v3429 = vsub.f32 %v2305, %v3428
    %v3430 = vand.u32 %v3429, 4294901760
    %v3431 = vsub.f32 %v3429, %v3430
    %v3432 = vand.u32 %v3431, 4294901760
    %3433 = vmatpush1.msra.mxu0 %v3432
    %v3434 = vand.u32 %v2308, 4294901760
    %v3435 = vsub.f32 %v2308, %v3434
    %v3436 = vand.u32 %v3435, 4294901760
    %v3437 = vsub.f32 %v3435, %v3436
    %v3438 = vand.u32 %v3437, 4294901760
    %3439 = vmatprep.subr.mxu0 %v3438
    %v3440 = vand.u32 %v2307, 4294901760
    %v3441 = vsub.f32 %v2307, %v3440
    %v3442 = vand.u32 %v3441, 4294901760
    %v3443 = vsub.f32 %v3441, %v3442
    %v3444 = vand.u32 %v3443, 4294901760
    %3445 = vmatpush1.msra.mxu0 %v3444
    %v3446 = vand.u32 %v2310, 4294901760
    %v3447 = vsub.f32 %v2310, %v3446
    %v3448 = vand.u32 %v3447, 4294901760
    %v3449 = vsub.f32 %v3447, %v3448
    %v3450 = vand.u32 %v3449, 4294901760
    %3451 = vmatprep.subr.mxu0 %v3450
    %v3452 = vand.u32 %v2309, 4294901760
    %v3453 = vsub.f32 %v2309, %v3452
    %v3454 = vand.u32 %v3453, 4294901760
    %v3455 = vsub.f32 %v3453, %v3454
    %v3456 = vand.u32 %v3455, 4294901760
    %3457 = vmatpush1.msra.mxu0 %v3456
    %v3458 = vand.u32 %v2312, 4294901760
    %v3459 = vsub.f32 %v2312, %v3458
    %v3460 = vand.u32 %v3459, 4294901760
    %v3461 = vsub.f32 %v3459, %v3460
    %v3462 = vand.u32 %v3461, 4294901760
    %3463 = vmatprep.subr.mxu0 %v3462
    %v3464 = vand.u32 %v2311, 4294901760
    %v3465 = vsub.f32 %v2311, %v3464
    %v3466 = vand.u32 %v3465, 4294901760
    %v3467 = vsub.f32 %v3465, %v3466
    %v3468 = vand.u32 %v3467, 4294901760
    %3469 = vmatpush1.msra.mxu0 %v3468
    %v3470 = vand.u32 %v2314, 4294901760
    %v3471 = vsub.f32 %v2314, %v3470
    %v3472 = vand.u32 %v3471, 4294901760
    %v3473 = vsub.f32 %v3471, %v3472
    %v3474 = vand.u32 %v3473, 4294901760
    %3475 = vmatprep.subr.mxu0 %v3474
    %v3476 = vand.u32 %v2313, 4294901760
    %v3477 = vsub.f32 %v2313, %v3476
    %v3478 = vand.u32 %v3477, 4294901760
    %v3479 = vsub.f32 %v3477, %v3478
    %v3480 = vand.u32 %v3479, 4294901760
    %3481 = vmatpush1.msra.mxu0 %v3480
    %v3482 = vand.u32 %v2316, 4294901760
    %v3483 = vsub.f32 %v2316, %v3482
    %v3484 = vand.u32 %v3483, 4294901760
    %v3485 = vsub.f32 %v3483, %v3484
    %v3486 = vand.u32 %v3485, 4294901760
    %3487 = vmatprep.subr.mxu0 %v3486
    %v3488 = vand.u32 %v2315, 4294901760
    %v3489 = vsub.f32 %v2315, %v3488
    %v3490 = vand.u32 %v3489, 4294901760
    %v3491 = vsub.f32 %v3489, %v3490
    %v3492 = vand.u32 %v3491, 4294901760
    %3493 = vmatpush1.msra.mxu0 %v3492
    %v3494 = vand.u32 %v2318, 4294901760
    %v3495 = vsub.f32 %v2318, %v3494
    %v3496 = vand.u32 %v3495, 4294901760
    %v3497 = vsub.f32 %v3495, %v3496
    %v3498 = vand.u32 %v3497, 4294901760
    %3499 = vmatprep.subr.mxu0 %v3498
    %v3500 = vand.u32 %v2317, 4294901760
    %v3501 = vsub.f32 %v2317, %v3500
    %v3502 = vand.u32 %v3501, 4294901760
    %v3503 = vsub.f32 %v3501, %v3502
    %v3504 = vand.u32 %v3503, 4294901760
    %3505 = vmatpush1.msra.mxu0 %v3504
    %v3506 = vand.u32 %v2320, 4294901760
    %v3507 = vsub.f32 %v2320, %v3506
    %v3508 = vand.u32 %v3507, 4294901760
    %v3509 = vsub.f32 %v3507, %v3508
    %v3510 = vand.u32 %v3509, 4294901760
    %3511 = vmatprep.subr.mxu0 %v3510
    %v3512 = vand.u32 %v2319, 4294901760
    %v3513 = vsub.f32 %v2319, %v3512
    %v3514 = vand.u32 %v3513, 4294901760
    %v3515 = vsub.f32 %v3513, %v3514
    %v3516 = vand.u32 %v3515, 4294901760
    %3517 = vmatpush1.msra.mxu0 %v3516
    %v3518 = vand.u32 %v2322, 4294901760
    %v3519 = vsub.f32 %v2322, %v3518
    %v3520 = vand.u32 %v3519, 4294901760
    %v3521 = vsub.f32 %v3519, %v3520
    %v3522 = vand.u32 %v3521, 4294901760
    %3523 = vmatprep.subr.mxu0 %v3522
    %v3524 = vand.u32 %v2321, 4294901760
    %v3525 = vsub.f32 %v2321, %v3524
    %v3526 = vand.u32 %v3525, 4294901760
    %v3527 = vsub.f32 %v3525, %v3526
    %v3528 = vand.u32 %v3527, 4294901760
    %3529 = vmatpush1.msra.mxu0 %v3528
    %v3530 = vand.u32 %v2324, 4294901760
    %v3531 = vsub.f32 %v2324, %v3530
    %v3532 = vand.u32 %v3531, 4294901760
    %v3533 = vsub.f32 %v3531, %v3532
    %v3534 = vand.u32 %v3533, 4294901760
    %3535 = vmatprep.subr.mxu0 %v3534
    %v3536 = vand.u32 %v2323, 4294901760
    %v3537 = vsub.f32 %v2323, %v3536
    %v3538 = vand.u32 %v3537, 4294901760
    %v3539 = vsub.f32 %v3537, %v3538
    %v3540 = vand.u32 %v3539, 4294901760
    %3541 = vmatpush1.msra.mxu0 %v3540
    %v3542 = vand.u32 %v2326, 4294901760
    %v3543 = vsub.f32 %v2326, %v3542
    %v3544 = vand.u32 %v3543, 4294901760
    %v3545 = vsub.f32 %v3543, %v3544
    %v3546 = vand.u32 %v3545, 4294901760
    %3547 = vmatprep.subr.mxu0 %v3546
    %v3548 = vand.u32 %v2325, 4294901760
    %v3549 = vsub.f32 %v2325, %v3548
    %v3550 = vand.u32 %v3549, 4294901760
    %v3551 = vsub.f32 %v3549, %v3550
    %v3552 = vand.u32 %v3551, 4294901760
    %3553 = vmatpush1.msra.mxu0 %v3552
    %v3554 = vand.u32 %v2328, 4294901760
    %v3555 = vsub.f32 %v2328, %v3554
    %v3556 = vand.u32 %v3555, 4294901760
    %v3557 = vsub.f32 %v3555, %v3556
    %v3558 = vand.u32 %v3557, 4294901760
    %3559 = vmatprep.subr.mxu0 %v3558
    %v3560 = vand.u32 %v2327, 4294901760
    %v3561 = vsub.f32 %v2327, %v3560
    %v3562 = vand.u32 %v3561, 4294901760
    %v3563 = vsub.f32 %v3561, %v3562
    %v3564 = vand.u32 %v3563, 4294901760
    %3565 = vmatpush1.msra.mxu0 %v3564
    %v3566 = vand.u32 %v2330, 4294901760
    %v3567 = vsub.f32 %v2330, %v3566
    %v3568 = vand.u32 %v3567, 4294901760
    %v3569 = vsub.f32 %v3567, %v3568
    %v3570 = vand.u32 %v3569, 4294901760
    %3571 = vmatprep.subr.mxu0 %v3570
    %v3572 = vand.u32 %v2329, 4294901760
    %v3573 = vsub.f32 %v2329, %v3572
    %v3574 = vand.u32 %v3573, 4294901760
    %v3575 = vsub.f32 %v3573, %v3574
    %v3576 = vand.u32 %v3575, 4294901760
    %3577 = vmatpush1.msra.mxu0 %v3576
    %v3578 = vand.u32 %v2332, 4294901760
    %v3579 = vsub.f32 %v2332, %v3578
    %v3580 = vand.u32 %v3579, 4294901760
    %v3581 = vsub.f32 %v3579, %v3580
    %v3582 = vand.u32 %v3581, 4294901760
    %3583 = vmatprep.subr.mxu0 %v3582
    %v3584 = vand.u32 %v2331, 4294901760
    %v3585 = vsub.f32 %v2331, %v3584
    %v3586 = vand.u32 %v3585, 4294901760
    %v3587 = vsub.f32 %v3585, %v3586
    %v3588 = vand.u32 %v3587, 4294901760
    %3589 = vmatpush1.msra.mxu0 %v3588
    %v3590 = vand.u32 %v2334, 4294901760
    %v3591 = vsub.f32 %v2334, %v3590
    %v3592 = vand.u32 %v3591, 4294901760
    %v3593 = vsub.f32 %v3591, %v3592
    %v3594 = vand.u32 %v3593, 4294901760
    %3595 = vmatprep.subr.mxu0 %v3594
    %v3596 = vand.u32 %v2333, 4294901760
    %v3597 = vsub.f32 %v2333, %v3596
    %v3598 = vand.u32 %v3597, 4294901760
    %v3599 = vsub.f32 %v3597, %v3598
    %v3600 = vand.u32 %v3599, 4294901760
    %3601 = vmatpush1.msra.mxu0 %v3600
    %v3602 = vand.u32 %v2336, 4294901760
    %v3603 = vsub.f32 %v2336, %v3602
    %v3604 = vand.u32 %v3603, 4294901760
    %v3605 = vsub.f32 %v3603, %v3604
    %v3606 = vand.u32 %v3605, 4294901760
    %3607 = vmatprep.subr.mxu0 %v3606
    %v3608 = vand.u32 %v2335, 4294901760
    %v3609 = vsub.f32 %v2335, %v3608
    %v3610 = vand.u32 %v3609, 4294901760
    %v3611 = vsub.f32 %v3609, %v3610
    %v3612 = vand.u32 %v3611, 4294901760
    %3613 = vmatpush1.msra.mxu0 %v3612
    %v3614 = vand.u32 %v2338, 4294901760
    %v3615 = vsub.f32 %v2338, %v3614
    %v3616 = vand.u32 %v3615, 4294901760
    %v3617 = vsub.f32 %v3615, %v3616
    %v3618 = vand.u32 %v3617, 4294901760
    %3619 = vmatprep.subr.mxu0 %v3618
    %v3620 = vand.u32 %v2337, 4294901760
    %v3621 = vsub.f32 %v2337, %v3620
    %v3622 = vand.u32 %v3621, 4294901760
    %v3623 = vsub.f32 %v3621, %v3622
    %v3624 = vand.u32 %v3623, 4294901760
    %3625 = vmatpush1.msra.mxu0 %v3624
    %v3626 = vand.u32 %v2340, 4294901760
    %v3627 = vsub.f32 %v2340, %v3626
    %v3628 = vand.u32 %v3627, 4294901760
    %v3629 = vsub.f32 %v3627, %v3628
    %v3630 = vand.u32 %v3629, 4294901760
    %3631 = vmatprep.subr.mxu0 %v3630
    %v3632 = vand.u32 %v2339, 4294901760
    %v3633 = vsub.f32 %v2339, %v3632
    %v3634 = vand.u32 %v3633, 4294901760
    %v3635 = vsub.f32 %v3633, %v3634
    %v3636 = vand.u32 %v3635, 4294901760
    %3637 = vmatpush1.msra.mxu0 %v3636
    %v3638 = vand.u32 %v2342, 4294901760
    %v3639 = vsub.f32 %v2342, %v3638
    %v3640 = vand.u32 %v3639, 4294901760
    %v3641 = vsub.f32 %v3639, %v3640
    %v3642 = vand.u32 %v3641, 4294901760
    %3643 = vmatprep.subr.mxu0 %v3642
    %v3644 = vand.u32 %v2341, 4294901760
    %v3645 = vsub.f32 %v2341, %v3644
    %v3646 = vand.u32 %v3645, 4294901760
    %v3647 = vsub.f32 %v3645, %v3646
    %v3648 = vand.u32 %v3647, 4294901760
    %3649 = vmatpush1.msra.mxu0 %v3648
    %v3650 = vand.u32 %v2344, 4294901760
    %v3651 = vsub.f32 %v2344, %v3650
    %v3652 = vand.u32 %v3651, 4294901760
    %v3653 = vsub.f32 %v3651, %v3652
    %v3654 = vand.u32 %v3653, 4294901760
    %3655 = vmatprep.subr.mxu0 %v3654
    %v3656 = vand.u32 %v2343, 4294901760
    %v3657 = vsub.f32 %v2343, %v3656
    %v3658 = vand.u32 %v3657, 4294901760
    %v3659 = vsub.f32 %v3657, %v3658
    %v3660 = vand.u32 %v3659, 4294901760
    %3661 = vmatpush1.msra.mxu0 %v3660
    %v3662 = vand.u32 %v2346, 4294901760
    %v3663 = vsub.f32 %v2346, %v3662
    %v3664 = vand.u32 %v3663, 4294901760
    %v3665 = vsub.f32 %v3663, %v3664
    %v3666 = vand.u32 %v3665, 4294901760
    %3667 = vmatprep.subr.mxu0 %v3666
    %v3668 = vand.u32 %v2345, 4294901760
    %v3669 = vsub.f32 %v2345, %v3668
    %v3670 = vand.u32 %v3669, 4294901760
    %v3671 = vsub.f32 %v3669, %v3670
    %v3672 = vand.u32 %v3671, 4294901760
    %3673 = vmatpush1.msra.mxu0 %v3672
    %v3674 = vand.u32 %v2348, 4294901760
    %v3675 = vsub.f32 %v2348, %v3674
    %v3676 = vand.u32 %v3675, 4294901760
    %v3677 = vsub.f32 %v3675, %v3676
    %v3678 = vand.u32 %v3677, 4294901760
    %3679 = vmatprep.subr.mxu0 %v3678
    %v3680 = vand.u32 %v2347, 4294901760
    %v3681 = vsub.f32 %v2347, %v3680
    %v3682 = vand.u32 %v3681, 4294901760
    %v3683 = vsub.f32 %v3681, %v3682
    %v3684 = vand.u32 %v3683, 4294901760
    %3685 = vmatpush1.msra.mxu0 %v3684
    %v3686 = vand.u32 %v2350, 4294901760
    %v3687 = vsub.f32 %v2350, %v3686
    %v3688 = vand.u32 %v3687, 4294901760
    %v3689 = vsub.f32 %v3687, %v3688
    %v3690 = vand.u32 %v3689, 4294901760
    %3691 = vmatprep.subr.mxu0 %v3690
    %v3692 = vand.u32 %v2349, 4294901760
    %v3693 = vsub.f32 %v2349, %v3692
    %v3694 = vand.u32 %v3693, 4294901760
    %v3695 = vsub.f32 %v3693, %v3694
    %v3696 = vand.u32 %v3695, 4294901760
    %3697 = vmatpush1.msra.mxu0 %v3696
    %v3698 = vand.u32 %v2352, 4294901760
    %v3699 = vsub.f32 %v2352, %v3698
    %v3700 = vand.u32 %v3699, 4294901760
    %v3701 = vsub.f32 %v3699, %v3700
    %v3702 = vand.u32 %v3701, 4294901760
    %3703 = vmatprep.subr.mxu0 %v3702
    %v3704 = vand.u32 %v2351, 4294901760
    %v3705 = vsub.f32 %v2351, %v3704
    %v3706 = vand.u32 %v3705, 4294901760
    %v3707 = vsub.f32 %v3705, %v3706
    %v3708 = vand.u32 %v3707, 4294901760
    %3709 = vmatpush1.msra.mxu0 %v3708
    %v3710 = vand.u32 %v2354, 4294901760
    %v3711 = vsub.f32 %v2354, %v3710
    %v3712 = vand.u32 %v3711, 4294901760
    %v3713 = vsub.f32 %v3711, %v3712
    %v3714 = vand.u32 %v3713, 4294901760
    %3715 = vmatprep.subr.mxu0 %v3714
    %v3716 = vand.u32 %v2353, 4294901760
    %v3717 = vsub.f32 %v2353, %v3716
    %v3718 = vand.u32 %v3717, 4294901760
    %v3719 = vsub.f32 %v3717, %v3718
    %v3720 = vand.u32 %v3719, 4294901760
    %3721 = vmatpush1.msra.mxu0 %v3720
    %v3722 = vand.u32 %v2356, 4294901760
    %v3723 = vsub.f32 %v2356, %v3722
    %v3724 = vand.u32 %v3723, 4294901760
    %v3725 = vsub.f32 %v3723, %v3724
    %v3726 = vand.u32 %v3725, 4294901760
    %3727 = vmatprep.subr.mxu0 %v3726
    %v3728 = vand.u32 %v2355, 4294901760
    %v3729 = vsub.f32 %v2355, %v3728
    %v3730 = vand.u32 %v3729, 4294901760
    %v3731 = vsub.f32 %v3729, %v3730
    %v3732 = vand.u32 %v3731, 4294901760
    %3733 = vmatpush1.msra.mxu0 %v3732
    %v3734 = vand.u32 %v2358, 4294901760
    %v3735 = vsub.f32 %v2358, %v3734
    %v3736 = vand.u32 %v3735, 4294901760
    %v3737 = vsub.f32 %v3735, %v3736
    %v3738 = vand.u32 %v3737, 4294901760
    %3739 = vmatprep.subr.mxu0 %v3738
    %v3740 = vand.u32 %v2357, 4294901760
    %v3741 = vsub.f32 %v2357, %v3740
    %v3742 = vand.u32 %v3741, 4294901760
    %v3743 = vsub.f32 %v3741, %v3742
    %v3744 = vand.u32 %v3743, 4294901760
    %3745 = vmatpush1.msra.mxu0 %v3744
    %v3746 = vand.u32 %v2360, 4294901760
    %v3747 = vsub.f32 %v2360, %v3746
    %v3748 = vand.u32 %v3747, 4294901760
    %v3749 = vsub.f32 %v3747, %v3748
    %v3750 = vand.u32 %v3749, 4294901760
    %3751 = vmatprep.subr.mxu0 %v3750
    %v3752 = vand.u32 %v2359, 4294901760
    %v3753 = vsub.f32 %v2359, %v3752
    %v3754 = vand.u32 %v3753, 4294901760
    %v3755 = vsub.f32 %v3753, %v3754
    %v3756 = vand.u32 %v3755, 4294901760
    %3757 = vmatpush1.msra.mxu0 %v3756
    %v3758 = vand.u32 %v2362, 4294901760
    %v3759 = vsub.f32 %v2362, %v3758
    %v3760 = vand.u32 %v3759, 4294901760
    %v3761 = vsub.f32 %v3759, %v3760
    %v3762 = vand.u32 %v3761, 4294901760
    %3763 = vmatprep.subr.mxu0 %v3762
    %v3764 = vand.u32 %v2361, 4294901760
    %v3765 = vsub.f32 %v2361, %v3764
    %v3766 = vand.u32 %v3765, 4294901760
    %v3767 = vsub.f32 %v3765, %v3766
    %v3768 = vand.u32 %v3767, 4294901760
    %3769 = vmatpush1.msra.mxu0 %v3768
    %v3770 = vand.u32 %v2364, 4294901760
    %v3771 = vsub.f32 %v2364, %v3770
    %v3772 = vand.u32 %v3771, 4294901760
    %v3773 = vsub.f32 %v3771, %v3772
    %v3774 = vand.u32 %v3773, 4294901760
    %3775 = vmatprep.subr.mxu0 %v3774
    %v3776 = vand.u32 %v2363, 4294901760
    %v3777 = vsub.f32 %v2363, %v3776
    %v3778 = vand.u32 %v3777, 4294901760
    %v3779 = vsub.f32 %v3777, %v3778
    %v3780 = vand.u32 %v3779, 4294901760
    %3781 = vmatpush1.msra.mxu0 %v3780
    %v3782 = vand.u32 %v2299, 4294901760
    %3783 = vmatprep.mubr.f32.mxu0 %v3782
    %v3784 = vand.u32 %v2298, 4294901760
    %3785 = vmatmul.mubr.f32.gmra.mrb[0].mxu0 %v3784
    %v3786 = vpop.f32.mrb[0].mxu0
    %v3787 = vadd.f32 %v3394, %v3786
    %v3788 = vpop.f32.mrb[0].mxu0
    %v3789 = vadd.f32 %v3396, %v3788
    %3790 = vdwg.mxu0
    %v3791 = vand.u32 %v2302, 4294901760
    %v3792 = vsub.f32 %v2302, %v3791
    %3793 = vmatprep.subr.mxu0 %v3792
    %v3794 = vand.u32 %v2301, 4294901760
    %v3795 = vsub.f32 %v2301, %v3794
    %3796 = vmatpush1.msra.mxu0 %v3795
    %v3797 = vand.u32 %v2304, 4294901760
    %v3798 = vsub.f32 %v2304, %v3797
    %3799 = vmatprep.subr.mxu0 %v3798
    %v3800 = vand.u32 %v2303, 4294901760
    %v3801 = vsub.f32 %v2303, %v3800
    %3802 = vmatpush1.msra.mxu0 %v3801
    %v3803 = vand.u32 %v2306, 4294901760
    %v3804 = vsub.f32 %v2306, %v3803
    %3805 = vmatprep.subr.mxu0 %v3804
    %v3806 = vand.u32 %v2305, 4294901760
    %v3807 = vsub.f32 %v2305, %v3806
    %3808 = vmatpush1.msra.mxu0 %v3807
    %v3809 = vand.u32 %v2308, 4294901760
    %v3810 = vsub.f32 %v2308, %v3809
    %3811 = vmatprep.subr.mxu0 %v3810
    %v3812 = vand.u32 %v2307, 4294901760
    %v3813 = vsub.f32 %v2307, %v3812
    %3814 = vmatpush1.msra.mxu0 %v3813
    %v3815 = vand.u32 %v2310, 4294901760
    %v3816 = vsub.f32 %v2310, %v3815
    %3817 = vmatprep.subr.mxu0 %v3816
    %v3818 = vand.u32 %v2309, 4294901760
    %v3819 = vsub.f32 %v2309, %v3818
    %3820 = vmatpush1.msra.mxu0 %v3819
    %v3821 = vand.u32 %v2312, 4294901760
    %v3822 = vsub.f32 %v2312, %v3821
    %3823 = vmatprep.subr.mxu0 %v3822
    %v3824 = vand.u32 %v2311, 4294901760
    %v3825 = vsub.f32 %v2311, %v3824
    %3826 = vmatpush1.msra.mxu0 %v3825
    %v3827 = vand.u32 %v2314, 4294901760
    %v3828 = vsub.f32 %v2314, %v3827
    %3829 = vmatprep.subr.mxu0 %v3828
    %v3830 = vand.u32 %v2313, 4294901760
    %v3831 = vsub.f32 %v2313, %v3830
    %3832 = vmatpush1.msra.mxu0 %v3831
    %v3833 = vand.u32 %v2316, 4294901760
    %v3834 = vsub.f32 %v2316, %v3833
    %3835 = vmatprep.subr.mxu0 %v3834
    %v3836 = vand.u32 %v2315, 4294901760
    %v3837 = vsub.f32 %v2315, %v3836
    %3838 = vmatpush1.msra.mxu0 %v3837
    %v3839 = vand.u32 %v2318, 4294901760
    %v3840 = vsub.f32 %v2318, %v3839
    %3841 = vmatprep.subr.mxu0 %v3840
    %v3842 = vand.u32 %v2317, 4294901760
    %v3843 = vsub.f32 %v2317, %v3842
    %3844 = vmatpush1.msra.mxu0 %v3843
    %v3845 = vand.u32 %v2320, 4294901760
    %v3846 = vsub.f32 %v2320, %v3845
    %3847 = vmatprep.subr.mxu0 %v3846
    %v3848 = vand.u32 %v2319, 4294901760
    %v3849 = vsub.f32 %v2319, %v3848
    %3850 = vmatpush1.msra.mxu0 %v3849
    %v3851 = vand.u32 %v2322, 4294901760
    %v3852 = vsub.f32 %v2322, %v3851
    %3853 = vmatprep.subr.mxu0 %v3852
    %v3854 = vand.u32 %v2321, 4294901760
    %v3855 = vsub.f32 %v2321, %v3854
    %3856 = vmatpush1.msra.mxu0 %v3855
    %v3857 = vand.u32 %v2324, 4294901760
    %v3858 = vsub.f32 %v2324, %v3857
    %3859 = vmatprep.subr.mxu0 %v3858
    %v3860 = vand.u32 %v2323, 4294901760
    %v3861 = vsub.f32 %v2323, %v3860
    %3862 = vmatpush1.msra.mxu0 %v3861
    %v3863 = vand.u32 %v2326, 4294901760
    %v3864 = vsub.f32 %v2326, %v3863
    %3865 = vmatprep.subr.mxu0 %v3864
    %v3866 = vand.u32 %v2325, 4294901760
    %v3867 = vsub.f32 %v2325, %v3866
    %3868 = vmatpush1.msra.mxu0 %v3867
    %v3869 = vand.u32 %v2328, 4294901760
    %v3870 = vsub.f32 %v2328, %v3869
    %3871 = vmatprep.subr.mxu0 %v3870
    %v3872 = vand.u32 %v2327, 4294901760
    %v3873 = vsub.f32 %v2327, %v3872
    %3874 = vmatpush1.msra.mxu0 %v3873
    %v3875 = vand.u32 %v2330, 4294901760
    %v3876 = vsub.f32 %v2330, %v3875
    %3877 = vmatprep.subr.mxu0 %v3876
    %v3878 = vand.u32 %v2329, 4294901760
    %v3879 = vsub.f32 %v2329, %v3878
    %3880 = vmatpush1.msra.mxu0 %v3879
    %v3881 = vand.u32 %v2332, 4294901760
    %v3882 = vsub.f32 %v2332, %v3881
    %3883 = vmatprep.subr.mxu0 %v3882
    %v3884 = vand.u32 %v2331, 4294901760
    %v3885 = vsub.f32 %v2331, %v3884
    %3886 = vmatpush1.msra.mxu0 %v3885
    %v3887 = vand.u32 %v2334, 4294901760
    %v3888 = vsub.f32 %v2334, %v3887
    %3889 = vmatprep.subr.mxu0 %v3888
    %v3890 = vand.u32 %v2333, 4294901760
    %v3891 = vsub.f32 %v2333, %v3890
    %3892 = vmatpush1.msra.mxu0 %v3891
    %v3893 = vand.u32 %v2336, 4294901760
    %v3894 = vsub.f32 %v2336, %v3893
    %3895 = vmatprep.subr.mxu0 %v3894
    %v3896 = vand.u32 %v2335, 4294901760
    %v3897 = vsub.f32 %v2335, %v3896
    %3898 = vmatpush1.msra.mxu0 %v3897
    %v3899 = vand.u32 %v2338, 4294901760
    %v3900 = vsub.f32 %v2338, %v3899
    %3901 = vmatprep.subr.mxu0 %v3900
    %v3902 = vand.u32 %v2337, 4294901760
    %v3903 = vsub.f32 %v2337, %v3902
    %3904 = vmatpush1.msra.mxu0 %v3903
    %v3905 = vand.u32 %v2340, 4294901760
    %v3906 = vsub.f32 %v2340, %v3905
    %3907 = vmatprep.subr.mxu0 %v3906
    %v3908 = vand.u32 %v2339, 4294901760
    %v3909 = vsub.f32 %v2339, %v3908
    %3910 = vmatpush1.msra.mxu0 %v3909
    %v3911 = vand.u32 %v2342, 4294901760
    %v3912 = vsub.f32 %v2342, %v3911
    %3913 = vmatprep.subr.mxu0 %v3912
    %v3914 = vand.u32 %v2341, 4294901760
    %v3915 = vsub.f32 %v2341, %v3914
    %3916 = vmatpush1.msra.mxu0 %v3915
    %v3917 = vand.u32 %v2344, 4294901760
    %v3918 = vsub.f32 %v2344, %v3917
    %3919 = vmatprep.subr.mxu0 %v3918
    %v3920 = vand.u32 %v2343, 4294901760
    %v3921 = vsub.f32 %v2343, %v3920
    %3922 = vmatpush1.msra.mxu0 %v3921
    %v3923 = vand.u32 %v2346, 4294901760
    %v3924 = vsub.f32 %v2346, %v3923
    %3925 = vmatprep.subr.mxu0 %v3924
    %v3926 = vand.u32 %v2345, 4294901760
    %v3927 = vsub.f32 %v2345, %v3926
    %3928 = vmatpush1.msra.mxu0 %v3927
    %v3929 = vand.u32 %v2348, 4294901760
    %v3930 = vsub.f32 %v2348, %v3929
    %3931 = vmatprep.subr.mxu0 %v3930
    %v3932 = vand.u32 %v2347, 4294901760
    %v3933 = vsub.f32 %v2347, %v3932
    %3934 = vmatpush1.msra.mxu0 %v3933
    %v3935 = vand.u32 %v2350, 4294901760
    %v3936 = vsub.f32 %v2350, %v3935
    %3937 = vmatprep.subr.mxu0 %v3936
    %v3938 = vand.u32 %v2349, 4294901760
    %v3939 = vsub.f32 %v2349, %v3938
    %3940 = vmatpush1.msra.mxu0 %v3939
    %v3941 = vand.u32 %v2352, 4294901760
    %v3942 = vsub.f32 %v2352, %v3941
    %3943 = vmatprep.subr.mxu0 %v3942
    %v3944 = vand.u32 %v2351, 4294901760
    %v3945 = vsub.f32 %v2351, %v3944
    %3946 = vmatpush1.msra.mxu0 %v3945
    %v3947 = vand.u32 %v2354, 4294901760
    %v3948 = vsub.f32 %v2354, %v3947
    %3949 = vmatprep.subr.mxu0 %v3948
    %v3950 = vand.u32 %v2353, 4294901760
    %v3951 = vsub.f32 %v2353, %v3950
    %3952 = vmatpush1.msra.mxu0 %v3951
    %v3953 = vand.u32 %v2356, 4294901760
    %v3954 = vsub.f32 %v2356, %v3953
    %3955 = vmatprep.subr.mxu0 %v3954
    %v3956 = vand.u32 %v2355, 4294901760
    %v3957 = vsub.f32 %v2355, %v3956
    %3958 = vmatpush1.msra.mxu0 %v3957
    %v3959 = vand.u32 %v2358, 4294901760
    %v3960 = vsub.f32 %v2358, %v3959
    %3961 = vmatprep.subr.mxu0 %v3960
    %v3962 = vand.u32 %v2357, 4294901760
    %v3963 = vsub.f32 %v2357, %v3962
    %3964 = vmatpush1.msra.mxu0 %v3963
    %v3965 = vand.u32 %v2360, 4294901760
    %v3966 = vsub.f32 %v2360, %v3965
    %3967 = vmatprep.subr.mxu0 %v3966
    %v3968 = vand.u32 %v2359, 4294901760
    %v3969 = vsub.f32 %v2359, %v3968
    %3970 = vmatpush1.msra.mxu0 %v3969
    %v3971 = vand.u32 %v2362, 4294901760
    %v3972 = vsub.f32 %v2362, %v3971
    %3973 = vmatprep.subr.mxu0 %v3972
    %v3974 = vand.u32 %v2361, 4294901760
    %v3975 = vsub.f32 %v2361, %v3974
    %3976 = vmatpush1.msra.mxu0 %v3975
    %v3977 = vand.u32 %v2364, 4294901760
    %v3978 = vsub.f32 %v2364, %v3977
    %3979 = vmatprep.subr.mxu0 %v3978
    %v3980 = vand.u32 %v2363, 4294901760
    %v3981 = vsub.f32 %v2363, %v3980
    %3982 = vmatpush1.msra.mxu0 %v3981
    %v3983 = vand.u32 %v2299, 4294901760
    %v3984 = vsub.f32 %v2299, %v3983
    %3985 = vmatprep.mubr.f32.mxu0 %v3984
    %v3986 = vand.u32 %v2298, 4294901760
    %v3987 = vsub.f32 %v2298, %v3986
    %3988 = vmatmul.mubr.f32.gmra.mrb[0].mxu0 %v3987
    %v3989 = vpop.f32.mrb[0].mxu0
    %v3990 = vadd.f32 %v3787, %v3989
    %v3991 = vpop.f32.mrb[0].mxu0
    %v3992 = vadd.f32 %v3789, %v3991
    %3993 = vdwg.mxu0
    %v3994 = vand.u32 %v2302, 4294901760
    %3995 = vmatprep.subr.mxu0 %v3994
    %v3996 = vand.u32 %v2301, 4294901760
    %3997 = vmatpush1.msra.mxu0 %v3996
    %v3998 = vand.u32 %v2304, 4294901760
    %3999 = vmatprep.subr.mxu0 %v3998
    %v4000 = vand.u32 %v2303, 4294901760
    %4001 = vmatpush1.msra.mxu0 %v4000
    %v4002 = vand.u32 %v2306, 4294901760
    %4003 = vmatprep.subr.mxu0 %v4002
    %v4004 = vand.u32 %v2305, 4294901760
    %4005 = vmatpush1.msra.mxu0 %v4004
    %v4006 = vand.u32 %v2308, 4294901760
    %4007 = vmatprep.subr.mxu0 %v4006
    %v4008 = vand.u32 %v2307, 4294901760
    %4009 = vmatpush1.msra.mxu0 %v4008
    %v4010 = vand.u32 %v2310, 4294901760
    %4011 = vmatprep.subr.mxu0 %v4010
    %v4012 = vand.u32 %v2309, 4294901760
    %4013 = vmatpush1.msra.mxu0 %v4012
    %v4014 = vand.u32 %v2312, 4294901760
    %4015 = vmatprep.subr.mxu0 %v4014
    %v4016 = vand.u32 %v2311, 4294901760
    %4017 = vmatpush1.msra.mxu0 %v4016
    %v4018 = vand.u32 %v2314, 4294901760
    %4019 = vmatprep.subr.mxu0 %v4018
    %v4020 = vand.u32 %v2313, 4294901760
    %4021 = vmatpush1.msra.mxu0 %v4020
    %v4022 = vand.u32 %v2316, 4294901760
    %4023 = vmatprep.subr.mxu0 %v4022
    %v4024 = vand.u32 %v2315, 4294901760
    %4025 = vmatpush1.msra.mxu0 %v4024
    %v4026 = vand.u32 %v2318, 4294901760
    %4027 = vmatprep.subr.mxu0 %v4026
    %v4028 = vand.u32 %v2317, 4294901760
    %4029 = vmatpush1.msra.mxu0 %v4028
    %v4030 = vand.u32 %v2320, 4294901760
    %4031 = vmatprep.subr.mxu0 %v4030
    %v4032 = vand.u32 %v2319, 4294901760
    %4033 = vmatpush1.msra.mxu0 %v4032
    %v4034 = vand.u32 %v2322, 4294901760
    %4035 = vmatprep.subr.mxu0 %v4034
    %v4036 = vand.u32 %v2321, 4294901760
    %4037 = vmatpush1.msra.mxu0 %v4036
    %v4038 = vand.u32 %v2324, 4294901760
    %4039 = vmatprep.subr.mxu0 %v4038
    %v4040 = vand.u32 %v2323, 4294901760
    %4041 = vmatpush1.msra.mxu0 %v4040
    %v4042 = vand.u32 %v2326, 4294901760
    %4043 = vmatprep.subr.mxu0 %v4042
    %v4044 = vand.u32 %v2325, 4294901760
    %4045 = vmatpush1.msra.mxu0 %v4044
    %v4046 = vand.u32 %v2328, 4294901760
    %4047 = vmatprep.subr.mxu0 %v4046
    %v4048 = vand.u32 %v2327, 4294901760
    %4049 = vmatpush1.msra.mxu0 %v4048
    %v4050 = vand.u32 %v2330, 4294901760
    %4051 = vmatprep.subr.mxu0 %v4050
    %v4052 = vand.u32 %v2329, 4294901760
    %4053 = vmatpush1.msra.mxu0 %v4052
    %v4054 = vand.u32 %v2332, 4294901760
    %4055 = vmatprep.subr.mxu0 %v4054
    %v4056 = vand.u32 %v2331, 4294901760
    %4057 = vmatpush1.msra.mxu0 %v4056
    %v4058 = vand.u32 %v2334, 4294901760
    %4059 = vmatprep.subr.mxu0 %v4058
    %v4060 = vand.u32 %v2333, 4294901760
    %4061 = vmatpush1.msra.mxu0 %v4060
    %v4062 = vand.u32 %v2336, 4294901760
    %4063 = vmatprep.subr.mxu0 %v4062
    %v4064 = vand.u32 %v2335, 4294901760
    %4065 = vmatpush1.msra.mxu0 %v4064
    %v4066 = vand.u32 %v2338, 4294901760
    %4067 = vmatprep.subr.mxu0 %v4066
    %v4068 = vand.u32 %v2337, 4294901760
    %4069 = vmatpush1.msra.mxu0 %v4068
    %v4070 = vand.u32 %v2340, 4294901760
    %4071 = vmatprep.subr.mxu0 %v4070
    %v4072 = vand.u32 %v2339, 4294901760
    %4073 = vmatpush1.msra.mxu0 %v4072
    %v4074 = vand.u32 %v2342, 4294901760
    %4075 = vmatprep.subr.mxu0 %v4074
    %v4076 = vand.u32 %v2341, 4294901760
    %4077 = vmatpush1.msra.mxu0 %v4076
    %v4078 = vand.u32 %v2344, 4294901760
    %4079 = vmatprep.subr.mxu0 %v4078
    %v4080 = vand.u32 %v2343, 4294901760
    %4081 = vmatpush1.msra.mxu0 %v4080
    %v4082 = vand.u32 %v2346, 4294901760
    %4083 = vmatprep.subr.mxu0 %v4082
    %v4084 = vand.u32 %v2345, 4294901760
    %4085 = vmatpush1.msra.mxu0 %v4084
    %v4086 = vand.u32 %v2348, 4294901760
    %4087 = vmatprep.subr.mxu0 %v4086
    %v4088 = vand.u32 %v2347, 4294901760
    %4089 = vmatpush1.msra.mxu0 %v4088
    %v4090 = vand.u32 %v2350, 4294901760
    %4091 = vmatprep.subr.mxu0 %v4090
    %v4092 = vand.u32 %v2349, 4294901760
    %4093 = vmatpush1.msra.mxu0 %v4092
    %v4094 = vand.u32 %v2352, 4294901760
    %4095 = vmatprep.subr.mxu0 %v4094
    %v4096 = vand.u32 %v2351, 4294901760
    %4097 = vmatpush1.msra.mxu0 %v4096
    %v4098 = vand.u32 %v2354, 4294901760
    %4099 = vmatprep.subr.mxu0 %v4098
    %v4100 = vand.u32 %v2353, 4294901760
    %4101 = vmatpush1.msra.mxu0 %v4100
    %v4102 = vand.u32 %v2356, 4294901760
    %4103 = vmatprep.subr.mxu0 %v4102
    %v4104 = vand.u32 %v2355, 4294901760
    %4105 = vmatpush1.msra.mxu0 %v4104
    %v4106 = vand.u32 %v2358, 4294901760
    %4107 = vmatprep.subr.mxu0 %v4106
    %v4108 = vand.u32 %v2357, 4294901760
    %4109 = vmatpush1.msra.mxu0 %v4108
    %v4110 = vand.u32 %v2360, 4294901760
    %4111 = vmatprep.subr.mxu0 %v4110
    %v4112 = vand.u32 %v2359, 4294901760
    %4113 = vmatpush1.msra.mxu0 %v4112
    %v4114 = vand.u32 %v2362, 4294901760
    %4115 = vmatprep.subr.mxu0 %v4114
    %v4116 = vand.u32 %v2361, 4294901760
    %4117 = vmatpush1.msra.mxu0 %v4116
    %v4118 = vand.u32 %v2364, 4294901760
    %4119 = vmatprep.subr.mxu0 %v4118
    %v4120 = vand.u32 %v2363, 4294901760
    %4121 = vmatpush1.msra.mxu0 %v4120
    %v4122 = vand.u32 %v2299, 4294901760
    %v4123 = vsub.f32 %v2299, %v4122
    %v4124 = vand.u32 %v4123, 4294901760
    %4125 = vmatprep.mubr.f32.mxu0 %v4124
    %v4126 = vand.u32 %v2298, 4294901760
    %v4127 = vsub.f32 %v2298, %v4126
    %v4128 = vand.u32 %v4127, 4294901760
    %4129 = vmatmul.mubr.f32.gmra.mrb[0].mxu0 %v4128
    %v4130 = vpop.f32.mrb[0].mxu0
    %v4131 = vadd.f32 %v3990, %v4130
    %v4132 = vpop.f32.mrb[0].mxu0
    %v4133 = vadd.f32 %v3992, %v4132
    %4134 = vdwg.mxu0
    %v4135 = vand.u32 %v2302, 4294901760
    %v4136 = vsub.f32 %v2302, %v4135
    %v4137 = vand.u32 %v4136, 4294901760
    %4138 = vmatprep.subr.mxu0 %v4137
    %v4139 = vand.u32 %v2301, 4294901760
    %v4140 = vsub.f32 %v2301, %v4139
    %v4141 = vand.u32 %v4140, 4294901760
    %4142 = vmatpush1.msra.mxu0 %v4141
    %v4143 = vand.u32 %v2304, 4294901760
    %v4144 = vsub.f32 %v2304, %v4143
    %v4145 = vand.u32 %v4144, 4294901760
    %4146 = vmatprep.subr.mxu0 %v4145
    %v4147 = vand.u32 %v2303, 4294901760
    %v4148 = vsub.f32 %v2303, %v4147
    %v4149 = vand.u32 %v4148, 4294901760
    %4150 = vmatpush1.msra.mxu0 %v4149
    %v4151 = vand.u32 %v2306, 4294901760
    %v4152 = vsub.f32 %v2306, %v4151
    %v4153 = vand.u32 %v4152, 4294901760
    %4154 = vmatprep.subr.mxu0 %v4153
    %v4155 = vand.u32 %v2305, 4294901760
    %v4156 = vsub.f32 %v2305, %v4155
    %v4157 = vand.u32 %v4156, 4294901760
    %4158 = vmatpush1.msra.mxu0 %v4157
    %v4159 = vand.u32 %v2308, 4294901760
    %v4160 = vsub.f32 %v2308, %v4159
    %v4161 = vand.u32 %v4160, 4294901760
    %4162 = vmatprep.subr.mxu0 %v4161
    %v4163 = vand.u32 %v2307, 4294901760
    %v4164 = vsub.f32 %v2307, %v4163
    %v4165 = vand.u32 %v4164, 4294901760
    %4166 = vmatpush1.msra.mxu0 %v4165
    %v4167 = vand.u32 %v2310, 4294901760
    %v4168 = vsub.f32 %v2310, %v4167
    %v4169 = vand.u32 %v4168, 4294901760
    %4170 = vmatprep.subr.mxu0 %v4169
    %v4171 = vand.u32 %v2309, 4294901760
    %v4172 = vsub.f32 %v2309, %v4171
    %v4173 = vand.u32 %v4172, 4294901760
    %4174 = vmatpush1.msra.mxu0 %v4173
    %v4175 = vand.u32 %v2312, 4294901760
    %v4176 = vsub.f32 %v2312, %v4175
    %v4177 = vand.u32 %v4176, 4294901760
    %4178 = vmatprep.subr.mxu0 %v4177
    %v4179 = vand.u32 %v2311, 4294901760
    %v4180 = vsub.f32 %v2311, %v4179
    %v4181 = vand.u32 %v4180, 4294901760
    %4182 = vmatpush1.msra.mxu0 %v4181
    %v4183 = vand.u32 %v2314, 4294901760
    %v4184 = vsub.f32 %v2314, %v4183
    %v4185 = vand.u32 %v4184, 4294901760
    %4186 = vmatprep.subr.mxu0 %v4185
    %v4187 = vand.u32 %v2313, 4294901760
    %v4188 = vsub.f32 %v2313, %v4187
    %v4189 = vand.u32 %v4188, 4294901760
    %4190 = vmatpush1.msra.mxu0 %v4189
    %v4191 = vand.u32 %v2316, 4294901760
    %v4192 = vsub.f32 %v2316, %v4191
    %v4193 = vand.u32 %v4192, 4294901760
    %4194 = vmatprep.subr.mxu0 %v4193
    %v4195 = vand.u32 %v2315, 4294901760
    %v4196 = vsub.f32 %v2315, %v4195
    %v4197 = vand.u32 %v4196, 4294901760
    %4198 = vmatpush1.msra.mxu0 %v4197
    %v4199 = vand.u32 %v2318, 4294901760
    %v4200 = vsub.f32 %v2318, %v4199
    %v4201 = vand.u32 %v4200, 4294901760
    %4202 = vmatprep.subr.mxu0 %v4201
    %v4203 = vand.u32 %v2317, 4294901760
    %v4204 = vsub.f32 %v2317, %v4203
    %v4205 = vand.u32 %v4204, 4294901760
    %4206 = vmatpush1.msra.mxu0 %v4205
    %v4207 = vand.u32 %v2320, 4294901760
    %v4208 = vsub.f32 %v2320, %v4207
    %v4209 = vand.u32 %v4208, 4294901760
    %4210 = vmatprep.subr.mxu0 %v4209
    %v4211 = vand.u32 %v2319, 4294901760
    %v4212 = vsub.f32 %v2319, %v4211
    %v4213 = vand.u32 %v4212, 4294901760
    %4214 = vmatpush1.msra.mxu0 %v4213
    %v4215 = vand.u32 %v2322, 4294901760
    %v4216 = vsub.f32 %v2322, %v4215
    %v4217 = vand.u32 %v4216, 4294901760
    %4218 = vmatprep.subr.mxu0 %v4217
    %v4219 = vand.u32 %v2321, 4294901760
    %v4220 = vsub.f32 %v2321, %v4219
    %v4221 = vand.u32 %v4220, 4294901760
    %4222 = vmatpush1.msra.mxu0 %v4221
    %v4223 = vand.u32 %v2324, 4294901760
    %v4224 = vsub.f32 %v2324, %v4223
    %v4225 = vand.u32 %v4224, 4294901760
    %4226 = vmatprep.subr.mxu0 %v4225
    %v4227 = vand.u32 %v2323, 4294901760
    %v4228 = vsub.f32 %v2323, %v4227
    %v4229 = vand.u32 %v4228, 4294901760
    %4230 = vmatpush1.msra.mxu0 %v4229
    %v4231 = vand.u32 %v2326, 4294901760
    %v4232 = vsub.f32 %v2326, %v4231
    %v4233 = vand.u32 %v4232, 4294901760
    %4234 = vmatprep.subr.mxu0 %v4233
    %v4235 = vand.u32 %v2325, 4294901760
    %v4236 = vsub.f32 %v2325, %v4235
    %v4237 = vand.u32 %v4236, 4294901760
    %4238 = vmatpush1.msra.mxu0 %v4237
    %v4239 = vand.u32 %v2328, 4294901760
    %v4240 = vsub.f32 %v2328, %v4239
    %v4241 = vand.u32 %v4240, 4294901760
    %4242 = vmatprep.subr.mxu0 %v4241
    %v4243 = vand.u32 %v2327, 4294901760
    %v4244 = vsub.f32 %v2327, %v4243
    %v4245 = vand.u32 %v4244, 4294901760
    %4246 = vmatpush1.msra.mxu0 %v4245
    %v4247 = vand.u32 %v2330, 4294901760
    %v4248 = vsub.f32 %v2330, %v4247
    %v4249 = vand.u32 %v4248, 4294901760
    %4250 = vmatprep.subr.mxu0 %v4249
    %v4251 = vand.u32 %v2329, 4294901760
    %v4252 = vsub.f32 %v2329, %v4251
    %v4253 = vand.u32 %v4252, 4294901760
    %4254 = vmatpush1.msra.mxu0 %v4253
    %v4255 = vand.u32 %v2332, 4294901760
    %v4256 = vsub.f32 %v2332, %v4255
    %v4257 = vand.u32 %v4256, 4294901760
    %4258 = vmatprep.subr.mxu0 %v4257
    %v4259 = vand.u32 %v2331, 4294901760
    %v4260 = vsub.f32 %v2331, %v4259
    %v4261 = vand.u32 %v4260, 4294901760
    %4262 = vmatpush1.msra.mxu0 %v4261
    %v4263 = vand.u32 %v2334, 4294901760
    %v4264 = vsub.f32 %v2334, %v4263
    %v4265 = vand.u32 %v4264, 4294901760
    %4266 = vmatprep.subr.mxu0 %v4265
    %v4267 = vand.u32 %v2333, 4294901760
    %v4268 = vsub.f32 %v2333, %v4267
    %v4269 = vand.u32 %v4268, 4294901760
    %4270 = vmatpush1.msra.mxu0 %v4269
    %v4271 = vand.u32 %v2336, 4294901760
    %v4272 = vsub.f32 %v2336, %v4271
    %v4273 = vand.u32 %v4272, 4294901760
    %4274 = vmatprep.subr.mxu0 %v4273
    %v4275 = vand.u32 %v2335, 4294901760
    %v4276 = vsub.f32 %v2335, %v4275
    %v4277 = vand.u32 %v4276, 4294901760
    %4278 = vmatpush1.msra.mxu0 %v4277
    %v4279 = vand.u32 %v2338, 4294901760
    %v4280 = vsub.f32 %v2338, %v4279
    %v4281 = vand.u32 %v4280, 4294901760
    %4282 = vmatprep.subr.mxu0 %v4281
    %v4283 = vand.u32 %v2337, 4294901760
    %v4284 = vsub.f32 %v2337, %v4283
    %v4285 = vand.u32 %v4284, 4294901760
    %4286 = vmatpush1.msra.mxu0 %v4285
    %v4287 = vand.u32 %v2340, 4294901760
    %v4288 = vsub.f32 %v2340, %v4287
    %v4289 = vand.u32 %v4288, 4294901760
    %4290 = vmatprep.subr.mxu0 %v4289
    %v4291 = vand.u32 %v2339, 4294901760
    %v4292 = vsub.f32 %v2339, %v4291
    %v4293 = vand.u32 %v4292, 4294901760
    %4294 = vmatpush1.msra.mxu0 %v4293
    %v4295 = vand.u32 %v2342, 4294901760
    %v4296 = vsub.f32 %v2342, %v4295
    %v4297 = vand.u32 %v4296, 4294901760
    %4298 = vmatprep.subr.mxu0 %v4297
    %v4299 = vand.u32 %v2341, 4294901760
    %v4300 = vsub.f32 %v2341, %v4299
    %v4301 = vand.u32 %v4300, 4294901760
    %4302 = vmatpush1.msra.mxu0 %v4301
    %v4303 = vand.u32 %v2344, 4294901760
    %v4304 = vsub.f32 %v2344, %v4303
    %v4305 = vand.u32 %v4304, 4294901760
    %4306 = vmatprep.subr.mxu0 %v4305
    %v4307 = vand.u32 %v2343, 4294901760
    %v4308 = vsub.f32 %v2343, %v4307
    %v4309 = vand.u32 %v4308, 4294901760
    %4310 = vmatpush1.msra.mxu0 %v4309
    %v4311 = vand.u32 %v2346, 4294901760
    %v4312 = vsub.f32 %v2346, %v4311
    %v4313 = vand.u32 %v4312, 4294901760
    %4314 = vmatprep.subr.mxu0 %v4313
    %v4315 = vand.u32 %v2345, 4294901760
    %v4316 = vsub.f32 %v2345, %v4315
    %v4317 = vand.u32 %v4316, 4294901760
    %4318 = vmatpush1.msra.mxu0 %v4317
    %v4319 = vand.u32 %v2348, 4294901760
    %v4320 = vsub.f32 %v2348, %v4319
    %v4321 = vand.u32 %v4320, 4294901760
    %4322 = vmatprep.subr.mxu0 %v4321
    %v4323 = vand.u32 %v2347, 4294901760
    %v4324 = vsub.f32 %v2347, %v4323
    %v4325 = vand.u32 %v4324, 4294901760
    %4326 = vmatpush1.msra.mxu0 %v4325
    %v4327 = vand.u32 %v2350, 4294901760
    %v4328 = vsub.f32 %v2350, %v4327
    %v4329 = vand.u32 %v4328, 4294901760
    %4330 = vmatprep.subr.mxu0 %v4329
    %v4331 = vand.u32 %v2349, 4294901760
    %v4332 = vsub.f32 %v2349, %v4331
    %v4333 = vand.u32 %v4332, 4294901760
    %4334 = vmatpush1.msra.mxu0 %v4333
    %v4335 = vand.u32 %v2352, 4294901760
    %v4336 = vsub.f32 %v2352, %v4335
    %v4337 = vand.u32 %v4336, 4294901760
    %4338 = vmatprep.subr.mxu0 %v4337
    %v4339 = vand.u32 %v2351, 4294901760
    %v4340 = vsub.f32 %v2351, %v4339
    %v4341 = vand.u32 %v4340, 4294901760
    %4342 = vmatpush1.msra.mxu0 %v4341
    %v4343 = vand.u32 %v2354, 4294901760
    %v4344 = vsub.f32 %v2354, %v4343
    %v4345 = vand.u32 %v4344, 4294901760
    %4346 = vmatprep.subr.mxu0 %v4345
    %v4347 = vand.u32 %v2353, 4294901760
    %v4348 = vsub.f32 %v2353, %v4347
    %v4349 = vand.u32 %v4348, 4294901760
    %4350 = vmatpush1.msra.mxu0 %v4349
    %v4351 = vand.u32 %v2356, 4294901760
    %v4352 = vsub.f32 %v2356, %v4351
    %v4353 = vand.u32 %v4352, 4294901760
    %4354 = vmatprep.subr.mxu0 %v4353
    %v4355 = vand.u32 %v2355, 4294901760
    %v4356 = vsub.f32 %v2355, %v4355
    %v4357 = vand.u32 %v4356, 4294901760
    %4358 = vmatpush1.msra.mxu0 %v4357
    %v4359 = vand.u32 %v2358, 4294901760
    %v4360 = vsub.f32 %v2358, %v4359
    %v4361 = vand.u32 %v4360, 4294901760
    %4362 = vmatprep.subr.mxu0 %v4361
    %v4363 = vand.u32 %v2357, 4294901760
    %v4364 = vsub.f32 %v2357, %v4363
    %v4365 = vand.u32 %v4364, 4294901760
    %4366 = vmatpush1.msra.mxu0 %v4365
    %v4367 = vand.u32 %v2360, 4294901760
    %v4368 = vsub.f32 %v2360, %v4367
    %v4369 = vand.u32 %v4368, 4294901760
    %4370 = vmatprep.subr.mxu0 %v4369
    %v4371 = vand.u32 %v2359, 4294901760
    %v4372 = vsub.f32 %v2359, %v4371
    %v4373 = vand.u32 %v4372, 4294901760
    %4374 = vmatpush1.msra.mxu0 %v4373
    %v4375 = vand.u32 %v2362, 4294901760
    %v4376 = vsub.f32 %v2362, %v4375
    %v4377 = vand.u32 %v4376, 4294901760
    %4378 = vmatprep.subr.mxu0 %v4377
    %v4379 = vand.u32 %v2361, 4294901760
    %v4380 = vsub.f32 %v2361, %v4379
    %v4381 = vand.u32 %v4380, 4294901760
    %4382 = vmatpush1.msra.mxu0 %v4381
    %v4383 = vand.u32 %v2364, 4294901760
    %v4384 = vsub.f32 %v2364, %v4383
    %v4385 = vand.u32 %v4384, 4294901760
    %4386 = vmatprep.subr.mxu0 %v4385
    %v4387 = vand.u32 %v2363, 4294901760
    %v4388 = vsub.f32 %v2363, %v4387
    %v4389 = vand.u32 %v4388, 4294901760
    %4390 = vmatpush1.msra.mxu0 %v4389
    %v4391 = vand.u32 %v2299, 4294901760
    %4392 = vmatprep.mubr.f32.mxu0 %v4391
    %v4393 = vand.u32 %v2298, 4294901760
    %4394 = vmatmul.mubr.f32.gmra.mrb[0].mxu0 %v4393
    %v4395 = vpop.f32.mrb[0].mxu0
    %v4396 = vadd.f32 %v4131, %v4395
    %v4397 = vpop.f32.mrb[0].mxu0
    %v4398 = vadd.f32 %v4133, %v4397
    %4399 = vdwg.mxu0
    %v4400 = vand.u32 %v2302, 4294901760
    %4401 = vmatprep.subr.mxu0 %v4400
    %v4402 = vand.u32 %v2301, 4294901760
    %4403 = vmatpush1.msra.mxu0 %v4402
    %v4404 = vand.u32 %v2304, 4294901760
    %4405 = vmatprep.subr.mxu0 %v4404
    %v4406 = vand.u32 %v2303, 4294901760
    %4407 = vmatpush1.msra.mxu0 %v4406
    %v4408 = vand.u32 %v2306, 4294901760
    %4409 = vmatprep.subr.mxu0 %v4408
    %v4410 = vand.u32 %v2305, 4294901760
    %4411 = vmatpush1.msra.mxu0 %v4410
    %v4412 = vand.u32 %v2308, 4294901760
    %4413 = vmatprep.subr.mxu0 %v4412
    %v4414 = vand.u32 %v2307, 4294901760
    %4415 = vmatpush1.msra.mxu0 %v4414
    %v4416 = vand.u32 %v2310, 4294901760
    %4417 = vmatprep.subr.mxu0 %v4416
    %v4418 = vand.u32 %v2309, 4294901760
    %4419 = vmatpush1.msra.mxu0 %v4418
    %v4420 = vand.u32 %v2312, 4294901760
    %4421 = vmatprep.subr.mxu0 %v4420
    %v4422 = vand.u32 %v2311, 4294901760
    %4423 = vmatpush1.msra.mxu0 %v4422
    %v4424 = vand.u32 %v2314, 4294901760
    %4425 = vmatprep.subr.mxu0 %v4424
    %v4426 = vand.u32 %v2313, 4294901760
    %4427 = vmatpush1.msra.mxu0 %v4426
    %v4428 = vand.u32 %v2316, 4294901760
    %4429 = vmatprep.subr.mxu0 %v4428
    %v4430 = vand.u32 %v2315, 4294901760
    %4431 = vmatpush1.msra.mxu0 %v4430
    %v4432 = vand.u32 %v2318, 4294901760
    %4433 = vmatprep.subr.mxu0 %v4432
    %v4434 = vand.u32 %v2317, 4294901760
    %4435 = vmatpush1.msra.mxu0 %v4434
    %v4436 = vand.u32 %v2320, 4294901760
    %4437 = vmatprep.subr.mxu0 %v4436
    %v4438 = vand.u32 %v2319, 4294901760
    %4439 = vmatpush1.msra.mxu0 %v4438
    %v4440 = vand.u32 %v2322, 4294901760
    %4441 = vmatprep.subr.mxu0 %v4440
    %v4442 = vand.u32 %v2321, 4294901760
    %4443 = vmatpush1.msra.mxu0 %v4442
    %v4444 = vand.u32 %v2324, 4294901760
    %4445 = vmatprep.subr.mxu0 %v4444
    %v4446 = vand.u32 %v2323, 4294901760
    %4447 = vmatpush1.msra.mxu0 %v4446
    %v4448 = vand.u32 %v2326, 4294901760
    %4449 = vmatprep.subr.mxu0 %v4448
    %v4450 = vand.u32 %v2325, 4294901760
    %4451 = vmatpush1.msra.mxu0 %v4450
    %v4452 = vand.u32 %v2328, 4294901760
    %4453 = vmatprep.subr.mxu0 %v4452
    %v4454 = vand.u32 %v2327, 4294901760
    %4455 = vmatpush1.msra.mxu0 %v4454
    %v4456 = vand.u32 %v2330, 4294901760
    %4457 = vmatprep.subr.mxu0 %v4456
    %v4458 = vand.u32 %v2329, 4294901760
    %4459 = vmatpush1.msra.mxu0 %v4458
    %v4460 = vand.u32 %v2332, 4294901760
    %4461 = vmatprep.subr.mxu0 %v4460
    %v4462 = vand.u32 %v2331, 4294901760
    %4463 = vmatpush1.msra.mxu0 %v4462
    %v4464 = vand.u32 %v2334, 4294901760
    %4465 = vmatprep.subr.mxu0 %v4464
    %v4466 = vand.u32 %v2333, 4294901760
    %4467 = vmatpush1.msra.mxu0 %v4466
    %v4468 = vand.u32 %v2336, 4294901760
    %4469 = vmatprep.subr.mxu0 %v4468
    %v4470 = vand.u32 %v2335, 4294901760
    %4471 = vmatpush1.msra.mxu0 %v4470
    %v4472 = vand.u32 %v2338, 4294901760
    %4473 = vmatprep.subr.mxu0 %v4472
    %v4474 = vand.u32 %v2337, 4294901760
    %4475 = vmatpush1.msra.mxu0 %v4474
    %v4476 = vand.u32 %v2340, 4294901760
    %4477 = vmatprep.subr.mxu0 %v4476
    %v4478 = vand.u32 %v2339, 4294901760
    %4479 = vmatpush1.msra.mxu0 %v4478
    %v4480 = vand.u32 %v2342, 4294901760
    %4481 = vmatprep.subr.mxu0 %v4480
    %v4482 = vand.u32 %v2341, 4294901760
    %4483 = vmatpush1.msra.mxu0 %v4482
    %v4484 = vand.u32 %v2344, 4294901760
    %4485 = vmatprep.subr.mxu0 %v4484
    %v4486 = vand.u32 %v2343, 4294901760
    %4487 = vmatpush1.msra.mxu0 %v4486
    %v4488 = vand.u32 %v2346, 4294901760
    %4489 = vmatprep.subr.mxu0 %v4488
    %v4490 = vand.u32 %v2345, 4294901760
    %4491 = vmatpush1.msra.mxu0 %v4490
    %v4492 = vand.u32 %v2348, 4294901760
    %4493 = vmatprep.subr.mxu0 %v4492
    %v4494 = vand.u32 %v2347, 4294901760
    %4495 = vmatpush1.msra.mxu0 %v4494
    %v4496 = vand.u32 %v2350, 4294901760
    %4497 = vmatprep.subr.mxu0 %v4496
    %v4498 = vand.u32 %v2349, 4294901760
    %4499 = vmatpush1.msra.mxu0 %v4498
    %v4500 = vand.u32 %v2352, 4294901760
    %4501 = vmatprep.subr.mxu0 %v4500
    %v4502 = vand.u32 %v2351, 4294901760
    %4503 = vmatpush1.msra.mxu0 %v4502
    %v4504 = vand.u32 %v2354, 4294901760
    %4505 = vmatprep.subr.mxu0 %v4504
    %v4506 = vand.u32 %v2353, 4294901760
    %4507 = vmatpush1.msra.mxu0 %v4506
    %v4508 = vand.u32 %v2356, 4294901760
    %4509 = vmatprep.subr.mxu0 %v4508
    %v4510 = vand.u32 %v2355, 4294901760
    %4511 = vmatpush1.msra.mxu0 %v4510
    %v4512 = vand.u32 %v2358, 4294901760
    %4513 = vmatprep.subr.mxu0 %v4512
    %v4514 = vand.u32 %v2357, 4294901760
    %4515 = vmatpush1.msra.mxu0 %v4514
    %v4516 = vand.u32 %v2360, 4294901760
    %4517 = vmatprep.subr.mxu0 %v4516
    %v4518 = vand.u32 %v2359, 4294901760
    %4519 = vmatpush1.msra.mxu0 %v4518
    %v4520 = vand.u32 %v2362, 4294901760
    %4521 = vmatprep.subr.mxu0 %v4520
    %v4522 = vand.u32 %v2361, 4294901760
    %4523 = vmatpush1.msra.mxu0 %v4522
    %v4524 = vand.u32 %v2364, 4294901760
    %4525 = vmatprep.subr.mxu0 %v4524
    %v4526 = vand.u32 %v2363, 4294901760
    %4527 = vmatpush1.msra.mxu0 %v4526
    %v4528 = vand.u32 %v2299, 4294901760
    %4529 = vmatprep.mubr.f32.mxu0 %v4528
    %v4530 = vand.u32 %v2298, 4294901760
    %4531 = vmatmul.mubr.f32.gmra.mrb[0].mxu0 %v4530
    %v4532 = vpop.f32.mrb[0].mxu0
    %v4533 = vadd.f32 %v4396, %v4532
    %v4534 = vpop.f32.mrb[0].mxu0
    %v4535 = vadd.f32 %v4398, %v4534
    %4536 = vdwg.mxu0
    %s4537 = scalar_lea.vmem [#allocation8], 16
    %4538 = vst [vmem:[%s4537] sm:$0xff] %v4533
    %4539 = vst [vmem:[%s4537 + $0x8] sm:$0xff] %v4535
    // Predicated region
    $region26: #{tpu_custom_call.1} parent=1 // pred_check
      _
    $region27: #{tpu_custom_call.1} parent=1 // pred_check_branch
      %4541 = sbr.rel (0) target = $region29
    $region28: #{tpu_custom_call.1} parent=1 // pred_region
      %s4543 = ssub.s32 512, 512
      %4544 = vsyncadd [#allocation4], %s4543
      %s4545 = sshll.u32 [#allocation8], 4
      %s4546 = int_to_ptr.vmem [resolvable:$true] %s4545
      %4551 = dma.vmem_to_hbm [thread:$0]  %s4546, 512, %s3, [#allocation4], 256, 256, 16
    $region29: #{tpu_custom_call.1} parent=1 // pred_fallthru
      _
    // Predicated region
    $region30: #{tpu_custom_call.1} parent=1 // pred_check
      _
    $region31: #{tpu_custom_call.1} parent=1 // pred_check_branch
      %4553 = sbr.rel (0) target = $region33
    $region32: #{tpu_custom_call.1} parent=1 // pred_region
      %4554 = dma.done [#allocation4], 512
    $region33: #{tpu_custom_call.1} parent=1 // pred_fallthru
      _
    %4555 = vsyncpa [#allocation3], 1
    %4556 = vsyncpa [#allocation6], 1
    %4557 = vsyncpa [#allocation4], 1

</llo_original>
